<compile_context>
chip_gen: v6e
topology: v6e:2x2x1
jax: 0.10.0
libtpu: 0.0.40
codegen_flags: <defaults>
</compile_context>

<pallas_src>
import functools

import jax
import jax.numpy as jnp
from jax.experimental import pallas as pl
from jax.experimental.pallas import tpu as pltpu


# ----------------------------- config ---------------------------------------

CFG = dict(
    vocab_size=256,
    hidden_size=64,
    num_hidden_layers=2,
    num_attention_heads=4,
    num_key_value_heads=2,
    intermediate_size=128,
    rms_norm_eps=1e-5,
    rope_theta=10000.0,
)
SEQ_LEN = 8  # L


# ----------------------------- in-kernel helpers -----------------------------

def _rmsnorm(x, w, eps):
    # x: [L, D] f32, w: [1, D] f32 -> [L, D] f32
    var = jnp.mean(x * x, axis=-1, keepdims=True)
    return x * jax.lax.rsqrt(var + eps) * w


def _rope(x, cos, sin):
    # x: [L, dh] f32, rotate-half RoPE (Llama convention).
    dh = x.shape[-1]
    x1 = x[:, : dh // 2]
    x2 = x[:, dh // 2:]
    rot = jnp.concatenate([-x2, x1], axis=-1)
    return x * cos + rot * sin


# ----------------------------- fused forward kernel --------------------------

def _fused_forward_kernel(tok_ref, cos_ref, sin_ref,
                          in_norm_ref, wqkv_ref, wo_ref,
                          post_norm_ref, wgu_ref, wdown_ref,
                          final_norm_ref, embed_ref, lm_head_ref,
                          logits_ref, *, cfg):
    L = tok_ref.shape[0]
    D = cfg["hidden_size"]
    H = cfg["num_attention_heads"]
    Hkv = cfg["num_key_value_heads"]
    dh = D // H
    group = H // Hkv
    F = cfg["intermediate_size"]
    eps = cfg["rms_norm_eps"]
    nl = cfg["num_hidden_layers"]
    V = cfg["vocab_size"]
    scale = 1.0 / (dh ** 0.5)

    # --- embedding lookup as a one-hot bf16 matmul (V=256 -> trivial) ---
    # TODO(synk): at realistic vocab sizes replace with a DMA gather instead
    # of a one-hot matmul.
    tok = tok_ref[...]                                           # [L, 1] int32
    vocab_iota = jax.lax.broadcasted_iota(jnp.int32, (L, V), 1)
    onehot = jnp.where(vocab_iota == tok, 1.0, 0.0).astype(jnp.bfloat16)
    h = jnp.dot(onehot, embed_ref[...],
                preferred_element_type=jnp.float32)              # [L, D] f32

    cos = cos_ref[...]                                           # [L, dh] f32
    sin = sin_ref[...]

    # causal mask (start_index = 0; decode with start_index != 0 not supported)
    row = jax.lax.broadcasted_iota(jnp.int32, (L, L), 0)
    col = jax.lax.broadcasted_iota(jnp.int32, (L, L), 1)
    causal = col <= row

    k_off = H * dh
    v_off = (H + Hkv) * dh

    for li in range(nl):
        # ---------------- attention ----------------
        hn = _rmsnorm(h, in_norm_ref[li], eps)                   # [L, D] f32
        qkv = jnp.dot(hn.astype(jnp.bfloat16), wqkv_ref[li],
                      preferred_element_type=jnp.float32)        # [L, (H+2Hkv)*dh]

        ctx = []
        for hh in range(H):
            g = hh // group                                      # GQA kv head
            q_h = _rope(qkv[:, hh * dh:(hh + 1) * dh], cos, sin)           # [L, dh]
            k_h = _rope(qkv[:, k_off + g * dh:k_off + (g + 1) * dh], cos, sin)
            v_h = qkv[:, v_off + g * dh:v_off + (g + 1) * dh]

            s = jax.lax.dot_general(
                q_h.astype(jnp.bfloat16), k_h.astype(jnp.bfloat16),
                (((1,), (1,)), ((), ())),
                preferred_element_type=jnp.float32) * scale      # [L, L]
            s = jnp.where(causal, s, -1e30)
            s = s - jnp.max(s, axis=-1, keepdims=True)
            p = jnp.exp(s)
            p = p * pl.reciprocal(jnp.sum(p, axis=-1, keepdims=True),
                                  approx=True)
            ctx.append(jnp.dot(p.astype(jnp.bfloat16),
                               v_h.astype(jnp.bfloat16),
                               preferred_element_type=jnp.float32))  # [L, dh]

        o = jnp.concatenate(ctx, axis=-1)                        # [L, D] f32
        h = h + jnp.dot(o.astype(jnp.bfloat16), wo_ref[li],
                        preferred_element_type=jnp.float32)

        # ---------------- MLP (SwiGLU) ----------------
        hn = _rmsnorm(h, post_norm_ref[li], eps)
        gu = jnp.dot(hn.astype(jnp.bfloat16), wgu_ref[li],
                     preferred_element_type=jnp.float32)         # [L, 2F]
        gate = gu[:, :F]
        up = gu[:, F:]
        act = gate * jax.nn.sigmoid(gate) * up                   # silu(g)*u, f32
        h = h + jnp.dot(act.astype(jnp.bfloat16), wdown_ref[li],
                        preferred_element_type=jnp.float32)

    # ---------------- final norm + lm_head ----------------
    hn = _rmsnorm(h, final_norm_ref[...], eps)
    logits_ref[...] = jnp.dot(hn.astype(jnp.bfloat16), lm_head_ref[...],
                              preferred_element_type=jnp.float32)  # [L, V]


# ----------------------------- wrapper ---------------------------------------

def causal_lm_forward(tokens, params, cfg):
    """tokens: [L] int32 -> logits [L, vocab] f32 (start_index = 0)."""
    L = tokens.shape[0]
    D = cfg["hidden_size"]
    H = cfg["num_attention_heads"]
    dh = D // H
    V = cfg["vocab_size"]

    # RoPE tables (position-only; constants under jit for static L).
    positions = jnp.arange(L, dtype=jnp.float32)
    inv_freq = 1.0 / (cfg["rope_theta"] **
                      (jnp.arange(0, dh, 2, dtype=jnp.float32) / dh))
    ang = positions[:, None] * inv_freq[None, :]                  # [L, dh/2]
    cos = jnp.concatenate([jnp.cos(ang), jnp.cos(ang)], axis=-1)  # [L, dh]
    sin = jnp.concatenate([jnp.sin(ang), jnp.sin(ang)], axis=-1)

    tok2d = tokens.reshape(L, 1).astype(jnp.int32)

    in_arrays = [
        tok2d,                      # [L, 1]            int32
        cos, sin,                   # [L, dh]           f32
        params["in_norm"],          # [nl, 1, D]        f32
        params["wqkv"],             # [nl, D, (H+2Hkv)*dh] bf16
        params["wo"],               # [nl, D, D]        bf16
        params["post_norm"],        # [nl, 1, D]        f32
        params["wgu"],              # [nl, D, 2F]       bf16
        params["wdown"],            # [nl, F, D]        bf16
        params["final_norm"],       # [1, D]            f32
        params["embed"],            # [V, D]            bf16
        params["lm_head"],          # [D, V]            bf16
    ]

    def fullspec(shape):
        zeros = (0,) * len(shape)
        return pl.BlockSpec(shape, lambda i: zeros)

    kernel = functools.partial(_fused_forward_kernel, cfg=cfg)

    return pl.pallas_call(
        kernel,
        out_shape=jax.ShapeDtypeStruct((L, V), jnp.float32),
        grid=(1,),
        in_specs=[fullspec(a.shape) for a in in_arrays],
        out_specs=fullspec((L, V)),
        compiler_params=pltpu.CompilerParams(
            dimension_semantics=("arbitrary",)),
    )(*in_arrays)


# ----------------------------- parameter init --------------------------------

def init_params(key, cfg):
    V, D = cfg["vocab_size"], cfg["hidden_size"]
    H, Hkv = cfg["num_attention_heads"], cfg["num_key_value_heads"]
    dh = D // H
    F = cfg["intermediate_size"]
    nl = cfg["num_hidden_layers"]

    def nrm(k, shape):
        return (jax.random.normal(k, shape, dtype=jnp.float32)
                * 0.02).astype(jnp.bfloat16)

    keys = jax.random.split(key, 2 + nl)
    wqkv, wo, wgu, wdown = [], [], [], []
    for li in range(nl):
        lk = jax.random.split(keys[2 + li], 7)
        # fused QKV weight: [D, (H + 2*Hkv)*dh]  (128-lane-dense output)
        wqkv.append(jnp.concatenate(
            [nrm(lk[0], (D, H * dh)),
             nrm(lk[1], (D, Hkv * dh)),
             nrm(lk[2], (D, Hkv * dh))], axis=-1))
        wo.append(nrm(lk[3], (D, D)))
        # fused gate|up weight: [D, 2F]  (256-lane-dense output)
        wgu.append(jnp.concatenate(
            [nrm(lk[4], (D, F)), nrm(lk[5], (D, F))], axis=-1))
        wdown.append(nrm(lk[6], (F, D)))

    return {
        "embed": nrm(keys[0], (V, D)),
        "lm_head": nrm(keys[1], (D, V)),
        "final_norm": jnp.ones((1, D), jnp.float32),
        "in_norm": jnp.ones((nl, 1, D), jnp.float32),
        "post_norm": jnp.ones((nl, 1, D), jnp.float32),
        "wqkv": jnp.stack(wqkv),
        "wo": jnp.stack(wo),
        "wgu": jnp.stack(wgu),
        "wdown": jnp.stack(wdown),
    }


# ----------------------------- main -------------------------------------------

if __name__ == "__main__":
    key = jax.random.PRNGKey(0)
    pkey, tkey = jax.random.split(key)
    params = init_params(pkey, CFG)
    tokens = jax.random.randint(tkey, (SEQ_LEN,), 0, CFG["vocab_size"],
                                dtype=jnp.int32)

    fwd = jax.jit(lambda t: causal_lm_forward(t, params, CFG))
    logits = fwd(tokens)
    jax.block_until_ready(logits)

    assert logits.shape == (SEQ_LEN, CFG["vocab_size"]), logits.shape
    assert bool(jnp.all(jnp.isfinite(logits)))
    print("KERNEL_OK")
</pallas_src>

<mosaic_0001>
module attributes {stable_mosaic.version = 11 : i64} {
  func.func @_fused_forward_kernel(%arg0: i32, %arg1: memref<8x1xi32, #tpu.memory_space<vmem>>, %arg2: memref<8x16xf32, #tpu.memory_space<vmem>>, %arg3: memref<8x16xf32, #tpu.memory_space<vmem>>, %arg4: memref<2x1x64xf32, #tpu.memory_space<vmem>>, %arg5: memref<2x64x128xbf16, #tpu.memory_space<vmem>>, %arg6: memref<2x64x64xbf16, #tpu.memory_space<vmem>>, %arg7: memref<2x1x64xf32, #tpu.memory_space<vmem>>, %arg8: memref<2x64x256xbf16, #tpu.memory_space<vmem>>, %arg9: memref<2x128x64xbf16, #tpu.memory_space<vmem>>, %arg10: memref<1x64xf32, #tpu.memory_space<vmem>>, %arg11: memref<256x64xbf16, #tpu.memory_space<vmem>>, %arg12: memref<64x256xbf16, #tpu.memory_space<vmem>>, %arg13: memref<8x256xf32, #tpu.memory_space<vmem>>) attributes {dimension_semantics = [#tpu.dimension_semantics<arbitrary>], iteration_bounds = array<i64: 1>, scalar_prefetch = 0 : i64, scratch_operands = 0 : i64, tpu.core_type = #tpu.core_type<tc>, window_params = [{pipeline_mode = #tpu.pipeline_mode<synchronous>, transform_indices = @transform_0, window_bounds = array<i64: 8, 1>}, {pipeline_mode = #tpu.pipeline_mode<synchronous>, transform_indices = @transform_1, window_bounds = array<i64: 8, 16>}, {pipeline_mode = #tpu.pipeline_mode<synchronous>, transform_indices = @transform_2, window_bounds = array<i64: 8, 16>}, {pipeline_mode = #tpu.pipeline_mode<synchronous>, transform_indices = @transform_3, window_bounds = array<i64: 2, 1, 64>}, {pipeline_mode = #tpu.pipeline_mode<synchronous>, transform_indices = @transform_4, window_bounds = array<i64: 2, 64, 128>}, {pipeline_mode = #tpu.pipeline_mode<synchronous>, transform_indices = @transform_5, window_bounds = array<i64: 2, 64, 64>}, {pipeline_mode = #tpu.pipeline_mode<synchronous>, transform_indices = @transform_6, window_bounds = array<i64: 2, 1, 64>}, {pipeline_mode = #tpu.pipeline_mode<synchronous>, transform_indices = @transform_7, window_bounds = array<i64: 2, 64, 256>}, {pipeline_mode = #tpu.pipeline_mode<synchronous>, transform_indices = @transform_8, window_bounds = array<i64: 2, 128, 64>}, {pipeline_mode = #tpu.pipeline_mode<synchronous>, transform_indices = @transform_9, window_bounds = array<i64: 1, 64>}, {pipeline_mode = #tpu.pipeline_mode<synchronous>, transform_indices = @transform_10, window_bounds = array<i64: 256, 64>}, {pipeline_mode = #tpu.pipeline_mode<synchronous>, transform_indices = @transform_11, window_bounds = array<i64: 64, 256>}, {pipeline_mode = #tpu.pipeline_mode<synchronous>, transform_indices = @transform_12, window_bounds = array<i64: 8, 256>}]} {
    %c0 = arith.constant 0 : index
    %c0_0 = arith.constant 0 : index
    %0 = vector.load %arg1[%c0, %c0_0] : memref<8x1xi32, #tpu.memory_space<vmem>>, vector<8x1xi32>
    %1 = tpu.iota {dimensions = array<i32: 1>} : vector<8x256xi32>
    %2 = vector.broadcast %0 : vector<8x1xi32> to vector<8x256xi32>
    %3 = arith.cmpi eq, %1, %2 : vector<8x256xi32>
    %cst = arith.constant 1.000000e+00 : f32
    %cst_1 = arith.constant 0.000000e+00 : f32
    %4 = vector.broadcast %cst : f32 to vector<8x256xf32>
    %5 = vector.broadcast %cst_1 : f32 to vector<8x256xf32>
    %6 = arith.select %3, %4, %5 : vector<8x256xi1>, vector<8x256xf32>
    %7 = arith.truncf %6 : vector<8x256xf32> to vector<8x256xbf16>
    %c0_2 = arith.constant 0 : index
    %c0_3 = arith.constant 0 : index
    %8 = vector.load %arg11[%c0_2, %c0_3] : memref<256x64xbf16, #tpu.memory_space<vmem>>, vector<256x64xbf16>
    %cst_4 = arith.constant dense<0.000000e+00> : vector<8x64xf32>
    %9 = tpu.matmul %7, %8, %cst_4 {dimension_numbers = #tpu.dot_dimension_numbers<[1], [0], [0], [1], [0, 0, 1, 1], [], []>} : vector<8x256xbf16>, vector<256x64xbf16>, vector<8x64xf32> -> vector<8x64xf32>
    %c0_5 = arith.constant 0 : index
    %c0_6 = arith.constant 0 : index
    %10 = vector.load %arg2[%c0_5, %c0_6] : memref<8x16xf32, #tpu.memory_space<vmem>>, vector<8x16xf32>
    %c0_7 = arith.constant 0 : index
    %c0_8 = arith.constant 0 : index
    %11 = vector.load %arg3[%c0_7, %c0_8] : memref<8x16xf32, #tpu.memory_space<vmem>>, vector<8x16xf32>
    %12 = tpu.iota {dimensions = array<i32: 0>} : vector<8x8xi32>
    %13 = tpu.iota {dimensions = array<i32: 1>} : vector<8x8xi32>
    %14 = arith.cmpi sle, %13, %12 : vector<8x8xi32>
    %c0_9 = arith.constant 0 : index
    %c0_10 = arith.constant 0 : index
    %c0_11 = arith.constant 0 : index
    %15 = vector.load %arg4[%c0_9, %c0_10, %c0_11] : memref<2x1x64xf32, #tpu.memory_space<vmem>>, vector<1x1x64xf32>
    %16 = vector.shape_cast %15 : vector<1x1x64xf32> to vector<1x64xf32>
    %17 = arith.mulf %9, %9 : vector<8x64xf32>
    %cst_12 = arith.constant dense<0.000000e+00> : vector<8xf32>
    %18 = vector.multi_reduction <add>, %17, %cst_12 [1] : vector<8x64xf32> to vector<8xf32>
    %19 = vector.shape_cast %18 : vector<8xf32> to vector<8x1xf32>
    %cst_13 = arith.constant 6.400000e+01 : f32
    %20 = vector.broadcast %cst_13 : f32 to vector<8x1xf32>
    %21 = arith.divf %19, %20 : vector<8x1xf32>
    %cst_14 = arith.constant 9.99999974E-6 : f32
    %22 = vector.broadcast %cst_14 : f32 to vector<8x1xf32>
    %23 = arith.addf %21, %22 : vector<8x1xf32>
    %24 = math.rsqrt %23 : vector<8x1xf32>
    %25 = vector.broadcast %24 : vector<8x1xf32> to vector<8x64xf32>
    %26 = arith.mulf %9, %25 : vector<8x64xf32>
    %27 = vector.broadcast %16 : vector<1x64xf32> to vector<8x64xf32>
    %28 = arith.mulf %26, %27 : vector<8x64xf32>
    %29 = arith.truncf %28 : vector<8x64xf32> to vector<8x64xbf16>
    %c0_15 = arith.constant 0 : index
    %c0_16 = arith.constant 0 : index
    %c0_17 = arith.constant 0 : index
    %30 = vector.load %arg5[%c0_15, %c0_16, %c0_17] : memref<2x64x128xbf16, #tpu.memory_space<vmem>>, vector<1x64x128xbf16>
    %31 = vector.shape_cast %30 : vector<1x64x128xbf16> to vector<64x128xbf16>
    %cst_18 = arith.constant dense<0.000000e+00> : vector<8x128xf32>
    %32 = tpu.matmul %29, %31, %cst_18 {dimension_numbers = #tpu.dot_dimension_numbers<[1], [0], [0], [1], [0, 0, 1, 1], [], []>} : vector<8x64xbf16>, vector<64x128xbf16>, vector<8x128xf32> -> vector<8x128xf32>
    %33 = vector.extract_strided_slice %32 {offsets = [0, 0], sizes = [8, 16], strides = [1, 1]} : vector<8x128xf32> to vector<8x16xf32>
    %34 = vector.extract_strided_slice %33 {offsets = [0, 0], sizes = [8, 8], strides = [1, 1]} : vector<8x16xf32> to vector<8x8xf32>
    %35 = vector.extract_strided_slice %33 {offsets = [0, 8], sizes = [8, 8], strides = [1, 1]} : vector<8x16xf32> to vector<8x8xf32>
    %cst_19 = arith.constant 0.000000e+00 : f32
    %36 = vector.broadcast %cst_19 : f32 to vector<8x8xf32>
    %37 = arith.subf %36, %35 : vector<8x8xf32>
    %38 = tpu.concatenate %37, %34 in 1 : vector<8x8xf32>, vector<8x8xf32> -> vector<8x16xf32>
    %39 = arith.mulf %33, %10 : vector<8x16xf32>
    %40 = arith.mulf %38, %11 : vector<8x16xf32>
    %41 = arith.addf %39, %40 : vector<8x16xf32>
    %42 = vector.extract_strided_slice %32 {offsets = [0, 64], sizes = [8, 16], strides = [1, 1]} : vector<8x128xf32> to vector<8x16xf32>
    %43 = vector.extract_strided_slice %42 {offsets = [0, 0], sizes = [8, 8], strides = [1, 1]} : vector<8x16xf32> to vector<8x8xf32>
    %44 = vector.extract_strided_slice %42 {offsets = [0, 8], sizes = [8, 8], strides = [1, 1]} : vector<8x16xf32> to vector<8x8xf32>
    %cst_20 = arith.constant 0.000000e+00 : f32
    %45 = vector.broadcast %cst_20 : f32 to vector<8x8xf32>
    %46 = arith.subf %45, %44 : vector<8x8xf32>
    %47 = tpu.concatenate %46, %43 in 1 : vector<8x8xf32>, vector<8x8xf32> -> vector<8x16xf32>
    %48 = arith.mulf %42, %10 : vector<8x16xf32>
    %49 = arith.mulf %47, %11 : vector<8x16xf32>
    %50 = arith.addf %48, %49 : vector<8x16xf32>
    %51 = vector.extract_strided_slice %32 {offsets = [0, 96], sizes = [8, 16], strides = [1, 1]} : vector<8x128xf32> to vector<8x16xf32>
    %52 = arith.truncf %41 : vector<8x16xf32> to vector<8x16xbf16>
    %53 = arith.truncf %50 : vector<8x16xf32> to vector<8x16xbf16>
    %cst_21 = arith.constant dense<0.000000e+00> : vector<8x8xf32>
    %54 = tpu.matmul %52, %53, %cst_21 {dimension_numbers = #tpu.dot_dimension_numbers<[1], [1], [0], [0], [0, 0, 1, 0], [], []>} : vector<8x16xbf16>, vector<8x16xbf16>, vector<8x8xf32> -> vector<8x8xf32>
    %cst_22 = arith.constant 2.500000e-01 : f32
    %55 = vector.broadcast %cst_22 : f32 to vector<8x8xf32>
    %56 = arith.mulf %54, %55 : vector<8x8xf32>
    %cst_23 = arith.constant -1.000000e+30 : f32
    %57 = vector.broadcast %cst_23 : f32 to vector<8x8xf32>
    %58 = arith.select %14, %56, %57 : vector<8x8xi1>, vector<8x8xf32>
    %cst_24 = arith.constant dense<0xFF800000> : vector<8xf32>
    %59 = vector.multi_reduction <maximumf>, %58, %cst_24 [1] : vector<8x8xf32> to vector<8xf32>
    %60 = vector.shape_cast %59 : vector<8xf32> to vector<8x1xf32>
    %61 = vector.broadcast %60 : vector<8x1xf32> to vector<8x8xf32>
    %62 = arith.subf %58, %61 : vector<8x8xf32>
    %63 = math.exp %62 : vector<8x8xf32>
    %cst_25 = arith.constant dense<0.000000e+00> : vector<8xf32>
    %64 = vector.multi_reduction <add>, %63, %cst_25 [1] : vector<8x8xf32> to vector<8xf32>
    %65 = vector.shape_cast %64 : vector<8xf32> to vector<8x1xf32>
    %66 = tpu.reciprocal %65 {approx = true} : vector<8x1xf32> -> vector<8x1xf32>
    %67 = vector.broadcast %66 : vector<8x1xf32> to vector<8x8xf32>
    %68 = arith.mulf %63, %67 : vector<8x8xf32>
    %69 = arith.truncf %68 : vector<8x8xf32> to vector<8x8xbf16>
    %70 = arith.truncf %51 : vector<8x16xf32> to vector<8x16xbf16>
    %cst_26 = arith.constant dense<0.000000e+00> : vector<8x16xf32>
    %71 = tpu.matmul %69, %70, %cst_26 {dimension_numbers = #tpu.dot_dimension_numbers<[1], [0], [0], [1], [0, 0, 1, 1], [], []>} : vector<8x8xbf16>, vector<8x16xbf16>, vector<8x16xf32> -> vector<8x16xf32>
    %72 = vector.extract_strided_slice %32 {offsets = [0, 16], sizes = [8, 16], strides = [1, 1]} : vector<8x128xf32> to vector<8x16xf32>
    %73 = vector.extract_strided_slice %72 {offsets = [0, 0], sizes = [8, 8], strides = [1, 1]} : vector<8x16xf32> to vector<8x8xf32>
    %74 = vector.extract_strided_slice %72 {offsets = [0, 8], sizes = [8, 8], strides = [1, 1]} : vector<8x16xf32> to vector<8x8xf32>
    %cst_27 = arith.constant 0.000000e+00 : f32
    %75 = vector.broadcast %cst_27 : f32 to vector<8x8xf32>
    %76 = arith.subf %75, %74 : vector<8x8xf32>
    %77 = tpu.concatenate %76, %73 in 1 : vector<8x8xf32>, vector<8x8xf32> -> vector<8x16xf32>
    %78 = arith.mulf %72, %10 : vector<8x16xf32>
    %79 = arith.mulf %77, %11 : vector<8x16xf32>
    %80 = arith.addf %78, %79 : vector<8x16xf32>
    %81 = vector.extract_strided_slice %32 {offsets = [0, 64], sizes = [8, 16], strides = [1, 1]} : vector<8x128xf32> to vector<8x16xf32>
    %82 = vector.extract_strided_slice %81 {offsets = [0, 0], sizes = [8, 8], strides = [1, 1]} : vector<8x16xf32> to vector<8x8xf32>
    %83 = vector.extract_strided_slice %81 {offsets = [0, 8], sizes = [8, 8], strides = [1, 1]} : vector<8x16xf32> to vector<8x8xf32>
    %cst_28 = arith.constant 0.000000e+00 : f32
    %84 = vector.broadcast %cst_28 : f32 to vector<8x8xf32>
    %85 = arith.subf %84, %83 : vector<8x8xf32>
    %86 = tpu.concatenate %85, %82 in 1 : vector<8x8xf32>, vector<8x8xf32> -> vector<8x16xf32>
    %87 = arith.mulf %81, %10 : vector<8x16xf32>
    %88 = arith.mulf %86, %11 : vector<8x16xf32>
    %89 = arith.addf %87, %88 : vector<8x16xf32>
    %90 = vector.extract_strided_slice %32 {offsets = [0, 96], sizes = [8, 16], strides = [1, 1]} : vector<8x128xf32> to vector<8x16xf32>
    %91 = arith.truncf %80 : vector<8x16xf32> to vector<8x16xbf16>
    %92 = arith.truncf %89 : vector<8x16xf32> to vector<8x16xbf16>
    %cst_29 = arith.constant dense<0.000000e+00> : vector<8x8xf32>
    %93 = tpu.matmul %91, %92, %cst_29 {dimension_numbers = #tpu.dot_dimension_numbers<[1], [1], [0], [0], [0, 0, 1, 0], [], []>} : vector<8x16xbf16>, vector<8x16xbf16>, vector<8x8xf32> -> vector<8x8xf32>
    %cst_30 = arith.constant 2.500000e-01 : f32
    %94 = vector.broadcast %cst_30 : f32 to vector<8x8xf32>
    %95 = arith.mulf %93, %94 : vector<8x8xf32>
    %cst_31 = arith.constant -1.000000e+30 : f32
    %96 = vector.broadcast %cst_31 : f32 to vector<8x8xf32>
    %97 = arith.select %14, %95, %96 : vector<8x8xi1>, vector<8x8xf32>
    %cst_32 = arith.constant dense<0xFF800000> : vector<8xf32>
    %98 = vector.multi_reduction <maximumf>, %97, %cst_32 [1] : vector<8x8xf32> to vector<8xf32>
    %99 = vector.shape_cast %98 : vector<8xf32> to vector<8x1xf32>
    %100 = vector.broadcast %99 : vector<8x1xf32> to vector<8x8xf32>
    %101 = arith.subf %97, %100 : vector<8x8xf32>
    %102 = math.exp %101 : vector<8x8xf32>
    %cst_33 = arith.constant dense<0.000000e+00> : vector<8xf32>
    %103 = vector.multi_reduction <add>, %102, %cst_33 [1] : vector<8x8xf32> to vector<8xf32>
    %104 = vector.shape_cast %103 : vector<8xf32> to vector<8x1xf32>
    %105 = tpu.reciprocal %104 {approx = true} : vector<8x1xf32> -> vector<8x1xf32>
    %106 = vector.broadcast %105 : vector<8x1xf32> to vector<8x8xf32>
    %107 = arith.mulf %102, %106 : vector<8x8xf32>
    %108 = arith.truncf %107 : vector<8x8xf32> to vector<8x8xbf16>
    %109 = arith.truncf %90 : vector<8x16xf32> to vector<8x16xbf16>
    %cst_34 = arith.constant dense<0.000000e+00> : vector<8x16xf32>
    %110 = tpu.matmul %108, %109, %cst_34 {dimension_numbers = #tpu.dot_dimension_numbers<[1], [0], [0], [1], [0, 0, 1, 1], [], []>} : vector<8x8xbf16>, vector<8x16xbf16>, vector<8x16xf32> -> vector<8x16xf32>
    %111 = vector.extract_strided_slice %32 {offsets = [0, 32], sizes = [8, 16], strides = [1, 1]} : vector<8x128xf32> to vector<8x16xf32>
    %112 = vector.extract_strided_slice %111 {offsets = [0, 0], sizes = [8, 8], strides = [1, 1]} : vector<8x16xf32> to vector<8x8xf32>
    %113 = vector.extract_strided_slice %111 {offsets = [0, 8], sizes = [8, 8], strides = [1, 1]} : vector<8x16xf32> to vector<8x8xf32>
    %cst_35 = arith.constant 0.000000e+00 : f32
    %114 = vector.broadcast %cst_35 : f32 to vector<8x8xf32>
    %115 = arith.subf %114, %113 : vector<8x8xf32>
    %116 = tpu.concatenate %115, %112 in 1 : vector<8x8xf32>, vector<8x8xf32> -> vector<8x16xf32>
    %117 = arith.mulf %111, %10 : vector<8x16xf32>
    %118 = arith.mulf %116, %11 : vector<8x16xf32>
    %119 = arith.addf %117, %118 : vector<8x16xf32>
    %120 = vector.extract_strided_slice %32 {offsets = [0, 80], sizes = [8, 16], strides = [1, 1]} : vector<8x128xf32> to vector<8x16xf32>
    %121 = vector.extract_strided_slice %120 {offsets = [0, 0], sizes = [8, 8], strides = [1, 1]} : vector<8x16xf32> to vector<8x8xf32>
    %122 = vector.extract_strided_slice %120 {offsets = [0, 8], sizes = [8, 8], strides = [1, 1]} : vector<8x16xf32> to vector<8x8xf32>
    %cst_36 = arith.constant 0.000000e+00 : f32
    %123 = vector.broadcast %cst_36 : f32 to vector<8x8xf32>
    %124 = arith.subf %123, %122 : vector<8x8xf32>
    %125 = tpu.concatenate %124, %121 in 1 : vector<8x8xf32>, vector<8x8xf32> -> vector<8x16xf32>
    %126 = arith.mulf %120, %10 : vector<8x16xf32>
    %127 = arith.mulf %125, %11 : vector<8x16xf32>
    %128 = arith.addf %126, %127 : vector<8x16xf32>
    %129 = vector.extract_strided_slice %32 {offsets = [0, 112], sizes = [8, 16], strides = [1, 1]} : vector<8x128xf32> to vector<8x16xf32>
    %130 = arith.truncf %119 : vector<8x16xf32> to vector<8x16xbf16>
    %131 = arith.truncf %128 : vector<8x16xf32> to vector<8x16xbf16>
    %cst_37 = arith.constant dense<0.000000e+00> : vector<8x8xf32>
    %132 = tpu.matmul %130, %131, %cst_37 {dimension_numbers = #tpu.dot_dimension_numbers<[1], [1], [0], [0], [0, 0, 1, 0], [], []>} : vector<8x16xbf16>, vector<8x16xbf16>, vector<8x8xf32> -> vector<8x8xf32>
    %cst_38 = arith.constant 2.500000e-01 : f32
    %133 = vector.broadcast %cst_38 : f32 to vector<8x8xf32>
    %134 = arith.mulf %132, %133 : vector<8x8xf32>
    %cst_39 = arith.constant -1.000000e+30 : f32
    %135 = vector.broadcast %cst_39 : f32 to vector<8x8xf32>
    %136 = arith.select %14, %134, %135 : vector<8x8xi1>, vector<8x8xf32>
    %cst_40 = arith.constant dense<0xFF800000> : vector<8xf32>
    %137 = vector.multi_reduction <maximumf>, %136, %cst_40 [1] : vector<8x8xf32> to vector<8xf32>
    %138 = vector.shape_cast %137 : vector<8xf32> to vector<8x1xf32>
    %139 = vector.broadcast %138 : vector<8x1xf32> to vector<8x8xf32>
    %140 = arith.subf %136, %139 : vector<8x8xf32>
    %141 = math.exp %140 : vector<8x8xf32>
    %cst_41 = arith.constant dense<0.000000e+00> : vector<8xf32>
    %142 = vector.multi_reduction <add>, %141, %cst_41 [1] : vector<8x8xf32> to vector<8xf32>
    %143 = vector.shape_cast %142 : vector<8xf32> to vector<8x1xf32>
    %144 = tpu.reciprocal %143 {approx = true} : vector<8x1xf32> -> vector<8x1xf32>
    %145 = vector.broadcast %144 : vector<8x1xf32> to vector<8x8xf32>
    %146 = arith.mulf %141, %145 : vector<8x8xf32>
    %147 = arith.truncf %146 : vector<8x8xf32> to vector<8x8xbf16>
    %148 = arith.truncf %129 : vector<8x16xf32> to vector<8x16xbf16>
    %cst_42 = arith.constant dense<0.000000e+00> : vector<8x16xf32>
    %149 = tpu.matmul %147, %148, %cst_42 {dimension_numbers = #tpu.dot_dimension_numbers<[1], [0], [0], [1], [0, 0, 1, 1], [], []>} : vector<8x8xbf16>, vector<8x16xbf16>, vector<8x16xf32> -> vector<8x16xf32>
    %150 = vector.extract_strided_slice %32 {offsets = [0, 48], sizes = [8, 16], strides = [1, 1]} : vector<8x128xf32> to vector<8x16xf32>
    %151 = vector.extract_strided_slice %150 {offsets = [0, 0], sizes = [8, 8], strides = [1, 1]} : vector<8x16xf32> to vector<8x8xf32>
    %152 = vector.extract_strided_slice %150 {offsets = [0, 8], sizes = [8, 8], strides = [1, 1]} : vector<8x16xf32> to vector<8x8xf32>
    %cst_43 = arith.constant 0.000000e+00 : f32
    %153 = vector.broadcast %cst_43 : f32 to vector<8x8xf32>
    %154 = arith.subf %153, %152 : vector<8x8xf32>
    %155 = tpu.concatenate %154, %151 in 1 : vector<8x8xf32>, vector<8x8xf32> -> vector<8x16xf32>
    %156 = arith.mulf %150, %10 : vector<8x16xf32>
    %157 = arith.mulf %155, %11 : vector<8x16xf32>
    %158 = arith.addf %156, %157 : vector<8x16xf32>
    %159 = vector.extract_strided_slice %32 {offsets = [0, 80], sizes = [8, 16], strides = [1, 1]} : vector<8x128xf32> to vector<8x16xf32>
    %160 = vector.extract_strided_slice %159 {offsets = [0, 0], sizes = [8, 8], strides = [1, 1]} : vector<8x16xf32> to vector<8x8xf32>
    %161 = vector.extract_strided_slice %159 {offsets = [0, 8], sizes = [8, 8], strides = [1, 1]} : vector<8x16xf32> to vector<8x8xf32>
    %cst_44 = arith.constant 0.000000e+00 : f32
    %162 = vector.broadcast %cst_44 : f32 to vector<8x8xf32>
    %163 = arith.subf %162, %161 : vector<8x8xf32>
    %164 = tpu.concatenate %163, %160 in 1 : vector<8x8xf32>, vector<8x8xf32> -> vector<8x16xf32>
    %165 = arith.mulf %159, %10 : vector<8x16xf32>
    %166 = arith.mulf %164, %11 : vector<8x16xf32>
    %167 = arith.addf %165, %166 : vector<8x16xf32>
    %168 = vector.extract_strided_slice %32 {offsets = [0, 112], sizes = [8, 16], strides = [1, 1]} : vector<8x128xf32> to vector<8x16xf32>
    %169 = arith.truncf %158 : vector<8x16xf32> to vector<8x16xbf16>
    %170 = arith.truncf %167 : vector<8x16xf32> to vector<8x16xbf16>
    %cst_45 = arith.constant dense<0.000000e+00> : vector<8x8xf32>
    %171 = tpu.matmul %169, %170, %cst_45 {dimension_numbers = #tpu.dot_dimension_numbers<[1], [1], [0], [0], [0, 0, 1, 0], [], []>} : vector<8x16xbf16>, vector<8x16xbf16>, vector<8x8xf32> -> vector<8x8xf32>
    %cst_46 = arith.constant 2.500000e-01 : f32
    %172 = vector.broadcast %cst_46 : f32 to vector<8x8xf32>
    %173 = arith.mulf %171, %172 : vector<8x8xf32>
    %cst_47 = arith.constant -1.000000e+30 : f32
    %174 = vector.broadcast %cst_47 : f32 to vector<8x8xf32>
    %175 = arith.select %14, %173, %174 : vector<8x8xi1>, vector<8x8xf32>
    %cst_48 = arith.constant dense<0xFF800000> : vector<8xf32>
    %176 = vector.multi_reduction <maximumf>, %175, %cst_48 [1] : vector<8x8xf32> to vector<8xf32>
    %177 = vector.shape_cast %176 : vector<8xf32> to vector<8x1xf32>
    %178 = vector.broadcast %177 : vector<8x1xf32> to vector<8x8xf32>
    %179 = arith.subf %175, %178 : vector<8x8xf32>
    %180 = math.exp %179 : vector<8x8xf32>
    %cst_49 = arith.constant dense<0.000000e+00> : vector<8xf32>
    %181 = vector.multi_reduction <add>, %180, %cst_49 [1] : vector<8x8xf32> to vector<8xf32>
    %182 = vector.shape_cast %181 : vector<8xf32> to vector<8x1xf32>
    %183 = tpu.reciprocal %182 {approx = true} : vector<8x1xf32> -> vector<8x1xf32>
    %184 = vector.broadcast %183 : vector<8x1xf32> to vector<8x8xf32>
    %185 = arith.mulf %180, %184 : vector<8x8xf32>
    %186 = arith.truncf %185 : vector<8x8xf32> to vector<8x8xbf16>
    %187 = arith.truncf %168 : vector<8x16xf32> to vector<8x16xbf16>
    %cst_50 = arith.constant dense<0.000000e+00> : vector<8x16xf32>
    %188 = tpu.matmul %186, %187, %cst_50 {dimension_numbers = #tpu.dot_dimension_numbers<[1], [0], [0], [1], [0, 0, 1, 1], [], []>} : vector<8x8xbf16>, vector<8x16xbf16>, vector<8x16xf32> -> vector<8x16xf32>
    %189 = tpu.concatenate %71, %110, %149, %188 in 1 : vector<8x16xf32>, vector<8x16xf32>, vector<8x16xf32>, vector<8x16xf32> -> vector<8x64xf32>
    %190 = arith.truncf %189 : vector<8x64xf32> to vector<8x64xbf16>
    %c0_51 = arith.constant 0 : index
    %c0_52 = arith.constant 0 : index
    %c0_53 = arith.constant 0 : index
    %191 = vector.load %arg6[%c0_51, %c0_52, %c0_53] : memref<2x64x64xbf16, #tpu.memory_space<vmem>>, vector<1x64x64xbf16>
    %192 = vector.shape_cast %191 : vector<1x64x64xbf16> to vector<64x64xbf16>
    %cst_54 = arith.constant dense<0.000000e+00> : vector<8x64xf32>
    %193 = tpu.matmul %190, %192, %cst_54 {dimension_numbers = #tpu.dot_dimension_numbers<[1], [0], [0], [1], [0, 0, 1, 1], [], []>} : vector<8x64xbf16>, vector<64x64xbf16>, vector<8x64xf32> -> vector<8x64xf32>
    %194 = arith.addf %9, %193 : vector<8x64xf32>
    %c0_55 = arith.constant 0 : index
    %c0_56 = arith.constant 0 : index
    %c0_57 = arith.constant 0 : index
    %195 = vector.load %arg7[%c0_55, %c0_56, %c0_57] : memref<2x1x64xf32, #tpu.memory_space<vmem>>, vector<1x1x64xf32>
    %196 = vector.shape_cast %195 : vector<1x1x64xf32> to vector<1x64xf32>
    %197 = arith.mulf %194, %194 : vector<8x64xf32>
    %cst_58 = arith.constant dense<0.000000e+00> : vector<8xf32>
    %198 = vector.multi_reduction <add>, %197, %cst_58 [1] : vector<8x64xf32> to vector<8xf32>
    %199 = vector.shape_cast %198 : vector<8xf32> to vector<8x1xf32>
    %cst_59 = arith.constant 6.400000e+01 : f32
    %200 = vector.broadcast %cst_59 : f32 to vector<8x1xf32>
    %201 = arith.divf %199, %200 : vector<8x1xf32>
    %cst_60 = arith.constant 9.99999974E-6 : f32
    %202 = vector.broadcast %cst_60 : f32 to vector<8x1xf32>
    %203 = arith.addf %201, %202 : vector<8x1xf32>
    %204 = math.rsqrt %203 : vector<8x1xf32>
    %205 = vector.broadcast %204 : vector<8x1xf32> to vector<8x64xf32>
    %206 = arith.mulf %194, %205 : vector<8x64xf32>
    %207 = vector.broadcast %196 : vector<1x64xf32> to vector<8x64xf32>
    %208 = arith.mulf %206, %207 : vector<8x64xf32>
    %209 = arith.truncf %208 : vector<8x64xf32> to vector<8x64xbf16>
    %c0_61 = arith.constant 0 : index
    %c0_62 = arith.constant 0 : index
    %c0_63 = arith.constant 0 : index
    %210 = vector.load %arg8[%c0_61, %c0_62, %c0_63] : memref<2x64x256xbf16, #tpu.memory_space<vmem>>, vector<1x64x256xbf16>
    %211 = vector.shape_cast %210 : vector<1x64x256xbf16> to vector<64x256xbf16>
    %cst_64 = arith.constant dense<0.000000e+00> : vector<8x256xf32>
    %212 = tpu.matmul %209, %211, %cst_64 {dimension_numbers = #tpu.dot_dimension_numbers<[1], [0], [0], [1], [0, 0, 1, 1], [], []>} : vector<8x64xbf16>, vector<64x256xbf16>, vector<8x256xf32> -> vector<8x256xf32>
    %213 = vector.extract_strided_slice %212 {offsets = [0, 0], sizes = [8, 128], strides = [1, 1]} : vector<8x256xf32> to vector<8x128xf32>
    %214 = vector.extract_strided_slice %212 {offsets = [0, 128], sizes = [8, 128], strides = [1, 1]} : vector<8x256xf32> to vector<8x128xf32>
    %215 = arith.negf %213 : vector<8x128xf32>
    %216 = math.exp %215 : vector<8x128xf32>
    %cst_65 = arith.constant 1.000000e+00 : f32
    %217 = vector.broadcast %cst_65 : f32 to vector<8x128xf32>
    %218 = arith.addf %217, %216 : vector<8x128xf32>
    %219 = arith.divf %217, %218 : vector<8x128xf32>
    %220 = arith.mulf %213, %219 : vector<8x128xf32>
    %221 = arith.mulf %220, %214 : vector<8x128xf32>
    %222 = arith.truncf %221 : vector<8x128xf32> to vector<8x128xbf16>
    %c0_66 = arith.constant 0 : index
    %c0_67 = arith.constant 0 : index
    %c0_68 = arith.constant 0 : index
    %223 = vector.load %arg9[%c0_66, %c0_67, %c0_68] : memref<2x128x64xbf16, #tpu.memory_space<vmem>>, vector<1x128x64xbf16>
    %224 = vector.shape_cast %223 : vector<1x128x64xbf16> to vector<128x64xbf16>
    %cst_69 = arith.constant dense<0.000000e+00> : vector<8x64xf32>
    %225 = tpu.matmul %222, %224, %cst_69 {dimension_numbers = #tpu.dot_dimension_numbers<[1], [0], [0], [1], [0, 0, 1, 1], [], []>} : vector<8x128xbf16>, vector<128x64xbf16>, vector<8x64xf32> -> vector<8x64xf32>
    %226 = arith.addf %194, %225 : vector<8x64xf32>
    %c1 = arith.constant 1 : index
    %c0_70 = arith.constant 0 : index
    %c0_71 = arith.constant 0 : index
    %227 = vector.load %arg4[%c1, %c0_70, %c0_71] : memref<2x1x64xf32, #tpu.memory_space<vmem>>, vector<1x1x64xf32>
    %228 = vector.shape_cast %227 : vector<1x1x64xf32> to vector<1x64xf32>
    %229 = arith.mulf %226, %226 : vector<8x64xf32>
    %cst_72 = arith.constant dense<0.000000e+00> : vector<8xf32>
    %230 = vector.multi_reduction <add>, %229, %cst_72 [1] : vector<8x64xf32> to vector<8xf32>
    %231 = vector.shape_cast %230 : vector<8xf32> to vector<8x1xf32>
    %cst_73 = arith.constant 6.400000e+01 : f32
    %232 = vector.broadcast %cst_73 : f32 to vector<8x1xf32>
    %233 = arith.divf %231, %232 : vector<8x1xf32>
    %cst_74 = arith.constant 9.99999974E-6 : f32
    %234 = vector.broadcast %cst_74 : f32 to vector<8x1xf32>
    %235 = arith.addf %233, %234 : vector<8x1xf32>
    %236 = math.rsqrt %235 : vector<8x1xf32>
    %237 = vector.broadcast %236 : vector<8x1xf32> to vector<8x64xf32>
    %238 = arith.mulf %226, %237 : vector<8x64xf32>
    %239 = vector.broadcast %228 : vector<1x64xf32> to vector<8x64xf32>
    %240 = arith.mulf %238, %239 : vector<8x64xf32>
    %241 = arith.truncf %240 : vector<8x64xf32> to vector<8x64xbf16>
    %c1_75 = arith.constant 1 : index
    %c0_76 = arith.constant 0 : index
    %c0_77 = arith.constant 0 : index
    %242 = vector.load %arg5[%c1_75, %c0_76, %c0_77] : memref<2x64x128xbf16, #tpu.memory_space<vmem>>, vector<1x64x128xbf16>
    %243 = vector.shape_cast %242 : vector<1x64x128xbf16> to vector<64x128xbf16>
    %cst_78 = arith.constant dense<0.000000e+00> : vector<8x128xf32>
    %244 = tpu.matmul %241, %243, %cst_78 {dimension_numbers = #tpu.dot_dimension_numbers<[1], [0], [0], [1], [0, 0, 1, 1], [], []>} : vector<8x64xbf16>, vector<64x128xbf16>, vector<8x128xf32> -> vector<8x128xf32>
    %245 = vector.extract_strided_slice %244 {offsets = [0, 0], sizes = [8, 16], strides = [1, 1]} : vector<8x128xf32> to vector<8x16xf32>
    %246 = vector.extract_strided_slice %245 {offsets = [0, 0], sizes = [8, 8], strides = [1, 1]} : vector<8x16xf32> to vector<8x8xf32>
    %247 = vector.extract_strided_slice %245 {offsets = [0, 8], sizes = [8, 8], strides = [1, 1]} : vector<8x16xf32> to vector<8x8xf32>
    %cst_79 = arith.constant 0.000000e+00 : f32
    %248 = vector.broadcast %cst_79 : f32 to vector<8x8xf32>
    %249 = arith.subf %248, %247 : vector<8x8xf32>
    %250 = tpu.concatenate %249, %246 in 1 : vector<8x8xf32>, vector<8x8xf32> -> vector<8x16xf32>
    %251 = arith.mulf %245, %10 : vector<8x16xf32>
    %252 = arith.mulf %250, %11 : vector<8x16xf32>
    %253 = arith.addf %251, %252 : vector<8x16xf32>
    %254 = vector.extract_strided_slice %244 {offsets = [0, 64], sizes = [8, 16], strides = [1, 1]} : vector<8x128xf32> to vector<8x16xf32>
    %255 = vector.extract_strided_slice %254 {offsets = [0, 0], sizes = [8, 8], strides = [1, 1]} : vector<8x16xf32> to vector<8x8xf32>
    %256 = vector.extract_strided_slice %254 {offsets = [0, 8], sizes = [8, 8], strides = [1, 1]} : vector<8x16xf32> to vector<8x8xf32>
    %cst_80 = arith.constant 0.000000e+00 : f32
    %257 = vector.broadcast %cst_80 : f32 to vector<8x8xf32>
    %258 = arith.subf %257, %256 : vector<8x8xf32>
    %259 = tpu.concatenate %258, %255 in 1 : vector<8x8xf32>, vector<8x8xf32> -> vector<8x16xf32>
    %260 = arith.mulf %254, %10 : vector<8x16xf32>
    %261 = arith.mulf %259, %11 : vector<8x16xf32>
    %262 = arith.addf %260, %261 : vector<8x16xf32>
    %263 = vector.extract_strided_slice %244 {offsets = [0, 96], sizes = [8, 16], strides = [1, 1]} : vector<8x128xf32> to vector<8x16xf32>
    %264 = arith.truncf %253 : vector<8x16xf32> to vector<8x16xbf16>
    %265 = arith.truncf %262 : vector<8x16xf32> to vector<8x16xbf16>
    %cst_81 = arith.constant dense<0.000000e+00> : vector<8x8xf32>
    %266 = tpu.matmul %264, %265, %cst_81 {dimension_numbers = #tpu.dot_dimension_numbers<[1], [1], [0], [0], [0, 0, 1, 0], [], []>} : vector<8x16xbf16>, vector<8x16xbf16>, vector<8x8xf32> -> vector<8x8xf32>
    %cst_82 = arith.constant 2.500000e-01 : f32
    %267 = vector.broadcast %cst_82 : f32 to vector<8x8xf32>
    %268 = arith.mulf %266, %267 : vector<8x8xf32>
    %cst_83 = arith.constant -1.000000e+30 : f32
    %269 = vector.broadcast %cst_83 : f32 to vector<8x8xf32>
    %270 = arith.select %14, %268, %269 : vector<8x8xi1>, vector<8x8xf32>
    %cst_84 = arith.constant dense<0xFF800000> : vector<8xf32>
    %271 = vector.multi_reduction <maximumf>, %270, %cst_84 [1] : vector<8x8xf32> to vector<8xf32>
    %272 = vector.shape_cast %271 : vector<8xf32> to vector<8x1xf32>
    %273 = vector.broadcast %272 : vector<8x1xf32> to vector<8x8xf32>
    %274 = arith.subf %270, %273 : vector<8x8xf32>
    %275 = math.exp %274 : vector<8x8xf32>
    %cst_85 = arith.constant dense<0.000000e+00> : vector<8xf32>
    %276 = vector.multi_reduction <add>, %275, %cst_85 [1] : vector<8x8xf32> to vector<8xf32>
    %277 = vector.shape_cast %276 : vector<8xf32> to vector<8x1xf32>
    %278 = tpu.reciprocal %277 {approx = true} : vector<8x1xf32> -> vector<8x1xf32>
    %279 = vector.broadcast %278 : vector<8x1xf32> to vector<8x8xf32>
    %280 = arith.mulf %275, %279 : vector<8x8xf32>
    %281 = arith.truncf %280 : vector<8x8xf32> to vector<8x8xbf16>
    %282 = arith.truncf %263 : vector<8x16xf32> to vector<8x16xbf16>
    %cst_86 = arith.constant dense<0.000000e+00> : vector<8x16xf32>
    %283 = tpu.matmul %281, %282, %cst_86 {dimension_numbers = #tpu.dot_dimension_numbers<[1], [0], [0], [1], [0, 0, 1, 1], [], []>} : vector<8x8xbf16>, vector<8x16xbf16>, vector<8x16xf32> -> vector<8x16xf32>
    %284 = vector.extract_strided_slice %244 {offsets = [0, 16], sizes = [8, 16], strides = [1, 1]} : vector<8x128xf32> to vector<8x16xf32>
    %285 = vector.extract_strided_slice %284 {offsets = [0, 0], sizes = [8, 8], strides = [1, 1]} : vector<8x16xf32> to vector<8x8xf32>
    %286 = vector.extract_strided_slice %284 {offsets = [0, 8], sizes = [8, 8], strides = [1, 1]} : vector<8x16xf32> to vector<8x8xf32>
    %cst_87 = arith.constant 0.000000e+00 : f32
    %287 = vector.broadcast %cst_87 : f32 to vector<8x8xf32>
    %288 = arith.subf %287, %286 : vector<8x8xf32>
    %289 = tpu.concatenate %288, %285 in 1 : vector<8x8xf32>, vector<8x8xf32> -> vector<8x16xf32>
    %290 = arith.mulf %284, %10 : vector<8x16xf32>
    %291 = arith.mulf %289, %11 : vector<8x16xf32>
    %292 = arith.addf %290, %291 : vector<8x16xf32>
    %293 = vector.extract_strided_slice %244 {offsets = [0, 64], sizes = [8, 16], strides = [1, 1]} : vector<8x128xf32> to vector<8x16xf32>
    %294 = vector.extract_strided_slice %293 {offsets = [0, 0], sizes = [8, 8], strides = [1, 1]} : vector<8x16xf32> to vector<8x8xf32>
    %295 = vector.extract_strided_slice %293 {offsets = [0, 8], sizes = [8, 8], strides = [1, 1]} : vector<8x16xf32> to vector<8x8xf32>
    %cst_88 = arith.constant 0.000000e+00 : f32
    %296 = vector.broadcast %cst_88 : f32 to vector<8x8xf32>
    %297 = arith.subf %296, %295 : vector<8x8xf32>
    %298 = tpu.concatenate %297, %294 in 1 : vector<8x8xf32>, vector<8x8xf32> -> vector<8x16xf32>
    %299 = arith.mulf %293, %10 : vector<8x16xf32>
    %300 = arith.mulf %298, %11 : vector<8x16xf32>
    %301 = arith.addf %299, %300 : vector<8x16xf32>
    %302 = vector.extract_strided_slice %244 {offsets = [0, 96], sizes = [8, 16], strides = [1, 1]} : vector<8x128xf32> to vector<8x16xf32>
    %303 = arith.truncf %292 : vector<8x16xf32> to vector<8x16xbf16>
    %304 = arith.truncf %301 : vector<8x16xf32> to vector<8x16xbf16>
    %cst_89 = arith.constant dense<0.000000e+00> : vector<8x8xf32>
    %305 = tpu.matmul %303, %304, %cst_89 {dimension_numbers = #tpu.dot_dimension_numbers<[1], [1], [0], [0], [0, 0, 1, 0], [], []>} : vector<8x16xbf16>, vector<8x16xbf16>, vector<8x8xf32> -> vector<8x8xf32>
    %cst_90 = arith.constant 2.500000e-01 : f32
    %306 = vector.broadcast %cst_90 : f32 to vector<8x8xf32>
    %307 = arith.mulf %305, %306 : vector<8x8xf32>
    %cst_91 = arith.constant -1.000000e+30 : f32
    %308 = vector.broadcast %cst_91 : f32 to vector<8x8xf32>
    %309 = arith.select %14, %307, %308 : vector<8x8xi1>, vector<8x8xf32>
    %cst_92 = arith.constant dense<0xFF800000> : vector<8xf32>
    %310 = vector.multi_reduction <maximumf>, %309, %cst_92 [1] : vector<8x8xf32> to vector<8xf32>
    %311 = vector.shape_cast %310 : vector<8xf32> to vector<8x1xf32>
    %312 = vector.broadcast %311 : vector<8x1xf32> to vector<8x8xf32>
    %313 = arith.subf %309, %312 : vector<8x8xf32>
    %314 = math.exp %313 : vector<8x8xf32>
    %cst_93 = arith.constant dense<0.000000e+00> : vector<8xf32>
    %315 = vector.multi_reduction <add>, %314, %cst_93 [1] : vector<8x8xf32> to vector<8xf32>
    %316 = vector.shape_cast %315 : vector<8xf32> to vector<8x1xf32>
    %317 = tpu.reciprocal %316 {approx = true} : vector<8x1xf32> -> vector<8x1xf32>
    %318 = vector.broadcast %317 : vector<8x1xf32> to vector<8x8xf32>
    %319 = arith.mulf %314, %318 : vector<8x8xf32>
    %320 = arith.truncf %319 : vector<8x8xf32> to vector<8x8xbf16>
    %321 = arith.truncf %302 : vector<8x16xf32> to vector<8x16xbf16>
    %cst_94 = arith.constant dense<0.000000e+00> : vector<8x16xf32>
    %322 = tpu.matmul %320, %321, %cst_94 {dimension_numbers = #tpu.dot_dimension_numbers<[1], [0], [0], [1], [0, 0, 1, 1], [], []>} : vector<8x8xbf16>, vector<8x16xbf16>, vector<8x16xf32> -> vector<8x16xf32>
    %323 = vector.extract_strided_slice %244 {offsets = [0, 32], sizes = [8, 16], strides = [1, 1]} : vector<8x128xf32> to vector<8x16xf32>
    %324 = vector.extract_strided_slice %323 {offsets = [0, 0], sizes = [8, 8], strides = [1, 1]} : vector<8x16xf32> to vector<8x8xf32>
    %325 = vector.extract_strided_slice %323 {offsets = [0, 8], sizes = [8, 8], strides = [1, 1]} : vector<8x16xf32> to vector<8x8xf32>
    %cst_95 = arith.constant 0.000000e+00 : f32
    %326 = vector.broadcast %cst_95 : f32 to vector<8x8xf32>
    %327 = arith.subf %326, %325 : vector<8x8xf32>
    %328 = tpu.concatenate %327, %324 in 1 : vector<8x8xf32>, vector<8x8xf32> -> vector<8x16xf32>
    %329 = arith.mulf %323, %10 : vector<8x16xf32>
    %330 = arith.mulf %328, %11 : vector<8x16xf32>
    %331 = arith.addf %329, %330 : vector<8x16xf32>
    %332 = vector.extract_strided_slice %244 {offsets = [0, 80], sizes = [8, 16], strides = [1, 1]} : vector<8x128xf32> to vector<8x16xf32>
    %333 = vector.extract_strided_slice %332 {offsets = [0, 0], sizes = [8, 8], strides = [1, 1]} : vector<8x16xf32> to vector<8x8xf32>
    %334 = vector.extract_strided_slice %332 {offsets = [0, 8], sizes = [8, 8], strides = [1, 1]} : vector<8x16xf32> to vector<8x8xf32>
    %cst_96 = arith.constant 0.000000e+00 : f32
    %335 = vector.broadcast %cst_96 : f32 to vector<8x8xf32>
    %336 = arith.subf %335, %334 : vector<8x8xf32>
    %337 = tpu.concatenate %336, %333 in 1 : vector<8x8xf32>, vector<8x8xf32> -> vector<8x16xf32>
    %338 = arith.mulf %332, %10 : vector<8x16xf32>
    %339 = arith.mulf %337, %11 : vector<8x16xf32>
    %340 = arith.addf %338, %339 : vector<8x16xf32>
    %341 = vector.extract_strided_slice %244 {offsets = [0, 112], sizes = [8, 16], strides = [1, 1]} : vector<8x128xf32> to vector<8x16xf32>
    %342 = arith.truncf %331 : vector<8x16xf32> to vector<8x16xbf16>
    %343 = arith.truncf %340 : vector<8x16xf32> to vector<8x16xbf16>
    %cst_97 = arith.constant dense<0.000000e+00> : vector<8x8xf32>
    %344 = tpu.matmul %342, %343, %cst_97 {dimension_numbers = #tpu.dot_dimension_numbers<[1], [1], [0], [0], [0, 0, 1, 0], [], []>} : vector<8x16xbf16>, vector<8x16xbf16>, vector<8x8xf32> -> vector<8x8xf32>
    %cst_98 = arith.constant 2.500000e-01 : f32
    %345 = vector.broadcast %cst_98 : f32 to vector<8x8xf32>
    %346 = arith.mulf %344, %345 : vector<8x8xf32>
    %cst_99 = arith.constant -1.000000e+30 : f32
    %347 = vector.broadcast %cst_99 : f32 to vector<8x8xf32>
    %348 = arith.select %14, %346, %347 : vector<8x8xi1>, vector<8x8xf32>
    %cst_100 = arith.constant dense<0xFF800000> : vector<8xf32>
    %349 = vector.multi_reduction <maximumf>, %348, %cst_100 [1] : vector<8x8xf32> to vector<8xf32>
    %350 = vector.shape_cast %349 : vector<8xf32> to vector<8x1xf32>
    %351 = vector.broadcast %350 : vector<8x1xf32> to vector<8x8xf32>
    %352 = arith.subf %348, %351 : vector<8x8xf32>
    %353 = math.exp %352 : vector<8x8xf32>
    %cst_101 = arith.constant dense<0.000000e+00> : vector<8xf32>
    %354 = vector.multi_reduction <add>, %353, %cst_101 [1] : vector<8x8xf32> to vector<8xf32>
    %355 = vector.shape_cast %354 : vector<8xf32> to vector<8x1xf32>
    %356 = tpu.reciprocal %355 {approx = true} : vector<8x1xf32> -> vector<8x1xf32>
    %357 = vector.broadcast %356 : vector<8x1xf32> to vector<8x8xf32>
    %358 = arith.mulf %353, %357 : vector<8x8xf32>
    %359 = arith.truncf %358 : vector<8x8xf32> to vector<8x8xbf16>
    %360 = arith.truncf %341 : vector<8x16xf32> to vector<8x16xbf16>
    %cst_102 = arith.constant dense<0.000000e+00> : vector<8x16xf32>
    %361 = tpu.matmul %359, %360, %cst_102 {dimension_numbers = #tpu.dot_dimension_numbers<[1], [0], [0], [1], [0, 0, 1, 1], [], []>} : vector<8x8xbf16>, vector<8x16xbf16>, vector<8x16xf32> -> vector<8x16xf32>
    %362 = vector.extract_strided_slice %244 {offsets = [0, 48], sizes = [8, 16], strides = [1, 1]} : vector<8x128xf32> to vector<8x16xf32>
    %363 = vector.extract_strided_slice %362 {offsets = [0, 0], sizes = [8, 8], strides = [1, 1]} : vector<8x16xf32> to vector<8x8xf32>
    %364 = vector.extract_strided_slice %362 {offsets = [0, 8], sizes = [8, 8], strides = [1, 1]} : vector<8x16xf32> to vector<8x8xf32>
    %cst_103 = arith.constant 0.000000e+00 : f32
    %365 = vector.broadcast %cst_103 : f32 to vector<8x8xf32>
    %366 = arith.subf %365, %364 : vector<8x8xf32>
    %367 = tpu.concatenate %366, %363 in 1 : vector<8x8xf32>, vector<8x8xf32> -> vector<8x16xf32>
    %368 = arith.mulf %362, %10 : vector<8x16xf32>
    %369 = arith.mulf %367, %11 : vector<8x16xf32>
    %370 = arith.addf %368, %369 : vector<8x16xf32>
    %371 = vector.extract_strided_slice %244 {offsets = [0, 80], sizes = [8, 16], strides = [1, 1]} : vector<8x128xf32> to vector<8x16xf32>
    %372 = vector.extract_strided_slice %371 {offsets = [0, 0], sizes = [8, 8], strides = [1, 1]} : vector<8x16xf32> to vector<8x8xf32>
    %373 = vector.extract_strided_slice %371 {offsets = [0, 8], sizes = [8, 8], strides = [1, 1]} : vector<8x16xf32> to vector<8x8xf32>
    %cst_104 = arith.constant 0.000000e+00 : f32
    %374 = vector.broadcast %cst_104 : f32 to vector<8x8xf32>
    %375 = arith.subf %374, %373 : vector<8x8xf32>
    %376 = tpu.concatenate %375, %372 in 1 : vector<8x8xf32>, vector<8x8xf32> -> vector<8x16xf32>
    %377 = arith.mulf %371, %10 : vector<8x16xf32>
    %378 = arith.mulf %376, %11 : vector<8x16xf32>
    %379 = arith.addf %377, %378 : vector<8x16xf32>
    %380 = vector.extract_strided_slice %244 {offsets = [0, 112], sizes = [8, 16], strides = [1, 1]} : vector<8x128xf32> to vector<8x16xf32>
    %381 = arith.truncf %370 : vector<8x16xf32> to vector<8x16xbf16>
    %382 = arith.truncf %379 : vector<8x16xf32> to vector<8x16xbf16>
    %cst_105 = arith.constant dense<0.000000e+00> : vector<8x8xf32>
    %383 = tpu.matmul %381, %382, %cst_105 {dimension_numbers = #tpu.dot_dimension_numbers<[1], [1], [0], [0], [0, 0, 1, 0], [], []>} : vector<8x16xbf16>, vector<8x16xbf16>, vector<8x8xf32> -> vector<8x8xf32>
    %cst_106 = arith.constant 2.500000e-01 : f32
    %384 = vector.broadcast %cst_106 : f32 to vector<8x8xf32>
    %385 = arith.mulf %383, %384 : vector<8x8xf32>
    %cst_107 = arith.constant -1.000000e+30 : f32
    %386 = vector.broadcast %cst_107 : f32 to vector<8x8xf32>
    %387 = arith.select %14, %385, %386 : vector<8x8xi1>, vector<8x8xf32>
    %cst_108 = arith.constant dense<0xFF800000> : vector<8xf32>
    %388 = vector.multi_reduction <maximumf>, %387, %cst_108 [1] : vector<8x8xf32> to vector<8xf32>
    %389 = vector.shape_cast %388 : vector<8xf32> to vector<8x1xf32>
    %390 = vector.broadcast %389 : vector<8x1xf32> to vector<8x8xf32>
    %391 = arith.subf %387, %390 : vector<8x8xf32>
    %392 = math.exp %391 : vector<8x8xf32>
    %cst_109 = arith.constant dense<0.000000e+00> : vector<8xf32>
    %393 = vector.multi_reduction <add>, %392, %cst_109 [1] : vector<8x8xf32> to vector<8xf32>
    %394 = vector.shape_cast %393 : vector<8xf32> to vector<8x1xf32>
    %395 = tpu.reciprocal %394 {approx = true} : vector<8x1xf32> -> vector<8x1xf32>
    %396 = vector.broadcast %395 : vector<8x1xf32> to vector<8x8xf32>
    %397 = arith.mulf %392, %396 : vector<8x8xf32>
    %398 = arith.truncf %397 : vector<8x8xf32> to vector<8x8xbf16>
    %399 = arith.truncf %380 : vector<8x16xf32> to vector<8x16xbf16>
    %cst_110 = arith.constant dense<0.000000e+00> : vector<8x16xf32>
    %400 = tpu.matmul %398, %399, %cst_110 {dimension_numbers = #tpu.dot_dimension_numbers<[1], [0], [0], [1], [0, 0, 1, 1], [], []>} : vector<8x8xbf16>, vector<8x16xbf16>, vector<8x16xf32> -> vector<8x16xf32>
    %401 = tpu.concatenate %283, %322, %361, %400 in 1 : vector<8x16xf32>, vector<8x16xf32>, vector<8x16xf32>, vector<8x16xf32> -> vector<8x64xf32>
    %402 = arith.truncf %401 : vector<8x64xf32> to vector<8x64xbf16>
    %c1_111 = arith.constant 1 : index
    %c0_112 = arith.constant 0 : index
    %c0_113 = arith.constant 0 : index
    %403 = vector.load %arg6[%c1_111, %c0_112, %c0_113] : memref<2x64x64xbf16, #tpu.memory_space<vmem>>, vector<1x64x64xbf16>
    %404 = vector.shape_cast %403 : vector<1x64x64xbf16> to vector<64x64xbf16>
    %cst_114 = arith.constant dense<0.000000e+00> : vector<8x64xf32>
    %405 = tpu.matmul %402, %404, %cst_114 {dimension_numbers = #tpu.dot_dimension_numbers<[1], [0], [0], [1], [0, 0, 1, 1], [], []>} : vector<8x64xbf16>, vector<64x64xbf16>, vector<8x64xf32> -> vector<8x64xf32>
    %406 = arith.addf %226, %405 : vector<8x64xf32>
    %c1_115 = arith.constant 1 : index
    %c0_116 = arith.constant 0 : index
    %c0_117 = arith.constant 0 : index
    %407 = vector.load %arg7[%c1_115, %c0_116, %c0_117] : memref<2x1x64xf32, #tpu.memory_space<vmem>>, vector<1x1x64xf32>
    %408 = vector.shape_cast %407 : vector<1x1x64xf32> to vector<1x64xf32>
    %409 = arith.mulf %406, %406 : vector<8x64xf32>
    %cst_118 = arith.constant dense<0.000000e+00> : vector<8xf32>
    %410 = vector.multi_reduction <add>, %409, %cst_118 [1] : vector<8x64xf32> to vector<8xf32>
    %411 = vector.shape_cast %410 : vector<8xf32> to vector<8x1xf32>
    %cst_119 = arith.constant 6.400000e+01 : f32
    %412 = vector.broadcast %cst_119 : f32 to vector<8x1xf32>
    %413 = arith.divf %411, %412 : vector<8x1xf32>
    %cst_120 = arith.constant 9.99999974E-6 : f32
    %414 = vector.broadcast %cst_120 : f32 to vector<8x1xf32>
    %415 = arith.addf %413, %414 : vector<8x1xf32>
    %416 = math.rsqrt %415 : vector<8x1xf32>
    %417 = vector.broadcast %416 : vector<8x1xf32> to vector<8x64xf32>
    %418 = arith.mulf %406, %417 : vector<8x64xf32>
    %419 = vector.broadcast %408 : vector<1x64xf32> to vector<8x64xf32>
    %420 = arith.mulf %418, %419 : vector<8x64xf32>
    %421 = arith.truncf %420 : vector<8x64xf32> to vector<8x64xbf16>
    %c1_121 = arith.constant 1 : index
    %c0_122 = arith.constant 0 : index
    %c0_123 = arith.constant 0 : index
    %422 = vector.load %arg8[%c1_121, %c0_122, %c0_123] : memref<2x64x256xbf16, #tpu.memory_space<vmem>>, vector<1x64x256xbf16>
    %423 = vector.shape_cast %422 : vector<1x64x256xbf16> to vector<64x256xbf16>
    %cst_124 = arith.constant dense<0.000000e+00> : vector<8x256xf32>
    %424 = tpu.matmul %421, %423, %cst_124 {dimension_numbers = #tpu.dot_dimension_numbers<[1], [0], [0], [1], [0, 0, 1, 1], [], []>} : vector<8x64xbf16>, vector<64x256xbf16>, vector<8x256xf32> -> vector<8x256xf32>
    %425 = vector.extract_strided_slice %424 {offsets = [0, 0], sizes = [8, 128], strides = [1, 1]} : vector<8x256xf32> to vector<8x128xf32>
    %426 = vector.extract_strided_slice %424 {offsets = [0, 128], sizes = [8, 128], strides = [1, 1]} : vector<8x256xf32> to vector<8x128xf32>
    %427 = arith.negf %425 : vector<8x128xf32>
    %428 = math.exp %427 : vector<8x128xf32>
    %cst_125 = arith.constant 1.000000e+00 : f32
    %429 = vector.broadcast %cst_125 : f32 to vector<8x128xf32>
    %430 = arith.addf %429, %428 : vector<8x128xf32>
    %431 = arith.divf %429, %430 : vector<8x128xf32>
    %432 = arith.mulf %425, %431 : vector<8x128xf32>
    %433 = arith.mulf %432, %426 : vector<8x128xf32>
    %434 = arith.truncf %433 : vector<8x128xf32> to vector<8x128xbf16>
    %c1_126 = arith.constant 1 : index
    %c0_127 = arith.constant 0 : index
    %c0_128 = arith.constant 0 : index
    %435 = vector.load %arg9[%c1_126, %c0_127, %c0_128] : memref<2x128x64xbf16, #tpu.memory_space<vmem>>, vector<1x128x64xbf16>
    %436 = vector.shape_cast %435 : vector<1x128x64xbf16> to vector<128x64xbf16>
    %cst_129 = arith.constant dense<0.000000e+00> : vector<8x64xf32>
    %437 = tpu.matmul %434, %436, %cst_129 {dimension_numbers = #tpu.dot_dimension_numbers<[1], [0], [0], [1], [0, 0, 1, 1], [], []>} : vector<8x128xbf16>, vector<128x64xbf16>, vector<8x64xf32> -> vector<8x64xf32>
    %438 = arith.addf %406, %437 : vector<8x64xf32>
    %c0_130 = arith.constant 0 : index
    %c0_131 = arith.constant 0 : index
    %439 = vector.load %arg10[%c0_130, %c0_131] : memref<1x64xf32, #tpu.memory_space<vmem>>, vector<1x64xf32>
    %440 = arith.mulf %438, %438 : vector<8x64xf32>
    %cst_132 = arith.constant dense<0.000000e+00> : vector<8xf32>
    %441 = vector.multi_reduction <add>, %440, %cst_132 [1] : vector<8x64xf32> to vector<8xf32>
    %442 = vector.shape_cast %441 : vector<8xf32> to vector<8x1xf32>
    %cst_133 = arith.constant 6.400000e+01 : f32
    %443 = vector.broadcast %cst_133 : f32 to vector<8x1xf32>
    %444 = arith.divf %442, %443 : vector<8x1xf32>
    %cst_134 = arith.constant 9.99999974E-6 : f32
    %445 = vector.broadcast %cst_134 : f32 to vector<8x1xf32>
    %446 = arith.addf %444, %445 : vector<8x1xf32>
    %447 = math.rsqrt %446 : vector<8x1xf32>
    %448 = vector.broadcast %447 : vector<8x1xf32> to vector<8x64xf32>
    %449 = arith.mulf %438, %448 : vector<8x64xf32>
    %450 = vector.broadcast %439 : vector<1x64xf32> to vector<8x64xf32>
    %451 = arith.mulf %449, %450 : vector<8x64xf32>
    %452 = arith.truncf %451 : vector<8x64xf32> to vector<8x64xbf16>
    %c0_135 = arith.constant 0 : index
    %c0_136 = arith.constant 0 : index
    %453 = vector.load %arg12[%c0_135, %c0_136] : memref<64x256xbf16, #tpu.memory_space<vmem>>, vector<64x256xbf16>
    %cst_137 = arith.constant dense<0.000000e+00> : vector<8x256xf32>
    %454 = tpu.matmul %452, %453, %cst_137 {dimension_numbers = #tpu.dot_dimension_numbers<[1], [0], [0], [1], [0, 0, 1, 1], [], []>} : vector<8x64xbf16>, vector<64x256xbf16>, vector<8x256xf32> -> vector<8x256xf32>
    %c0_138 = arith.constant 0 : index
    %c0_139 = arith.constant 0 : index
    %455 = vector.load %arg13[%c0_138, %c0_139] : memref<8x256xf32, #tpu.memory_space<vmem>>, vector<8x256xf32>
    tpu.vector_store %arg13[%c0_138, %c0_139], %454 {strides = array<i32>} : memref<8x256xf32, #tpu.memory_space<vmem>>, vector<8x256xf32>,
    return
  }
  func.func @transform_0(%arg0: i32) -> (i32, i32) {
    %c0_i32 = arith.constant 0 : i32
    %c0_i32_0 = arith.constant 0 : i32
    %c0_i32_1 = arith.constant 0 : i32
    return %c0_i32, %c0_i32_0 : i32, i32
  }
  func.func @transform_1(%arg0: i32) -> (i32, i32) {
    %c0_i32 = arith.constant 0 : i32
    %c0_i32_0 = arith.constant 0 : i32
    %c0_i32_1 = arith.constant 0 : i32
    return %c0_i32, %c0_i32_0 : i32, i32
  }
  func.func @transform_2(%arg0: i32) -> (i32, i32) {
    %c0_i32 = arith.constant 0 : i32
    %c0_i32_0 = arith.constant 0 : i32
    %c0_i32_1 = arith.constant 0 : i32
    return %c0_i32, %c0_i32_0 : i32, i32
  }
  func.func @transform_3(%arg0: i32) -> (i32, i32, i32) {
    %c0_i32 = arith.constant 0 : i32
    %c0_i32_0 = arith.constant 0 : i32
    %c0_i32_1 = arith.constant 0 : i32
    %c0_i32_2 = arith.constant 0 : i32
    return %c0_i32, %c0_i32_0, %c0_i32_1 : i32, i32, i32
  }
  func.func @transform_4(%arg0: i32) -> (i32, i32, i32) {
    %c0_i32 = arith.constant 0 : i32
    %c0_i32_0 = arith.constant 0 : i32
    %c0_i32_1 = arith.constant 0 : i32
    %c0_i32_2 = arith.constant 0 : i32
    return %c0_i32, %c0_i32_0, %c0_i32_1 : i32, i32, i32
  }
  func.func @transform_5(%arg0: i32) -> (i32, i32, i32) {
    %c0_i32 = arith.constant 0 : i32
    %c0_i32_0 = arith.constant 0 : i32
    %c0_i32_1 = arith.constant 0 : i32
    %c0_i32_2 = arith.constant 0 : i32
    return %c0_i32, %c0_i32_0, %c0_i32_1 : i32, i32, i32
  }
  func.func @transform_6(%arg0: i32) -> (i32, i32, i32) {
    %c0_i32 = arith.constant 0 : i32
    %c0_i32_0 = arith.constant 0 : i32
    %c0_i32_1 = arith.constant 0 : i32
    %c0_i32_2 = arith.constant 0 : i32
    return %c0_i32, %c0_i32_0, %c0_i32_1 : i32, i32, i32
  }
  func.func @transform_7(%arg0: i32) -> (i32, i32, i32) {
    %c0_i32 = arith.constant 0 : i32
    %c0_i32_0 = arith.constant 0 : i32
    %c0_i32_1 = arith.constant 0 : i32
    %c0_i32_2 = arith.constant 0 : i32
    return %c0_i32, %c0_i32_0, %c0_i32_1 : i32, i32, i32
  }
  func.func @transform_8(%arg0: i32) -> (i32, i32, i32) {
    %c0_i32 = arith.constant 0 : i32
    %c0_i32_0 = arith.constant 0 : i32
    %c0_i32_1 = arith.constant 0 : i32
    %c0_i32_2 = arith.constant 0 : i32
    return %c0_i32, %c0_i32_0, %c0_i32_1 : i32, i32, i32
  }
  func.func @transform_9(%arg0: i32) -> (i32, i32) {
    %c0_i32 = arith.constant 0 : i32
    %c0_i32_0 = arith.constant 0 : i32
    %c0_i32_1 = arith.constant 0 : i32
    return %c0_i32, %c0_i32_0 : i32, i32
  }
  func.func @transform_10(%arg0: i32) -> (i32, i32) {
    %c0_i32 = arith.constant 0 : i32
    %c0_i32_0 = arith.constant 0 : i32
    %c0_i32_1 = arith.constant 0 : i32
    return %c0_i32, %c0_i32_0 : i32, i32
  }
  func.func @transform_11(%arg0: i32) -> (i32, i32) {
    %c0_i32 = arith.constant 0 : i32
    %c0_i32_0 = arith.constant 0 : i32
    %c0_i32_1 = arith.constant 0 : i32
    return %c0_i32, %c0_i32_0 : i32, i32
  }
  func.func @transform_12(%arg0: i32) -> (i32, i32) {
    %c0_i32 = arith.constant 0 : i32
    %c0_i32_0 = arith.constant 0 : i32
    %c0_i32_1 = arith.constant 0 : i32
    return %c0_i32, %c0_i32_0 : i32, i32
  }
}

</mosaic_0001>

<llo_original>
// kernel: _lambda_.1
$region0: #{_lambda_.1}
  #allocation0 [shape = 'u32[]', space=smem, size = 0x4, offset = 0x4, fixed_abs, tag = 'smem constant byte address 0x4 - core index']
  #allocation1 [shape = 'u32[144,128]{1,0:T(1,128)}', space=vmem, size = 0x12000, scoped, tag = 'internal scratch']
  %s0 = inlined_call_operand.vmem [shape: s32[8,1], index: 0, kind: input, shape index: {}]
  %s1 = inlined_call_operand.vmem [shape: f32[8,16], index: 1, kind: input, shape index: {}]
  %s2 = inlined_call_operand.vmem [shape: f32[8,16], index: 2, kind: input, shape index: {}]
  %s3 = inlined_call_operand.vmem [shape: f32[2,1,64], index: 3, kind: input, shape index: {}, may-alias: {3,6}]
  %s4 = inlined_call_operand.vmem [shape: bf16[2,64,128], index: 4, kind: input, shape index: {}]
  %s5 = inlined_call_operand.hbm [shape: bf16[2,64,64], index: 5, kind: input, shape index: {}]
  %s6 = inlined_call_operand.vmem [shape: f32[2,1,64], index: 6, kind: input, shape index: {}, may-alias: {3,6}]
  %s7 = inlined_call_operand.hbm [shape: bf16[2,64,256], index: 7, kind: input, shape index: {}]
  %s8 = inlined_call_operand.hbm [shape: bf16[2,128,64], index: 8, kind: input, shape index: {}]
  %s9 = inlined_call_operand.vmem [shape: f32[1,64], index: 9, kind: input, shape index: {}]
  %s10 = inlined_call_operand.hbm [shape: bf16[256,64], index: 10, kind: input, shape index: {}]
  %s11 = inlined_call_operand.hbm [shape: bf16[64,256], index: 11, kind: input, shape index: {}]
  %s12 = inlined_call_operand.hbm [shape: f32[8,256], index: 12, kind: output, shape index: {}]
  %s13 = sld [smem:[#allocation0]]
  $region78: #{_lambda_.1} parent=0
    _
  %s15 = ssub.s32 1, %s13
  %s16 = scalar_select 0, %s15, %s13
  $region1: #{_lambda_.1} parent=0
    #allocation2 [shape = 'u8[32768]{0}', space=vmem, size = 0x8000, scoped, tag = 'input window, operand 5, single buffered']
    #allocation3 [shape = 's32[1]{0}', space=sflag, size = 0x4, scoped, tag = 'scoped memory for _lambda_.1']
    #allocation4 [shape = 's32[1]{0}', space=sflag, size = 0x4, scoped, tag = 'scoped memory for _lambda_.1']
    #allocation5 [shape = 'u8[65536]{0}', space=vmem, size = 0x10000, scoped, tag = 'input window, operand 7, single buffered']
    #allocation6 [shape = 's32[1]{0}', space=sflag, size = 0x4, scoped, tag = 'scoped memory for _lambda_.1']
    #allocation7 [shape = 'u8[65536]{0}', space=vmem, size = 0x10000, scoped, tag = 'input window, operand 8, single buffered']
    #allocation8 [shape = 'u8[65536]{0}', space=vmem, size = 0x10000, scoped, tag = 'input window, operand 10, single buffered']
    #allocation9 [shape = 's32[1]{0}', space=sflag, size = 0x4, scoped, tag = 'scoped memory for _lambda_.1']
    #allocation10 [shape = 'u8[32768]{0}', space=vmem, size = 0x8000, scoped, tag = 'input window, operand 11, single buffered']
    #allocation11 [shape = 'u8[8192]{0}', space=vmem, size = 0x2000, scoped, tag = 'output window, operand 0, single buffered']
    %17 = vsyncpa [#allocation3], 0
    %18 = vsyncpa [#allocation6], 0
    %19 = vsyncpa [#allocation9], 0
    %20 = vsyncpa [#allocation4], 0
    // Predicated region
    $region2: #{_lambda_.1} parent=1 // pred_check
      _
    $region3: #{_lambda_.1} parent=1 // pred_check_branch
      %22 = sbr.rel (0) target = $region5
    $region4: #{_lambda_.1} parent=1 // pred_region
      _
    $region5: #{_lambda_.1} parent=1 // pred_fallthru
      _
    // Predicated region
    $region6: #{_lambda_.1} parent=1 // pred_check
      _
    $region7: #{_lambda_.1} parent=1 // pred_check_branch
      %24 = sbr.rel (0) target = $region9
    $region8: #{_lambda_.1} parent=1 // pred_region
      _
    $region9: #{_lambda_.1} parent=1 // pred_fallthru
      _
    // Predicated region
    $region10: #{_lambda_.1} parent=1 // pred_check
      _
    $region11: #{_lambda_.1} parent=1 // pred_check_branch
      %26 = sbr.rel (0) target = $region13
    $region12: #{_lambda_.1} parent=1 // pred_region
      _
    $region13: #{_lambda_.1} parent=1 // pred_fallthru
      _
    // Predicated region
    $region14: #{_lambda_.1} parent=1 // pred_check
      _
    $region15: #{_lambda_.1} parent=1 // pred_check_branch
      %28 = sbr.rel (0) target = $region17
    $region16: #{_lambda_.1} parent=1 // pred_region
      _
    $region17: #{_lambda_.1} parent=1 // pred_fallthru
      _
    // Predicated region
    $region18: #{_lambda_.1} parent=1 // pred_check
      _
    $region19: #{_lambda_.1} parent=1 // pred_check_branch
      %30 = sbr.rel (0) target = $region21
    $region20: #{_lambda_.1} parent=1 // pred_region
      _
    $region21: #{_lambda_.1} parent=1 // pred_fallthru
      _
    // Predicated region
    $region22: #{_lambda_.1} parent=1 // pred_check
      _
    $region23: #{_lambda_.1} parent=1 // pred_check_branch
      %32 = sbr.rel (0) target = $region25
    $region24: #{_lambda_.1} parent=1 // pred_region
      %s34 = ssub.s32 1024, 1024
      %35 = vsyncadd [#allocation3], %s34
      %s36 = sshll.u32 [#allocation2], 4
      %s37 = int_to_ptr.vmem [resolvable:$true] %s36
      %42 = dma.hbm_to_vmem [thread:$0]  %s5, 1024, %s37, [#allocation3], 64, 64, 4
    $region25: #{_lambda_.1} parent=1 // pred_fallthru
      _
    // Predicated region
    $region26: #{_lambda_.1} parent=1 // pred_check
      _
    $region27: #{_lambda_.1} parent=1 // pred_check_branch
      %44 = sbr.rel (0) target = $region29
    $region28: #{_lambda_.1} parent=1 // pred_region
      _
    $region29: #{_lambda_.1} parent=1 // pred_fallthru
      _
    // Predicated region
    $region30: #{_lambda_.1} parent=1 // pred_check
      _
    $region31: #{_lambda_.1} parent=1 // pred_check_branch
      %46 = sbr.rel (0) target = $region33
    $region32: #{_lambda_.1} parent=1 // pred_region
      %s48 = ssub.s32 2048, 2048
      %49 = vsyncadd [#allocation6], %s48
      %s50 = sshll.u32 [#allocation5], 4
      %s51 = int_to_ptr.vmem [resolvable:$true] %s50
      %56 = dma.hbm_to_vmem [thread:$0]  %s7, 2048, %s51, [#allocation6], 128, 128, 8
    $region33: #{_lambda_.1} parent=1 // pred_fallthru
      _
    // Predicated region
    $region34: #{_lambda_.1} parent=1 // pred_check
      _
    $region35: #{_lambda_.1} parent=1 // pred_check_branch
      %58 = sbr.rel (0) target = $region37
    $region36: #{_lambda_.1} parent=1 // pred_region
      %s60 = ssub.s32 2048, 2048
      %61 = vsyncadd [#allocation6], %s60
      %s62 = sshll.u32 [#allocation7], 4
      %s63 = int_to_ptr.vmem [resolvable:$true] %s62
      %68 = dma.hbm_to_vmem [thread:$0]  %s8, 2048, %s63, [#allocation6], 64, 64, 4
    $region37: #{_lambda_.1} parent=1 // pred_fallthru
      _
    // Predicated region
    $region38: #{_lambda_.1} parent=1 // pred_check
      _
    $region39: #{_lambda_.1} parent=1 // pred_check_branch
      %70 = sbr.rel (0) target = $region41
    $region40: #{_lambda_.1} parent=1 // pred_region
      _
    $region41: #{_lambda_.1} parent=1 // pred_fallthru
      _
    // Predicated region
    $region42: #{_lambda_.1} parent=1 // pred_check
      _
    $region43: #{_lambda_.1} parent=1 // pred_check_branch
      %72 = sbr.rel (0) target = $region45
    $region44: #{_lambda_.1} parent=1 // pred_region
      %s74 = ssub.s32 2048, 2048
      %75 = vsyncadd [#allocation9], %s74
      %s76 = sshll.u32 [#allocation8], 4
      %s77 = int_to_ptr.vmem [resolvable:$true] %s76
      %82 = dma.hbm_to_vmem [thread:$0]  %s10, 2048, %s77, [#allocation9], 64, 64, 4
    $region45: #{_lambda_.1} parent=1 // pred_fallthru
      _
    // Predicated region
    $region46: #{_lambda_.1} parent=1 // pred_check
      _
    $region47: #{_lambda_.1} parent=1 // pred_check_branch
      %84 = sbr.rel (0) target = $region49
    $region48: #{_lambda_.1} parent=1 // pred_region
      %s86 = ssub.s32 1024, 1024
      %87 = vsyncadd [#allocation9], %s86
      %s88 = sshll.u32 [#allocation10], 4
      %s89 = int_to_ptr.vmem [resolvable:$true] %s88
      %94 = dma.hbm_to_vmem [thread:$0]  %s11, 1024, %s89, [#allocation9], 128, 128, 8
    $region49: #{_lambda_.1} parent=1 // pred_fallthru
      _
    // Predicated region
    $region50: #{_lambda_.1} parent=1 // pred_check
      _
    $region51: #{_lambda_.1} parent=1 // pred_check_branch
      %96 = sbr.rel (0) target = $region53
    $region52: #{_lambda_.1} parent=1 // pred_region
      %97 = dma.done [#allocation3], 1024
    $region53: #{_lambda_.1} parent=1 // pred_fallthru
      _
    // Predicated region
    $region54: #{_lambda_.1} parent=1 // pred_check
      _
    $region55: #{_lambda_.1} parent=1 // pred_check_branch
      %99 = sbr.rel (0) target = $region57
    $region56: #{_lambda_.1} parent=1 // pred_region
      %100 = dma.done [#allocation6], 2048
    $region57: #{_lambda_.1} parent=1 // pred_fallthru
      _
    // Predicated region
    $region58: #{_lambda_.1} parent=1 // pred_check
      _
    $region59: #{_lambda_.1} parent=1 // pred_check_branch
      %102 = sbr.rel (0) target = $region61
    $region60: #{_lambda_.1} parent=1 // pred_region
      %103 = dma.done [#allocation6], 2048
    $region61: #{_lambda_.1} parent=1 // pred_fallthru
      _
    // Predicated region
    $region62: #{_lambda_.1} parent=1 // pred_check
      _
    $region63: #{_lambda_.1} parent=1 // pred_check_branch
      %105 = sbr.rel (0) target = $region65
    $region64: #{_lambda_.1} parent=1 // pred_region
      %106 = dma.done [#allocation9], 2048
    $region65: #{_lambda_.1} parent=1 // pred_fallthru
      _
    // Predicated region
    $region66: #{_lambda_.1} parent=1 // pred_check
      _
    $region67: #{_lambda_.1} parent=1 // pred_check_branch
      %108 = sbr.rel (0) target = $region69
    $region68: #{_lambda_.1} parent=1 // pred_region
      %109 = dma.done [#allocation9], 1024
    $region69: #{_lambda_.1} parent=1 // pred_fallthru
      _
    %v111 = vld [vmem:[%s0] sm:$0xff]
    %v112 = vlaneseq
    %v113 = vand.u32 %v112, 127
    %v114 = vadd.s32 %v113, 128
    %115 = vset.pattern.permute.xlu0 0
    %116 = vperm.xlu0 %115, %v111
    %v117 = vpop.permute.xlu0 %116
    %vm118 = vcmp.eq.s32.totalorder %v113, %v117
    %vm119 = vcmp.eq.s32.totalorder %v114, %v117
    %v120 = vsel %vm118, 1.0, 0.0
    %v121 = vsel %vm119, 1.0, 0.0
    %v122 = vpack.c.bf16 %v120, %v120
    %v123 = vpack.c.bf16 %v121, %v121
    %v124 = vld [vmem:[#allocation8] sm:$0xf]
    %v125 = vld [vmem:[#allocation8 + $0x4] sm:$0xf]
    %v126 = vld [vmem:[#allocation8 + $0x8] sm:$0xf]
    %v127 = vld [vmem:[#allocation8 + $0xc] sm:$0xf]
    %v128 = vld [vmem:[#allocation8 + $0x10] sm:$0xf]
    %v129 = vld [vmem:[#allocation8 + $0x14] sm:$0xf]
    %v130 = vld [vmem:[#allocation8 + $0x18] sm:$0xf]
    %v131 = vld [vmem:[#allocation8 + $0x1c] sm:$0xf]
    %v132 = vld [vmem:[#allocation8 + $0x20] sm:$0xf]
    %v133 = vld [vmem:[#allocation8 + $0x24] sm:$0xf]
    %v134 = vld [vmem:[#allocation8 + $0x28] sm:$0xf]
    %v135 = vld [vmem:[#allocation8 + $0x2c] sm:$0xf]
    %v136 = vld [vmem:[#allocation8 + $0x30] sm:$0xf]
    %v137 = vld [vmem:[#allocation8 + $0x34] sm:$0xf]
    %v138 = vld [vmem:[#allocation8 + $0x38] sm:$0xf]
    %v139 = vld [vmem:[#allocation8 + $0x3c] sm:$0xf]
    %v140 = vld [vmem:[#allocation8 + $0x40] sm:$0xf]
    %v141 = vld [vmem:[#allocation8 + $0x44] sm:$0xf]
    %v142 = vld [vmem:[#allocation8 + $0x48] sm:$0xf]
    %v143 = vld [vmem:[#allocation8 + $0x4c] sm:$0xf]
    %v144 = vld [vmem:[#allocation8 + $0x50] sm:$0xf]
    %v145 = vld [vmem:[#allocation8 + $0x54] sm:$0xf]
    %v146 = vld [vmem:[#allocation8 + $0x58] sm:$0xf]
    %v147 = vld [vmem:[#allocation8 + $0x5c] sm:$0xf]
    %v148 = vld [vmem:[#allocation8 + $0x60] sm:$0xf]
    %v149 = vld [vmem:[#allocation8 + $0x64] sm:$0xf]
    %v150 = vld [vmem:[#allocation8 + $0x68] sm:$0xf]
    %v151 = vld [vmem:[#allocation8 + $0x6c] sm:$0xf]
    %v152 = vld [vmem:[#allocation8 + $0x70] sm:$0xf]
    %v153 = vld [vmem:[#allocation8 + $0x74] sm:$0xf]
    %v154 = vld [vmem:[#allocation8 + $0x78] sm:$0xf]
    %v155 = vld [vmem:[#allocation8 + $0x7c] sm:$0xf]
    %v188 = vunpack.c.l.b16 %v124
    %v189 = vunpack.c.l.b16 %v125
    %v190 = vunpack.c.l.b16 %v126
    %v191 = vunpack.c.l.b16 %v127
    %v192 = vunpack.c.l.b16 %v128
    %v193 = vunpack.c.l.b16 %v129
    %v194 = vunpack.c.l.b16 %v130
    %v195 = vunpack.c.l.b16 %v131
    %v196 = vunpack.c.l.b16 %v132
    %v197 = vunpack.c.l.b16 %v133
    %v198 = vunpack.c.l.b16 %v134
    %v199 = vunpack.c.l.b16 %v135
    %v200 = vunpack.c.l.b16 %v136
    %v201 = vunpack.c.l.b16 %v137
    %v202 = vunpack.c.l.b16 %v138
    %v203 = vunpack.c.l.b16 %v139
    %v204 = vunpack.c.l.b16 %v140
    %v205 = vunpack.c.l.b16 %v141
    %v206 = vunpack.c.l.b16 %v142
    %v207 = vunpack.c.l.b16 %v143
    %v208 = vunpack.c.l.b16 %v144
    %v209 = vunpack.c.l.b16 %v145
    %v210 = vunpack.c.l.b16 %v146
    %v211 = vunpack.c.l.b16 %v147
    %v212 = vunpack.c.l.b16 %v148
    %v213 = vunpack.c.l.b16 %v149
    %v214 = vunpack.c.l.b16 %v150
    %v215 = vunpack.c.l.b16 %v151
    %v216 = vunpack.c.l.b16 %v152
    %v217 = vunpack.c.l.b16 %v153
    %v218 = vunpack.c.l.b16 %v154
    %v219 = vunpack.c.l.b16 %v155
    %v220 = vpack.c.b16 %v189, %v188
    %v221 = vpack.c.b16 %v191, %v190
    %v222 = vpack.c.b16 %v193, %v192
    %v223 = vpack.c.b16 %v195, %v194
    %v224 = vpack.c.b16 %v197, %v196
    %v225 = vpack.c.b16 %v199, %v198
    %v226 = vpack.c.b16 %v201, %v200
    %v227 = vpack.c.b16 %v203, %v202
    %v228 = vpack.c.b16 %v205, %v204
    %v229 = vpack.c.b16 %v207, %v206
    %v230 = vpack.c.b16 %v209, %v208
    %v231 = vpack.c.b16 %v211, %v210
    %v232 = vpack.c.b16 %v213, %v212
    %v233 = vpack.c.b16 %v215, %v214
    %v234 = vpack.c.b16 %v217, %v216
    %v235 = vpack.c.b16 %v219, %v218
    %252 = vmatprep.subr.bf16.mxu0 0
    %253 = vmatpush1.bf16.msra.mxu0 %v227
    %254 = vmatprep.subr.bf16.mxu0 0
    %255 = vmatpush1.bf16.msra.mxu0 %v226
    %256 = vmatprep.subr.bf16.mxu0 0
    %257 = vmatpush1.bf16.msra.mxu0 %v225
    %258 = vmatprep.subr.bf16.mxu0 0
    %259 = vmatpush1.bf16.msra.mxu0 %v224
    %260 = vmatprep.subr.bf16.mxu0 0
    %261 = vmatpush1.bf16.msra.mxu0 %v223
    %262 = vmatprep.subr.bf16.mxu0 0
    %263 = vmatpush1.bf16.msra.mxu0 %v222
    %264 = vmatprep.subr.bf16.mxu0 0
    %265 = vmatpush1.bf16.msra.mxu0 %v221
    %266 = vmatprep.subr.bf16.mxu0 0
    %267 = vmatpush1.bf16.msra.mxu0 %v220
    %268 = vmatprep.subr.bf16.mxu0 0
    %269 = vmatpush2.bf16.msra.mxu0 %v235
    %270 = vmatprep.subr.bf16.mxu0 0
    %271 = vmatpush2.bf16.msra.mxu0 %v234
    %272 = vmatprep.subr.bf16.mxu0 0
    %273 = vmatpush2.bf16.msra.mxu0 %v233
    %274 = vmatprep.subr.bf16.mxu0 0
    %275 = vmatpush2.bf16.msra.mxu0 %v232
    %276 = vmatprep.subr.bf16.mxu0 0
    %277 = vmatpush2.bf16.msra.mxu0 %v231
    %278 = vmatprep.subr.bf16.mxu0 0
    %279 = vmatpush2.bf16.msra.mxu0 %v230
    %280 = vmatprep.subr.bf16.mxu0 0
    %281 = vmatpush2.bf16.msra.mxu0 %v229
    %282 = vmatprep.subr.bf16.mxu0 0
    %283 = vmatpush2.bf16.msra.mxu0 %v228
    %284 = vmatprep.mubr.bf16.mxu0 %v123
    %285 = vmatmul.mubr.bf16.gmra.mxu0 %v122
    %v286 = vpop.f32.mrf.mxu0
    %v287 = vadd.f32 0.0, %v286
    %v288 = vpop.f32.mrf.mxu0
    %v289 = vpop.f32.mrf.mxu0
    %v290 = vpop.f32.mrf.mxu0
    %291 = vdwg.mxu0
    %v292 = vld [vmem:[%s1] sm:$0xff]
    %v293 = vld [vmem:[%s2] sm:$0xff]
    %v294 = vlaneseq
    %v295 = vshrl.u32 %v294, 7
    %vm296 = vcmp.le.s32.totalorder %v113, %v295
    %v297 = vld [vmem:[%s3] sm:$0x1]
    %v298 = vmul.f32 %v287, %v287
    %vm299 = vcmask 523264
    %v300 = vsel %vm299, %v298, 0.0
    %301 = vadd.xlane.f32.xlu0 %v300
    %v302 = vpop.xlane.xlu0 %301
    %v303 = vrcp.pop 64.0
    %v304 = vmul.f32 %v302, %v303
    %v305 = vadd.f32 %v304, 1e-05
    %v306 = vrsqrt.pop %v305
    %v307 = vmul.f32 %v287, %v306
    %v309 = vlaneseq
    %v310 = vshrl.u32 %v309, 7
    %v311 = vsub.s32 0, %v310
    %v312 = vrot.slane %v297, %v311
    %v314 = vmul.f32 %v307, %v312
    %v315 = vpack.c.bf16 %v314, %v314
    %v316 = vld [vmem:[%s4] sm:$0xf]
    %v317 = vld [vmem:[%s4 + $0x4] sm:$0xf]
    %v318 = vld [vmem:[%s4 + $0x8] sm:$0xf]
    %v319 = vld [vmem:[%s4 + $0xc] sm:$0xf]
    %v320 = vld [vmem:[%s4 + $0x10] sm:$0xf]
    %v321 = vld [vmem:[%s4 + $0x14] sm:$0xf]
    %v322 = vld [vmem:[%s4 + $0x18] sm:$0xf]
    %v323 = vld [vmem:[%s4 + $0x1c] sm:$0xf]
    %v332 = vunpack.c.l.b16 %v316
    %v333 = vunpack.c.l.b16 %v317
    %v334 = vunpack.c.l.b16 %v318
    %v335 = vunpack.c.l.b16 %v319
    %v336 = vunpack.c.l.b16 %v320
    %v337 = vunpack.c.l.b16 %v321
    %v338 = vunpack.c.l.b16 %v322
    %v339 = vunpack.c.l.b16 %v323
    %v340 = vpack.c.b16 %v333, %v332
    %v341 = vpack.c.b16 %v335, %v334
    %v342 = vpack.c.b16 %v337, %v336
    %v343 = vpack.c.b16 %v339, %v338
    %v349 = vsel %vm299, %v315, 0
    %351 = vmatprep.subr.bf16.mxu0 0
    %352 = vmatpush1.bf16.msra.mxu0 0
    %353 = vmatprep.subr.bf16.mxu0 0
    %354 = vmatpush1.bf16.msra.mxu0 0
    %355 = vmatprep.subr.bf16.mxu0 0
    %356 = vmatpush1.bf16.msra.mxu0 0
    %357 = vmatprep.subr.bf16.mxu0 0
    %358 = vmatpush1.bf16.msra.mxu0 0
    %359 = vmatprep.subr.bf16.mxu0 0
    %360 = vmatpush1.bf16.msra.mxu0 %v343
    %361 = vmatprep.subr.bf16.mxu0 0
    %362 = vmatpush1.bf16.msra.mxu0 %v342
    %363 = vmatprep.subr.bf16.mxu0 0
    %364 = vmatpush1.bf16.msra.mxu0 %v341
    %365 = vmatprep.subr.bf16.mxu0 0
    %366 = vmatpush1.bf16.msra.mxu0 %v340
    %367 = vmatprep.subr.bf16.mxu0 0
    %368 = vmatpush2.bf16.msra.mxu0 0
    %369 = vmatprep.subr.bf16.mxu0 0
    %370 = vmatpush2.bf16.msra.mxu0 0
    %371 = vmatprep.subr.bf16.mxu0 0
    %372 = vmatpush2.bf16.msra.mxu0 0
    %373 = vmatprep.subr.bf16.mxu0 0
    %374 = vmatpush2.bf16.msra.mxu0 0
    %375 = vmatprep.subr.bf16.mxu0 0
    %376 = vmatpush2.bf16.msra.mxu0 0
    %377 = vmatprep.subr.bf16.mxu0 0
    %378 = vmatpush2.bf16.msra.mxu0 0
    %379 = vmatprep.subr.bf16.mxu0 0
    %380 = vmatpush2.bf16.msra.mxu0 0
    %381 = vmatprep.subr.bf16.mxu0 0
    %382 = vmatpush2.bf16.msra.mxu0 0
    %383 = vmatprep.mubr.bf16.mxu0 0
    %384 = vmatmul.mubr.bf16.gmra.mxu0 %v349
    %v385 = vpop.f32.mrf.mxu0
    %v386 = vadd.f32 0.0, %v385
    %v387 = vpop.f32.mrf.mxu0
    %v388 = vpop.f32.mrf.mxu0
    %v389 = vpop.f32.mrf.mxu0
    %390 = vdwg.mxu0
    %v391 = vsub.f32 0.0, %v386
    %393 = vrot.lane.b32.xlu0 %v391, 120
    %v394 = vpop.permute.xlu0 %393
    %397 = vrot.lane.b32.xlu0 %v386, 8
    %v398 = vpop.permute.xlu0 %397
    %vm400 = vcmask 64512
    %v401 = vsel %vm400, %v394, %v398
    %v402 = vmul.f32 %v386, %v292
    %v403 = vmul.f32 %v401, %v293
    %v404 = vadd.f32 %v402, %v403
    %405 = vrot.lane.b32.xlu0 %v391, 56
    %v406 = vpop.permute.xlu0 %405
    %408 = vrot.lane.b32.xlu0 %v386, 72
    %v409 = vpop.permute.xlu0 %408
    %v411 = vsel %vm400, %v406, %v409
    %413 = vrot.lane.b32.xlu0 %v292, 64
    %v414 = vpop.permute.xlu0 %413
    %v416 = vmul.f32 %v386, %v414
    %v417 = vmul.f32 %v411, %v293
    %419 = vrot.lane.b32.xlu0 %v417, 64
    %v420 = vpop.permute.xlu0 %419
    %v422 = vadd.f32 %v416, %v420
    %v423 = vpack.c.bf16 %v404, %v404
    %v424 = vpack.c.bf16 %v422, %v422
    %426 = vrot.lane.b32.xlu0 %v424, 64
    %v427 = vpop.permute.xlu0 %426
    %vm428 = vcmask 130048
    %v430 = vsel %vm428, %v423, 0
    %v433 = vsel %vm428, %v427, 0
    %435 = vmatprep.subr.bf16.mxu0 0
    %436 = vmatpush1.bf16.xpose.msra.mxu0 0
    %437 = vmatprep.subr.bf16.mxu0 0
    %438 = vmatpush1.bf16.xpose.msra.mxu0 0
    %439 = vmatprep.subr.bf16.mxu0 0
    %440 = vmatpush1.bf16.xpose.msra.mxu0 0
    %441 = vmatprep.subr.bf16.mxu0 0
    %442 = vmatpush1.bf16.xpose.msra.mxu0 0
    %443 = vmatprep.subr.bf16.mxu0 0
    %444 = vmatpush1.bf16.xpose.msra.mxu0 0
    %445 = vmatprep.subr.bf16.mxu0 0
    %446 = vmatpush1.bf16.xpose.msra.mxu0 0
    %447 = vmatprep.subr.bf16.mxu0 0
    %448 = vmatpush1.bf16.xpose.msra.mxu0 0
    %449 = vmatprep.subr.bf16.mxu0 0
    %450 = vmatpush1.bf16.xpose.msra.mxu0 %v433
    %451 = vmatprep.subr.bf16.mxu0 0
    %452 = vmatpush2.bf16.xpose.msra.mxu0 0
    %453 = vmatprep.subr.bf16.mxu0 0
    %454 = vmatpush2.bf16.xpose.msra.mxu0 0
    %455 = vmatprep.subr.bf16.mxu0 0
    %456 = vmatpush2.bf16.xpose.msra.mxu0 0
    %457 = vmatprep.subr.bf16.mxu0 0
    %458 = vmatpush2.bf16.xpose.msra.mxu0 0
    %459 = vmatprep.subr.bf16.mxu0 0
    %460 = vmatpush2.bf16.xpose.msra.mxu0 0
    %461 = vmatprep.subr.bf16.mxu0 0
    %462 = vmatpush2.bf16.xpose.msra.mxu0 0
    %463 = vmatprep.subr.bf16.mxu0 0
    %464 = vmatpush2.bf16.xpose.msra.mxu0 0
    %465 = vmatprep.subr.bf16.mxu0 0
    %466 = vmatpush2.bf16.xpose.msra.mxu0 0
    %467 = vmatprep.mubr.bf16.mxu0 0
    %468 = vmatmul.mubr.bf16.gmra.mxu0 %v430
    %v469 = vpop.f32.mrf.mxu0
    %v470 = vadd.f32 0.0, %v469
    %v471 = vpop.f32.mrf.mxu0
    %v472 = vpop.f32.mrf.mxu0
    %v473 = vpop.f32.mrf.mxu0
    %474 = vdwg.mxu0
    %v475 = vmul.f32 %v470, 0.25
    %v476 = vsel %vm296, %v475, -1e+30
    %v477 = vsel %vm400, %v476, -inf
    %478 = vmax.xlane.f32.xlu0 %v477
    %v479 = vpop.xlane.xlu0 %478
    %v480 = vsub.f32 %v476, %v479
    %v481 = vmul.f32 %v480, 1.442695
    %v482 = vpow.pop %v481
    %v483 = vsel %vm400, %v482, 0.0
    %484 = vadd.xlane.f32.xlu0 %v483
    %v485 = vpop.xlane.xlu0 %484
    %v486 = vrcp.pop %v485
    %v487 = vmul.f32 %v482, %v486
    %v488 = vpack.c.bf16 %v487, %v487
    %v489 = vpack.c.bf16 %v386, %v386
    %491 = vrot.lane.b32.xlu0 %v489, 32
    %v492 = vpop.permute.xlu0 %491
    %v494 = vsel %vm400, %v488, 0
    %vm496 = vcmask 1043456
    %v498 = vsel %vm496, %v492, 0
    %500 = vmatprep.subr.bf16.mxu0 0
    %501 = vmatpush1.bf16.msra.mxu0 0
    %502 = vmatprep.subr.bf16.mxu0 0
    %503 = vmatpush1.bf16.msra.mxu0 0
    %504 = vmatprep.subr.bf16.mxu0 0
    %505 = vmatpush1.bf16.msra.mxu0 0
    %506 = vmatprep.subr.bf16.mxu0 0
    %507 = vmatpush1.bf16.msra.mxu0 0
    %508 = vmatprep.subr.bf16.mxu0 0
    %509 = vmatpush1.bf16.msra.mxu0 0
    %510 = vmatprep.subr.bf16.mxu0 0
    %511 = vmatpush1.bf16.msra.mxu0 0
    %512 = vmatprep.subr.bf16.mxu0 0
    %513 = vmatpush1.bf16.msra.mxu0 0
    %514 = vmatprep.subr.bf16.mxu0 0
    %515 = vmatpush1.bf16.msra.mxu0 %v498
    %516 = vmatprep.subr.bf16.mxu0 0
    %517 = vmatpush2.bf16.msra.mxu0 0
    %518 = vmatprep.subr.bf16.mxu0 0
    %519 = vmatpush2.bf16.msra.mxu0 0
    %520 = vmatprep.subr.bf16.mxu0 0
    %521 = vmatpush2.bf16.msra.mxu0 0
    %522 = vmatprep.subr.bf16.mxu0 0
    %523 = vmatpush2.bf16.msra.mxu0 0
    %524 = vmatprep.subr.bf16.mxu0 0
    %525 = vmatpush2.bf16.msra.mxu0 0
    %526 = vmatprep.subr.bf16.mxu0 0
    %527 = vmatpush2.bf16.msra.mxu0 0
    %528 = vmatprep.subr.bf16.mxu0 0
    %529 = vmatpush2.bf16.msra.mxu0 0
    %530 = vmatprep.subr.bf16.mxu0 0
    %531 = vmatpush2.bf16.msra.mxu0 0
    %532 = vmatprep.mubr.bf16.mxu0 0
    %533 = vmatmul.mubr.bf16.gmra.mxu0 %v494
    %v534 = vpop.f32.mrf.mxu0
    %v535 = vadd.f32 0.0, %v534
    %v536 = vpop.f32.mrf.mxu0
    %v537 = vpop.f32.mrf.mxu0
    %v538 = vpop.f32.mrf.mxu0
    %539 = vdwg.mxu0
    %540 = vrot.lane.b32.xlu0 %v391, 104
    %v541 = vpop.permute.xlu0 %540
    %543 = vrot.lane.b32.xlu0 %v386, 120
    %v544 = vpop.permute.xlu0 %543
    %v546 = vsel %vm400, %v541, %v544
    %547 = vrot.lane.b32.xlu0 %v292, 16
    %v548 = vpop.permute.xlu0 %547
    %v550 = vmul.f32 %v386, %v548
    %v551 = vmul.f32 %v546, %v293
    %553 = vrot.lane.b32.xlu0 %v551, 16
    %v554 = vpop.permute.xlu0 %553
    %v556 = vadd.f32 %v550, %v554
    %v557 = vpack.c.bf16 %v556, %v556
    %559 = vrot.lane.b32.xlu0 %v557, 112
    %v560 = vpop.permute.xlu0 %559
    %v562 = vsel %vm428, %v560, 0
    %564 = vmatprep.subr.bf16.mxu0 0
    %565 = vmatpush1.bf16.xpose.msra.mxu0 0
    %566 = vmatprep.subr.bf16.mxu0 0
    %567 = vmatpush1.bf16.xpose.msra.mxu0 0
    %568 = vmatprep.subr.bf16.mxu0 0
    %569 = vmatpush1.bf16.xpose.msra.mxu0 0
    %570 = vmatprep.subr.bf16.mxu0 0
    %571 = vmatpush1.bf16.xpose.msra.mxu0 0
    %572 = vmatprep.subr.bf16.mxu0 0
    %573 = vmatpush1.bf16.xpose.msra.mxu0 0
    %574 = vmatprep.subr.bf16.mxu0 0
    %575 = vmatpush1.bf16.xpose.msra.mxu0 0
    %576 = vmatprep.subr.bf16.mxu0 0
    %577 = vmatpush1.bf16.xpose.msra.mxu0 0
    %578 = vmatprep.subr.bf16.mxu0 0
    %579 = vmatpush1.bf16.xpose.msra.mxu0 %v433
    %580 = vmatprep.subr.bf16.mxu0 0
    %581 = vmatpush2.bf16.xpose.msra.mxu0 0
    %582 = vmatprep.subr.bf16.mxu0 0
    %583 = vmatpush2.bf16.xpose.msra.mxu0 0
    %584 = vmatprep.subr.bf16.mxu0 0
    %585 = vmatpush2.bf16.xpose.msra.mxu0 0
    %586 = vmatprep.subr.bf16.mxu0 0
    %587 = vmatpush2.bf16.xpose.msra.mxu0 0
    %588 = vmatprep.subr.bf16.mxu0 0
    %589 = vmatpush2.bf16.xpose.msra.mxu0 0
    %590 = vmatprep.subr.bf16.mxu0 0
    %591 = vmatpush2.bf16.xpose.msra.mxu0 0
    %592 = vmatprep.subr.bf16.mxu0 0
    %593 = vmatpush2.bf16.xpose.msra.mxu0 0
    %594 = vmatprep.subr.bf16.mxu0 0
    %595 = vmatpush2.bf16.xpose.msra.mxu0 0
    %596 = vmatprep.mubr.bf16.mxu0 0
    %597 = vmatmul.mubr.bf16.gmra.mxu0 %v562
    %v598 = vpop.f32.mrf.mxu0
    %v599 = vadd.f32 0.0, %v598
    %v600 = vpop.f32.mrf.mxu0
    %v601 = vpop.f32.mrf.mxu0
    %v602 = vpop.f32.mrf.mxu0
    %603 = vdwg.mxu0
    %v604 = vmul.f32 %v599, 0.25
    %v605 = vsel %vm296, %v604, -1e+30
    %v606 = vsel %vm400, %v605, -inf
    %607 = vmax.xlane.f32.xlu0 %v606
    %v608 = vpop.xlane.xlu0 %607
    %v609 = vsub.f32 %v605, %v608
    %v610 = vmul.f32 %v609, 1.442695
    %v611 = vpow.pop %v610
    %v612 = vsel %vm400, %v611, 0.0
    %613 = vadd.xlane.f32.xlu0 %v612
    %v614 = vpop.xlane.xlu0 %613
    %v615 = vrcp.pop %v614
    %v616 = vmul.f32 %v611, %v615
    %v617 = vpack.c.bf16 %v616, %v616
    %v619 = vsel %vm400, %v617, 0
    %621 = vmatprep.subr.bf16.mxu0 0
    %622 = vmatpush1.bf16.msra.mxu0 0
    %623 = vmatprep.subr.bf16.mxu0 0
    %624 = vmatpush1.bf16.msra.mxu0 0
    %625 = vmatprep.subr.bf16.mxu0 0
    %626 = vmatpush1.bf16.msra.mxu0 0
    %627 = vmatprep.subr.bf16.mxu0 0
    %628 = vmatpush1.bf16.msra.mxu0 0
    %629 = vmatprep.subr.bf16.mxu0 0
    %630 = vmatpush1.bf16.msra.mxu0 0
    %631 = vmatprep.subr.bf16.mxu0 0
    %632 = vmatpush1.bf16.msra.mxu0 0
    %633 = vmatprep.subr.bf16.mxu0 0
    %634 = vmatpush1.bf16.msra.mxu0 0
    %635 = vmatprep.subr.bf16.mxu0 0
    %636 = vmatpush1.bf16.msra.mxu0 %v498
    %637 = vmatprep.subr.bf16.mxu0 0
    %638 = vmatpush2.bf16.msra.mxu0 0
    %639 = vmatprep.subr.bf16.mxu0 0
    %640 = vmatpush2.bf16.msra.mxu0 0
    %641 = vmatprep.subr.bf16.mxu0 0
    %642 = vmatpush2.bf16.msra.mxu0 0
    %643 = vmatprep.subr.bf16.mxu0 0
    %644 = vmatpush2.bf16.msra.mxu0 0
    %645 = vmatprep.subr.bf16.mxu0 0
    %646 = vmatpush2.bf16.msra.mxu0 0
    %647 = vmatprep.subr.bf16.mxu0 0
    %648 = vmatpush2.bf16.msra.mxu0 0
    %649 = vmatprep.subr.bf16.mxu0 0
    %650 = vmatpush2.bf16.msra.mxu0 0
    %651 = vmatprep.subr.bf16.mxu0 0
    %652 = vmatpush2.bf16.msra.mxu0 0
    %653 = vmatprep.mubr.bf16.mxu0 0
    %654 = vmatmul.mubr.bf16.gmra.mxu0 %v619
    %v655 = vpop.f32.mrf.mxu0
    %v656 = vadd.f32 0.0, %v655
    %v657 = vpop.f32.mrf.mxu0
    %v658 = vpop.f32.mrf.mxu0
    %v659 = vpop.f32.mrf.mxu0
    %660 = vdwg.mxu0
    %661 = vrot.lane.b32.xlu0 %v391, 88
    %v662 = vpop.permute.xlu0 %661
    %664 = vrot.lane.b32.xlu0 %v386, 104
    %v665 = vpop.permute.xlu0 %664
    %v667 = vsel %vm400, %v662, %v665
    %668 = vrot.lane.b32.xlu0 %v292, 32
    %v669 = vpop.permute.xlu0 %668
    %v671 = vmul.f32 %v386, %v669
    %v672 = vmul.f32 %v667, %v293
    %674 = vrot.lane.b32.xlu0 %v672, 32
    %v675 = vpop.permute.xlu0 %674
    %v677 = vadd.f32 %v671, %v675
    %678 = vrot.lane.b32.xlu0 %v391, 40
    %v679 = vpop.permute.xlu0 %678
    %681 = vrot.lane.b32.xlu0 %v386, 56
    %v682 = vpop.permute.xlu0 %681
    %v684 = vsel %vm400, %v679, %v682
    %685 = vrot.lane.b32.xlu0 %v292, 80
    %v686 = vpop.permute.xlu0 %685
    %v688 = vmul.f32 %v386, %v686
    %v689 = vmul.f32 %v684, %v293
    %691 = vrot.lane.b32.xlu0 %v689, 80
    %v692 = vpop.permute.xlu0 %691
    %v694 = vadd.f32 %v688, %v692
    %v695 = vpack.c.bf16 %v677, %v677
    %v696 = vpack.c.bf16 %v694, %v694
    %698 = vrot.lane.b32.xlu0 %v695, 96
    %v699 = vpop.permute.xlu0 %698
    %701 = vrot.lane.b32.xlu0 %v696, 48
    %v702 = vpop.permute.xlu0 %701
    %v704 = vsel %vm428, %v699, 0
    %v707 = vsel %vm428, %v702, 0
    %709 = vmatprep.subr.bf16.mxu0 0
    %710 = vmatpush1.bf16.xpose.msra.mxu0 0
    %711 = vmatprep.subr.bf16.mxu0 0
    %712 = vmatpush1.bf16.xpose.msra.mxu0 0
    %713 = vmatprep.subr.bf16.mxu0 0
    %714 = vmatpush1.bf16.xpose.msra.mxu0 0
    %715 = vmatprep.subr.bf16.mxu0 0
    %716 = vmatpush1.bf16.xpose.msra.mxu0 0
    %717 = vmatprep.subr.bf16.mxu0 0
    %718 = vmatpush1.bf16.xpose.msra.mxu0 0
    %719 = vmatprep.subr.bf16.mxu0 0
    %720 = vmatpush1.bf16.xpose.msra.mxu0 0
    %721 = vmatprep.subr.bf16.mxu0 0
    %722 = vmatpush1.bf16.xpose.msra.mxu0 0
    %723 = vmatprep.subr.bf16.mxu0 0
    %724 = vmatpush1.bf16.xpose.msra.mxu0 %v707
    %725 = vmatprep.subr.bf16.mxu0 0
    %726 = vmatpush2.bf16.xpose.msra.mxu0 0
    %727 = vmatprep.subr.bf16.mxu0 0
    %728 = vmatpush2.bf16.xpose.msra.mxu0 0
    %729 = vmatprep.subr.bf16.mxu0 0
    %730 = vmatpush2.bf16.xpose.msra.mxu0 0
    %731 = vmatprep.subr.bf16.mxu0 0
    %732 = vmatpush2.bf16.xpose.msra.mxu0 0
    %733 = vmatprep.subr.bf16.mxu0 0
    %734 = vmatpush2.bf16.xpose.msra.mxu0 0
    %735 = vmatprep.subr.bf16.mxu0 0
    %736 = vmatpush2.bf16.xpose.msra.mxu0 0
    %737 = vmatprep.subr.bf16.mxu0 0
    %738 = vmatpush2.bf16.xpose.msra.mxu0 0
    %739 = vmatprep.subr.bf16.mxu0 0
    %740 = vmatpush2.bf16.xpose.msra.mxu0 0
    %741 = vmatprep.mubr.bf16.mxu0 0
    %742 = vmatmul.mubr.bf16.gmra.mxu0 %v704
    %v743 = vpop.f32.mrf.mxu0
    %v744 = vadd.f32 0.0, %v743
    %v745 = vpop.f32.mrf.mxu0
    %v746 = vpop.f32.mrf.mxu0
    %v747 = vpop.f32.mrf.mxu0
    %748 = vdwg.mxu0
    %v749 = vmul.f32 %v744, 0.25
    %v750 = vsel %vm296, %v749, -1e+30
    %v751 = vsel %vm400, %v750, -inf
    %752 = vmax.xlane.f32.xlu0 %v751
    %v753 = vpop.xlane.xlu0 %752
    %v754 = vsub.f32 %v750, %v753
    %v755 = vmul.f32 %v754, 1.442695
    %v756 = vpow.pop %v755
    %v757 = vsel %vm400, %v756, 0.0
    %758 = vadd.xlane.f32.xlu0 %v757
    %v759 = vpop.xlane.xlu0 %758
    %v760 = vrcp.pop %v759
    %v761 = vmul.f32 %v756, %v760
    %v762 = vpack.c.bf16 %v761, %v761
    %763 = vrot.lane.b32.xlu0 %v489, 16
    %v764 = vpop.permute.xlu0 %763
    %v766 = vsel %vm400, %v762, 0
    %v769 = vsel %vm496, %v764, 0
    %771 = vmatprep.subr.bf16.mxu0 0
    %772 = vmatpush1.bf16.msra.mxu0 0
    %773 = vmatprep.subr.bf16.mxu0 0
    %774 = vmatpush1.bf16.msra.mxu0 0
    %775 = vmatprep.subr.bf16.mxu0 0
    %776 = vmatpush1.bf16.msra.mxu0 0
    %777 = vmatprep.subr.bf16.mxu0 0
    %778 = vmatpush1.bf16.msra.mxu0 0
    %779 = vmatprep.subr.bf16.mxu0 0
    %780 = vmatpush1.bf16.msra.mxu0 0
    %781 = vmatprep.subr.bf16.mxu0 0
    %782 = vmatpush1.bf16.msra.mxu0 0
    %783 = vmatprep.subr.bf16.mxu0 0
    %784 = vmatpush1.bf16.msra.mxu0 0
    %785 = vmatprep.subr.bf16.mxu0 0
    %786 = vmatpush1.bf16.msra.mxu0 %v769
    %787 = vmatprep.subr.bf16.mxu0 0
    %788 = vmatpush2.bf16.msra.mxu0 0
    %789 = vmatprep.subr.bf16.mxu0 0
    %790 = vmatpush2.bf16.msra.mxu0 0
    %791 = vmatprep.subr.bf16.mxu0 0
    %792 = vmatpush2.bf16.msra.mxu0 0
    %793 = vmatprep.subr.bf16.mxu0 0
    %794 = vmatpush2.bf16.msra.mxu0 0
    %795 = vmatprep.subr.bf16.mxu0 0
    %796 = vmatpush2.bf16.msra.mxu0 0
    %797 = vmatprep.subr.bf16.mxu0 0
    %798 = vmatpush2.bf16.msra.mxu0 0
    %799 = vmatprep.subr.bf16.mxu0 0
    %800 = vmatpush2.bf16.msra.mxu0 0
    %801 = vmatprep.subr.bf16.mxu0 0
    %802 = vmatpush2.bf16.msra.mxu0 0
    %803 = vmatprep.mubr.bf16.mxu0 0
    %804 = vmatmul.mubr.bf16.gmra.mxu0 %v766
    %v805 = vpop.f32.mrf.mxu0
    %v806 = vadd.f32 0.0, %v805
    %v807 = vpop.f32.mrf.mxu0
    %v808 = vpop.f32.mrf.mxu0
    %v809 = vpop.f32.mrf.mxu0
    %810 = vdwg.mxu0
    %811 = vrot.lane.b32.xlu0 %v391, 72
    %v812 = vpop.permute.xlu0 %811
    %814 = vrot.lane.b32.xlu0 %v386, 88
    %v815 = vpop.permute.xlu0 %814
    %v817 = vsel %vm400, %v812, %v815
    %818 = vrot.lane.b32.xlu0 %v292, 48
    %v819 = vpop.permute.xlu0 %818
    %v821 = vmul.f32 %v386, %v819
    %v822 = vmul.f32 %v817, %v293
    %824 = vrot.lane.b32.xlu0 %v822, 48
    %v825 = vpop.permute.xlu0 %824
    %v827 = vadd.f32 %v821, %v825
    %v828 = vpack.c.bf16 %v827, %v827
    %830 = vrot.lane.b32.xlu0 %v828, 80
    %v831 = vpop.permute.xlu0 %830
    %v833 = vsel %vm428, %v831, 0
    %835 = vmatprep.subr.bf16.mxu0 0
    %836 = vmatpush1.bf16.xpose.msra.mxu0 0
    %837 = vmatprep.subr.bf16.mxu0 0
    %838 = vmatpush1.bf16.xpose.msra.mxu0 0
    %839 = vmatprep.subr.bf16.mxu0 0
    %840 = vmatpush1.bf16.xpose.msra.mxu0 0
    %841 = vmatprep.subr.bf16.mxu0 0
    %842 = vmatpush1.bf16.xpose.msra.mxu0 0
    %843 = vmatprep.subr.bf16.mxu0 0
    %844 = vmatpush1.bf16.xpose.msra.mxu0 0
    %845 = vmatprep.subr.bf16.mxu0 0
    %846 = vmatpush1.bf16.xpose.msra.mxu0 0
    %847 = vmatprep.subr.bf16.mxu0 0
    %848 = vmatpush1.bf16.xpose.msra.mxu0 0
    %849 = vmatprep.subr.bf16.mxu0 0
    %850 = vmatpush1.bf16.xpose.msra.mxu0 %v707
    %851 = vmatprep.subr.bf16.mxu0 0
    %852 = vmatpush2.bf16.xpose.msra.mxu0 0
    %853 = vmatprep.subr.bf16.mxu0 0
    %854 = vmatpush2.bf16.xpose.msra.mxu0 0
    %855 = vmatprep.subr.bf16.mxu0 0
    %856 = vmatpush2.bf16.xpose.msra.mxu0 0
    %857 = vmatprep.subr.bf16.mxu0 0
    %858 = vmatpush2.bf16.xpose.msra.mxu0 0
    %859 = vmatprep.subr.bf16.mxu0 0
    %860 = vmatpush2.bf16.xpose.msra.mxu0 0
    %861 = vmatprep.subr.bf16.mxu0 0
    %862 = vmatpush2.bf16.xpose.msra.mxu0 0
    %863 = vmatprep.subr.bf16.mxu0 0
    %864 = vmatpush2.bf16.xpose.msra.mxu0 0
    %865 = vmatprep.subr.bf16.mxu0 0
    %866 = vmatpush2.bf16.xpose.msra.mxu0 0
    %867 = vmatprep.mubr.bf16.mxu0 0
    %868 = vmatmul.mubr.bf16.gmra.mxu0 %v833
    %v869 = vpop.f32.mrf.mxu0
    %v870 = vadd.f32 0.0, %v869
    %v871 = vpop.f32.mrf.mxu0
    %v872 = vpop.f32.mrf.mxu0
    %v873 = vpop.f32.mrf.mxu0
    %874 = vdwg.mxu0
    %v875 = vmul.f32 %v870, 0.25
    %v876 = vsel %vm296, %v875, -1e+30
    %v877 = vsel %vm400, %v876, -inf
    %878 = vmax.xlane.f32.xlu0 %v877
    %v879 = vpop.xlane.xlu0 %878
    %v880 = vsub.f32 %v876, %v879
    %v881 = vmul.f32 %v880, 1.442695
    %v882 = vpow.pop %v881
    %v883 = vsel %vm400, %v882, 0.0
    %884 = vadd.xlane.f32.xlu0 %v883
    %v885 = vpop.xlane.xlu0 %884
    %v886 = vrcp.pop %v885
    %v887 = vmul.f32 %v882, %v886
    %v888 = vpack.c.bf16 %v887, %v887
    %v890 = vsel %vm400, %v888, 0
    %892 = vmatprep.subr.bf16.mxu0 0
    %893 = vmatpush1.bf16.msra.mxu0 0
    %894 = vmatprep.subr.bf16.mxu0 0
    %895 = vmatpush1.bf16.msra.mxu0 0
    %896 = vmatprep.subr.bf16.mxu0 0
    %897 = vmatpush1.bf16.msra.mxu0 0
    %898 = vmatprep.subr.bf16.mxu0 0
    %899 = vmatpush1.bf16.msra.mxu0 0
    %900 = vmatprep.subr.bf16.mxu0 0
    %901 = vmatpush1.bf16.msra.mxu0 0
    %902 = vmatprep.subr.bf16.mxu0 0
    %903 = vmatpush1.bf16.msra.mxu0 0
    %904 = vmatprep.subr.bf16.mxu0 0
    %905 = vmatpush1.bf16.msra.mxu0 0
    %906 = vmatprep.subr.bf16.mxu0 0
    %907 = vmatpush1.bf16.msra.mxu0 %v769
    %908 = vmatprep.subr.bf16.mxu0 0
    %909 = vmatpush2.bf16.msra.mxu0 0
    %910 = vmatprep.subr.bf16.mxu0 0
    %911 = vmatpush2.bf16.msra.mxu0 0
    %912 = vmatprep.subr.bf16.mxu0 0
    %913 = vmatpush2.bf16.msra.mxu0 0
    %914 = vmatprep.subr.bf16.mxu0 0
    %915 = vmatpush2.bf16.msra.mxu0 0
    %916 = vmatprep.subr.bf16.mxu0 0
    %917 = vmatpush2.bf16.msra.mxu0 0
    %918 = vmatprep.subr.bf16.mxu0 0
    %919 = vmatpush2.bf16.msra.mxu0 0
    %920 = vmatprep.subr.bf16.mxu0 0
    %921 = vmatpush2.bf16.msra.mxu0 0
    %922 = vmatprep.subr.bf16.mxu0 0
    %923 = vmatpush2.bf16.msra.mxu0 0
    %924 = vmatprep.mubr.bf16.mxu0 0
    %925 = vmatmul.mubr.bf16.gmra.mxu0 %v890
    %v926 = vpop.f32.mrf.mxu0
    %v927 = vadd.f32 0.0, %v926
    %v928 = vpop.f32.mrf.mxu0
    %v929 = vpop.f32.mrf.mxu0
    %v930 = vpop.f32.mrf.mxu0
    %931 = vdwg.mxu0
    %933 = vrot.lane.b32.xlu0 %v656, 16
    %v934 = vpop.permute.xlu0 %933
    %937 = vrot.lane.b32.xlu0 %v806, 32
    %v938 = vpop.permute.xlu0 %937
    %941 = vrot.lane.b32.xlu0 %v927, 48
    %v942 = vpop.permute.xlu0 %941
    %v944 = vsel %vm428, %v535, %v934
    %vm945 = vcmask 261120
    %v946 = vsel %vm945, %v944, %v938
    %vm947 = vcmask 392192
    %v948 = vsel %vm947, %v946, %v942
    %v949 = vpack.c.bf16 %v948, %v948
    %v950 = vld [vmem:[#allocation2] sm:$0xf]
    %v951 = vld [vmem:[#allocation2 + $0x4] sm:$0xf]
    %v952 = vld [vmem:[#allocation2 + $0x8] sm:$0xf]
    %v953 = vld [vmem:[#allocation2 + $0xc] sm:$0xf]
    %v954 = vld [vmem:[#allocation2 + $0x10] sm:$0xf]
    %v955 = vld [vmem:[#allocation2 + $0x14] sm:$0xf]
    %v956 = vld [vmem:[#allocation2 + $0x18] sm:$0xf]
    %v957 = vld [vmem:[#allocation2 + $0x1c] sm:$0xf]
    %v966 = vunpack.c.l.b16 %v950
    %v967 = vunpack.c.l.b16 %v951
    %v968 = vunpack.c.l.b16 %v952
    %v969 = vunpack.c.l.b16 %v953
    %v970 = vunpack.c.l.b16 %v954
    %v971 = vunpack.c.l.b16 %v955
    %v972 = vunpack.c.l.b16 %v956
    %v973 = vunpack.c.l.b16 %v957
    %v974 = vpack.c.b16 %v967, %v966
    %v975 = vpack.c.b16 %v969, %v968
    %v976 = vpack.c.b16 %v971, %v970
    %v977 = vpack.c.b16 %v973, %v972
    %v983 = vsel %vm299, %v949, 0
    %985 = vmatprep.subr.bf16.mxu0 0
    %986 = vmatpush1.bf16.msra.mxu0 0
    %987 = vmatprep.subr.bf16.mxu0 0
    %988 = vmatpush1.bf16.msra.mxu0 0
    %989 = vmatprep.subr.bf16.mxu0 0
    %990 = vmatpush1.bf16.msra.mxu0 0
    %991 = vmatprep.subr.bf16.mxu0 0
    %992 = vmatpush1.bf16.msra.mxu0 0
    %993 = vmatprep.subr.bf16.mxu0 0
    %994 = vmatpush1.bf16.msra.mxu0 %v977
    %995 = vmatprep.subr.bf16.mxu0 0
    %996 = vmatpush1.bf16.msra.mxu0 %v976
    %997 = vmatprep.subr.bf16.mxu0 0
    %998 = vmatpush1.bf16.msra.mxu0 %v975
    %999 = vmatprep.subr.bf16.mxu0 0
    %1000 = vmatpush1.bf16.msra.mxu0 %v974
    %1001 = vmatprep.subr.bf16.mxu0 0
    %1002 = vmatpush2.bf16.msra.mxu0 0
    %1003 = vmatprep.subr.bf16.mxu0 0
    %1004 = vmatpush2.bf16.msra.mxu0 0
    %1005 = vmatprep.subr.bf16.mxu0 0
    %1006 = vmatpush2.bf16.msra.mxu0 0
    %1007 = vmatprep.subr.bf16.mxu0 0
    %1008 = vmatpush2.bf16.msra.mxu0 0
    %1009 = vmatprep.subr.bf16.mxu0 0
    %1010 = vmatpush2.bf16.msra.mxu0 0
    %1011 = vmatprep.subr.bf16.mxu0 0
    %1012 = vmatpush2.bf16.msra.mxu0 0
    %1013 = vmatprep.subr.bf16.mxu0 0
    %1014 = vmatpush2.bf16.msra.mxu0 0
    %1015 = vmatprep.subr.bf16.mxu0 0
    %1016 = vmatpush2.bf16.msra.mxu0 0
    %1017 = vmatprep.mubr.bf16.mxu0 0
    %1018 = vmatmul.mubr.bf16.gmra.mxu0 %v983
    %v1019 = vpop.f32.mrf.mxu0
    %v1020 = vadd.f32 0.0, %v1019
    %v1021 = vpop.f32.mrf.mxu0
    %v1022 = vpop.f32.mrf.mxu0
    %v1023 = vpop.f32.mrf.mxu0
    %1024 = vdwg.mxu0
    %v1025 = vadd.f32 %v287, %v1020
    %v1026 = vld [vmem:[%s6] sm:$0x1]
    %v1027 = vmul.f32 %v1025, %v1025
    %v1028 = vsel %vm299, %v1027, 0.0
    %1029 = vadd.xlane.f32.xlu0 %v1028
    %v1030 = vpop.xlane.xlu0 %1029
    %v1031 = vmul.f32 %v1030, %v303
    %v1032 = vadd.f32 %v1031, 1e-05
    %v1033 = vrsqrt.pop %v1032
    %v1034 = vmul.f32 %v1025, %v1033
    %v1036 = vlaneseq
    %v1037 = vshrl.u32 %v1036, 7
    %v1038 = vsub.s32 0, %v1037
    %v1039 = vrot.slane %v1026, %v1038
    %v1041 = vmul.f32 %v1034, %v1039
    %v1042 = vpack.c.bf16 %v1041, %v1041
    %v1043 = vld [vmem:[#allocation5] sm:$0xff]
    %v1044 = vld [vmem:[#allocation5 + $0x8] sm:$0xff]
    %v1045 = vld [vmem:[#allocation5 + $0x10] sm:$0xff]
    %v1046 = vld [vmem:[#allocation5 + $0x18] sm:$0xff]
    %v1047 = vld [vmem:[#allocation5 + $0x20] sm:$0xff]
    %v1048 = vld [vmem:[#allocation5 + $0x28] sm:$0xff]
    %v1049 = vld [vmem:[#allocation5 + $0x30] sm:$0xff]
    %v1050 = vld [vmem:[#allocation5 + $0x38] sm:$0xff]
    %v1059 = vunpack.c.l.b16 %v1043
    %v1060 = vunpack.c.h.b16 %v1043
    %v1061 = vunpack.c.l.b16 %v1044
    %v1062 = vunpack.c.h.b16 %v1044
    %v1063 = vunpack.c.l.b16 %v1045
    %v1064 = vunpack.c.h.b16 %v1045
    %v1065 = vunpack.c.l.b16 %v1046
    %v1066 = vunpack.c.h.b16 %v1046
    %v1067 = vunpack.c.l.b16 %v1047
    %v1068 = vunpack.c.h.b16 %v1047
    %v1069 = vunpack.c.l.b16 %v1048
    %v1070 = vunpack.c.h.b16 %v1048
    %v1071 = vunpack.c.l.b16 %v1049
    %v1072 = vunpack.c.h.b16 %v1049
    %v1073 = vunpack.c.l.b16 %v1050
    %v1074 = vunpack.c.h.b16 %v1050
    %v1075 = vpack.c.b16 %v1061, %v1059
    %v1076 = vpack.c.b16 %v1062, %v1060
    %v1077 = vpack.c.b16 %v1065, %v1063
    %v1078 = vpack.c.b16 %v1066, %v1064
    %v1079 = vpack.c.b16 %v1069, %v1067
    %v1080 = vpack.c.b16 %v1070, %v1068
    %v1081 = vpack.c.b16 %v1073, %v1071
    %v1082 = vpack.c.b16 %v1074, %v1072
    %v1092 = vsel %vm299, %v1042, 0
    %1094 = vmatprep.subr.bf16.mxu0 0
    %1095 = vmatpush1.bf16.msra.mxu0 0
    %1096 = vmatprep.subr.bf16.mxu0 0
    %1097 = vmatpush1.bf16.msra.mxu0 0
    %1098 = vmatprep.subr.bf16.mxu0 0
    %1099 = vmatpush1.bf16.msra.mxu0 0
    %1100 = vmatprep.subr.bf16.mxu0 0
    %1101 = vmatpush1.bf16.msra.mxu0 0
    %1102 = vmatprep.subr.bf16.mxu0 %v1082
    %1103 = vmatpush1.bf16.msra.mxu0 %v1081
    %1104 = vmatprep.subr.bf16.mxu0 %v1080
    %1105 = vmatpush1.bf16.msra.mxu0 %v1079
    %1106 = vmatprep.subr.bf16.mxu0 %v1078
    %1107 = vmatpush1.bf16.msra.mxu0 %v1077
    %1108 = vmatprep.subr.bf16.mxu0 %v1076
    %1109 = vmatpush1.bf16.msra.mxu0 %v1075
    %1110 = vmatprep.subr.bf16.mxu0 0
    %1111 = vmatpush2.bf16.msra.mxu0 0
    %1112 = vmatprep.subr.bf16.mxu0 0
    %1113 = vmatpush2.bf16.msra.mxu0 0
    %1114 = vmatprep.subr.bf16.mxu0 0
    %1115 = vmatpush2.bf16.msra.mxu0 0
    %1116 = vmatprep.subr.bf16.mxu0 0
    %1117 = vmatpush2.bf16.msra.mxu0 0
    %1118 = vmatprep.subr.bf16.mxu0 0
    %1119 = vmatpush2.bf16.msra.mxu0 0
    %1120 = vmatprep.subr.bf16.mxu0 0
    %1121 = vmatpush2.bf16.msra.mxu0 0
    %1122 = vmatprep.subr.bf16.mxu0 0
    %1123 = vmatpush2.bf16.msra.mxu0 0
    %1124 = vmatprep.subr.bf16.mxu0 0
    %1125 = vmatpush2.bf16.msra.mxu0 0
    %1126 = vmatprep.mubr.bf16.mxu0 0
    %1127 = vmatmul.mubr.bf16.gmra.mxu0 %v1092
    %v1128 = vpop.f32.mrf.mxu0
    %v1129 = vadd.f32 0.0, %v1128
    %v1130 = vpop.f32.mrf.mxu0
    %v1131 = vadd.f32 0.0, %v1130
    %v1132 = vpop.f32.mrf.mxu0
    %v1133 = vpop.f32.mrf.mxu0
    %1134 = vdwg.mxu0
    %v1135 = vxor.u32 %v1129, 2147483648
    %v1136 = vmul.f32 %v1135, 1.442695
    %v1137 = vpow.pop %v1136
    %v1138 = vadd.f32 %v1137, 1.0
    %v1139 = vrcp.pop %v1138
    %v1140 = vmul.f32 1.0, %v1139
    %v1141 = vmul.f32 %v1129, %v1140
    %v1142 = vmul.f32 %v1141, %v1131
    %v1143 = vpack.c.bf16 %v1142, %v1142
    %v1144 = vld [vmem:[#allocation7] sm:$0xf]
    %v1145 = vld [vmem:[#allocation7 + $0x4] sm:$0xf]
    %v1146 = vld [vmem:[#allocation7 + $0x8] sm:$0xf]
    %v1147 = vld [vmem:[#allocation7 + $0xc] sm:$0xf]
    %v1148 = vld [vmem:[#allocation7 + $0x10] sm:$0xf]
    %v1149 = vld [vmem:[#allocation7 + $0x14] sm:$0xf]
    %v1150 = vld [vmem:[#allocation7 + $0x18] sm:$0xf]
    %v1151 = vld [vmem:[#allocation7 + $0x1c] sm:$0xf]
    %v1152 = vld [vmem:[#allocation7 + $0x20] sm:$0xf]
    %v1153 = vld [vmem:[#allocation7 + $0x24] sm:$0xf]
    %v1154 = vld [vmem:[#allocation7 + $0x28] sm:$0xf]
    %v1155 = vld [vmem:[#allocation7 + $0x2c] sm:$0xf]
    %v1156 = vld [vmem:[#allocation7 + $0x30] sm:$0xf]
    %v1157 = vld [vmem:[#allocation7 + $0x34] sm:$0xf]
    %v1158 = vld [vmem:[#allocation7 + $0x38] sm:$0xf]
    %v1159 = vld [vmem:[#allocation7 + $0x3c] sm:$0xf]
    %v1176 = vunpack.c.l.b16 %v1144
    %v1177 = vunpack.c.l.b16 %v1145
    %v1178 = vunpack.c.l.b16 %v1146
    %v1179 = vunpack.c.l.b16 %v1147
    %v1180 = vunpack.c.l.b16 %v1148
    %v1181 = vunpack.c.l.b16 %v1149
    %v1182 = vunpack.c.l.b16 %v1150
    %v1183 = vunpack.c.l.b16 %v1151
    %v1184 = vunpack.c.l.b16 %v1152
    %v1185 = vunpack.c.l.b16 %v1153
    %v1186 = vunpack.c.l.b16 %v1154
    %v1187 = vunpack.c.l.b16 %v1155
    %v1188 = vunpack.c.l.b16 %v1156
    %v1189 = vunpack.c.l.b16 %v1157
    %v1190 = vunpack.c.l.b16 %v1158
    %v1191 = vunpack.c.l.b16 %v1159
    %v1192 = vpack.c.b16 %v1177, %v1176
    %v1193 = vpack.c.b16 %v1179, %v1178
    %v1194 = vpack.c.b16 %v1181, %v1180
    %v1195 = vpack.c.b16 %v1183, %v1182
    %v1196 = vpack.c.b16 %v1185, %v1184
    %v1197 = vpack.c.b16 %v1187, %v1186
    %v1198 = vpack.c.b16 %v1189, %v1188
    %v1199 = vpack.c.b16 %v1191, %v1190
    %1208 = vmatprep.subr.bf16.mxu0 0
    %1209 = vmatpush1.bf16.msra.mxu0 %v1199
    %1210 = vmatprep.subr.bf16.mxu0 0
    %1211 = vmatpush1.bf16.msra.mxu0 %v1198
    %1212 = vmatprep.subr.bf16.mxu0 0
    %1213 = vmatpush1.bf16.msra.mxu0 %v1197
    %1214 = vmatprep.subr.bf16.mxu0 0
    %1215 = vmatpush1.bf16.msra.mxu0 %v1196
    %1216 = vmatprep.subr.bf16.mxu0 0
    %1217 = vmatpush1.bf16.msra.mxu0 %v1195
    %1218 = vmatprep.subr.bf16.mxu0 0
    %1219 = vmatpush1.bf16.msra.mxu0 %v1194
    %1220 = vmatprep.subr.bf16.mxu0 0
    %1221 = vmatpush1.bf16.msra.mxu0 %v1193
    %1222 = vmatprep.subr.bf16.mxu0 0
    %1223 = vmatpush1.bf16.msra.mxu0 %v1192
    %1224 = vmatprep.subr.bf16.mxu0 0
    %1225 = vmatpush2.bf16.msra.mxu0 0
    %1226 = vmatprep.subr.bf16.mxu0 0
    %1227 = vmatpush2.bf16.msra.mxu0 0
    %1228 = vmatprep.subr.bf16.mxu0 0
    %1229 = vmatpush2.bf16.msra.mxu0 0
    %1230 = vmatprep.subr.bf16.mxu0 0
    %1231 = vmatpush2.bf16.msra.mxu0 0
    %1232 = vmatprep.subr.bf16.mxu0 0
    %1233 = vmatpush2.bf16.msra.mxu0 0
    %1234 = vmatprep.subr.bf16.mxu0 0
    %1235 = vmatpush2.bf16.msra.mxu0 0
    %1236 = vmatprep.subr.bf16.mxu0 0
    %1237 = vmatpush2.bf16.msra.mxu0 0
    %1238 = vmatprep.subr.bf16.mxu0 0
    %1239 = vmatpush2.bf16.msra.mxu0 0
    %1240 = vmatprep.mubr.bf16.mxu0 0
    %1241 = vmatmul.mubr.bf16.gmra.mxu0 %v1143
    %v1242 = vpop.f32.mrf.mxu0
    %v1243 = vadd.f32 0.0, %v1242
    %v1244 = vpop.f32.mrf.mxu0
    %v1245 = vpop.f32.mrf.mxu0
    %v1246 = vpop.f32.mrf.mxu0
    %1247 = vdwg.mxu0
    %v1248 = vadd.f32 %v1025, %v1243
    %s1249 = scalar_lea.vmem %s3, 1
    %v1250 = vld [vmem:[%s1249] sm:$0x1]
    %v1251 = vmul.f32 %v1248, %v1248
    %v1252 = vsel %vm299, %v1251, 0.0
    %1253 = vadd.xlane.f32.xlu0 %v1252
    %v1254 = vpop.xlane.xlu0 %1253
    %v1255 = vmul.f32 %v1254, %v303
    %v1256 = vadd.f32 %v1255, 1e-05
    %v1257 = vrsqrt.pop %v1256
    %v1258 = vmul.f32 %v1248, %v1257
    %v1260 = vlaneseq
    %v1261 = vshrl.u32 %v1260, 7
    %v1262 = vsub.s32 0, %v1261
    %v1263 = vrot.slane %v1250, %v1262
    %v1265 = vmul.f32 %v1258, %v1263
    %v1266 = vpack.c.bf16 %v1265, %v1265
    %s1267 = scalar_lea.vmem %s4, 32
    %v1268 = vld [vmem:[%s1267] sm:$0xf]
    %v1269 = vld [vmem:[%s1267 + $0x4] sm:$0xf]
    %v1270 = vld [vmem:[%s1267 + $0x8] sm:$0xf]
    %v1271 = vld [vmem:[%s1267 + $0xc] sm:$0xf]
    %v1272 = vld [vmem:[%s1267 + $0x10] sm:$0xf]
    %v1273 = vld [vmem:[%s1267 + $0x14] sm:$0xf]
    %v1274 = vld [vmem:[%s1267 + $0x18] sm:$0xf]
    %v1275 = vld [vmem:[%s1267 + $0x1c] sm:$0xf]
    %v1284 = vunpack.c.l.b16 %v1268
    %v1285 = vunpack.c.l.b16 %v1269
    %v1286 = vunpack.c.l.b16 %v1270
    %v1287 = vunpack.c.l.b16 %v1271
    %v1288 = vunpack.c.l.b16 %v1272
    %v1289 = vunpack.c.l.b16 %v1273
    %v1290 = vunpack.c.l.b16 %v1274
    %v1291 = vunpack.c.l.b16 %v1275
    %v1292 = vpack.c.b16 %v1285, %v1284
    %v1293 = vpack.c.b16 %v1287, %v1286
    %v1294 = vpack.c.b16 %v1289, %v1288
    %v1295 = vpack.c.b16 %v1291, %v1290
    %v1301 = vsel %vm299, %v1266, 0
    %1303 = vmatprep.subr.bf16.mxu0 0
    %1304 = vmatpush1.bf16.msra.mxu0 0
    %1305 = vmatprep.subr.bf16.mxu0 0
    %1306 = vmatpush1.bf16.msra.mxu0 0
    %1307 = vmatprep.subr.bf16.mxu0 0
    %1308 = vmatpush1.bf16.msra.mxu0 0
    %1309 = vmatprep.subr.bf16.mxu0 0
    %1310 = vmatpush1.bf16.msra.mxu0 0
    %1311 = vmatprep.subr.bf16.mxu0 0
    %1312 = vmatpush1.bf16.msra.mxu0 %v1295
    %1313 = vmatprep.subr.bf16.mxu0 0
    %1314 = vmatpush1.bf16.msra.mxu0 %v1294
    %1315 = vmatprep.subr.bf16.mxu0 0
    %1316 = vmatpush1.bf16.msra.mxu0 %v1293
    %1317 = vmatprep.subr.bf16.mxu0 0
    %1318 = vmatpush1.bf16.msra.mxu0 %v1292
    %1319 = vmatprep.subr.bf16.mxu0 0
    %1320 = vmatpush2.bf16.msra.mxu0 0
    %1321 = vmatprep.subr.bf16.mxu0 0
    %1322 = vmatpush2.bf16.msra.mxu0 0
    %1323 = vmatprep.subr.bf16.mxu0 0
    %1324 = vmatpush2.bf16.msra.mxu0 0
    %1325 = vmatprep.subr.bf16.mxu0 0
    %1326 = vmatpush2.bf16.msra.mxu0 0
    %1327 = vmatprep.subr.bf16.mxu0 0
    %1328 = vmatpush2.bf16.msra.mxu0 0
    %1329 = vmatprep.subr.bf16.mxu0 0
    %1330 = vmatpush2.bf16.msra.mxu0 0
    %1331 = vmatprep.subr.bf16.mxu0 0
    %1332 = vmatpush2.bf16.msra.mxu0 0
    %1333 = vmatprep.subr.bf16.mxu0 0
    %1334 = vmatpush2.bf16.msra.mxu0 0
    %1335 = vmatprep.mubr.bf16.mxu0 0
    %1336 = vmatmul.mubr.bf16.gmra.mxu0 %v1301
    %v1337 = vpop.f32.mrf.mxu0
    %v1338 = vadd.f32 0.0, %v1337
    %v1339 = vpop.f32.mrf.mxu0
    %v1340 = vpop.f32.mrf.mxu0
    %v1341 = vpop.f32.mrf.mxu0
    %1342 = vdwg.mxu0
    %v1343 = vsub.f32 0.0, %v1338
    %1345 = vrot.lane.b32.xlu0 %v1343, 120
    %v1346 = vpop.permute.xlu0 %1345
    %1349 = vrot.lane.b32.xlu0 %v1338, 8
    %v1350 = vpop.permute.xlu0 %1349
    %v1352 = vsel %vm400, %v1346, %v1350
    %v1353 = vmul.f32 %v1338, %v292
    %v1354 = vmul.f32 %v1352, %v293
    %v1355 = vadd.f32 %v1353, %v1354
    %1356 = vrot.lane.b32.xlu0 %v1343, 56
    %v1357 = vpop.permute.xlu0 %1356
    %1359 = vrot.lane.b32.xlu0 %v1338, 72
    %v1360 = vpop.permute.xlu0 %1359
    %v1362 = vsel %vm400, %v1357, %v1360
    %v1363 = vmul.f32 %v1338, %v414
    %v1364 = vmul.f32 %v1362, %v293
    %1366 = vrot.lane.b32.xlu0 %v1364, 64
    %v1367 = vpop.permute.xlu0 %1366
    %v1369 = vadd.f32 %v1363, %v1367
    %v1370 = vpack.c.bf16 %v1355, %v1355
    %v1371 = vpack.c.bf16 %v1369, %v1369
    %1373 = vrot.lane.b32.xlu0 %v1371, 64
    %v1374 = vpop.permute.xlu0 %1373
    %v1376 = vsel %vm428, %v1370, 0
    %v1379 = vsel %vm428, %v1374, 0
    %1381 = vmatprep.subr.bf16.mxu0 0
    %1382 = vmatpush1.bf16.xpose.msra.mxu0 0
    %1383 = vmatprep.subr.bf16.mxu0 0
    %1384 = vmatpush1.bf16.xpose.msra.mxu0 0
    %1385 = vmatprep.subr.bf16.mxu0 0
    %1386 = vmatpush1.bf16.xpose.msra.mxu0 0
    %1387 = vmatprep.subr.bf16.mxu0 0
    %1388 = vmatpush1.bf16.xpose.msra.mxu0 0
    %1389 = vmatprep.subr.bf16.mxu0 0
    %1390 = vmatpush1.bf16.xpose.msra.mxu0 0
    %1391 = vmatprep.subr.bf16.mxu0 0
    %1392 = vmatpush1.bf16.xpose.msra.mxu0 0
    %1393 = vmatprep.subr.bf16.mxu0 0
    %1394 = vmatpush1.bf16.xpose.msra.mxu0 0
    %1395 = vmatprep.subr.bf16.mxu0 0
    %1396 = vmatpush1.bf16.xpose.msra.mxu0 %v1379
    %1397 = vmatprep.subr.bf16.mxu0 0
    %1398 = vmatpush2.bf16.xpose.msra.mxu0 0
    %1399 = vmatprep.subr.bf16.mxu0 0
    %1400 = vmatpush2.bf16.xpose.msra.mxu0 0
    %1401 = vmatprep.subr.bf16.mxu0 0
    %1402 = vmatpush2.bf16.xpose.msra.mxu0 0
    %1403 = vmatprep.subr.bf16.mxu0 0
    %1404 = vmatpush2.bf16.xpose.msra.mxu0 0
    %1405 = vmatprep.subr.bf16.mxu0 0
    %1406 = vmatpush2.bf16.xpose.msra.mxu0 0
    %1407 = vmatprep.subr.bf16.mxu0 0
    %1408 = vmatpush2.bf16.xpose.msra.mxu0 0
    %1409 = vmatprep.subr.bf16.mxu0 0
    %1410 = vmatpush2.bf16.xpose.msra.mxu0 0
    %1411 = vmatprep.subr.bf16.mxu0 0
    %1412 = vmatpush2.bf16.xpose.msra.mxu0 0
    %1413 = vmatprep.mubr.bf16.mxu0 0
    %1414 = vmatmul.mubr.bf16.gmra.mxu0 %v1376
    %v1415 = vpop.f32.mrf.mxu0
    %v1416 = vadd.f32 0.0, %v1415
    %v1417 = vpop.f32.mrf.mxu0
    %v1418 = vpop.f32.mrf.mxu0
    %v1419 = vpop.f32.mrf.mxu0
    %1420 = vdwg.mxu0
    %v1421 = vmul.f32 %v1416, 0.25
    %v1422 = vsel %vm296, %v1421, -1e+30
    %v1423 = vsel %vm400, %v1422, -inf
    %1424 = vmax.xlane.f32.xlu0 %v1423
    %v1425 = vpop.xlane.xlu0 %1424
    %v1426 = vsub.f32 %v1422, %v1425
    %v1427 = vmul.f32 %v1426, 1.442695
    %v1428 = vpow.pop %v1427
    %v1429 = vsel %vm400, %v1428, 0.0
    %1430 = vadd.xlane.f32.xlu0 %v1429
    %v1431 = vpop.xlane.xlu0 %1430
    %v1432 = vrcp.pop %v1431
    %v1433 = vmul.f32 %v1428, %v1432
    %v1434 = vpack.c.bf16 %v1433, %v1433
    %v1435 = vpack.c.bf16 %v1338, %v1338
    %1437 = vrot.lane.b32.xlu0 %v1435, 32
    %v1438 = vpop.permute.xlu0 %1437
    %v1440 = vsel %vm400, %v1434, 0
    %v1443 = vsel %vm496, %v1438, 0
    %1445 = vmatprep.subr.bf16.mxu0 0
    %1446 = vmatpush1.bf16.msra.mxu0 0
    %1447 = vmatprep.subr.bf16.mxu0 0
    %1448 = vmatpush1.bf16.msra.mxu0 0
    %1449 = vmatprep.subr.bf16.mxu0 0
    %1450 = vmatpush1.bf16.msra.mxu0 0
    %1451 = vmatprep.subr.bf16.mxu0 0
    %1452 = vmatpush1.bf16.msra.mxu0 0
    %1453 = vmatprep.subr.bf16.mxu0 0
    %1454 = vmatpush1.bf16.msra.mxu0 0
    %1455 = vmatprep.subr.bf16.mxu0 0
    %1456 = vmatpush1.bf16.msra.mxu0 0
    %1457 = vmatprep.subr.bf16.mxu0 0
    %1458 = vmatpush1.bf16.msra.mxu0 0
    %1459 = vmatprep.subr.bf16.mxu0 0
    %1460 = vmatpush1.bf16.msra.mxu0 %v1443
    %1461 = vmatprep.subr.bf16.mxu0 0
    %1462 = vmatpush2.bf16.msra.mxu0 0
    %1463 = vmatprep.subr.bf16.mxu0 0
    %1464 = vmatpush2.bf16.msra.mxu0 0
    %1465 = vmatprep.subr.bf16.mxu0 0
    %1466 = vmatpush2.bf16.msra.mxu0 0
    %1467 = vmatprep.subr.bf16.mxu0 0
    %1468 = vmatpush2.bf16.msra.mxu0 0
    %1469 = vmatprep.subr.bf16.mxu0 0
    %1470 = vmatpush2.bf16.msra.mxu0 0
    %1471 = vmatprep.subr.bf16.mxu0 0
    %1472 = vmatpush2.bf16.msra.mxu0 0
    %1473 = vmatprep.subr.bf16.mxu0 0
    %1474 = vmatpush2.bf16.msra.mxu0 0
    %1475 = vmatprep.subr.bf16.mxu0 0
    %1476 = vmatpush2.bf16.msra.mxu0 0
    %1477 = vmatprep.mubr.bf16.mxu0 0
    %1478 = vmatmul.mubr.bf16.gmra.mxu0 %v1440
    %v1479 = vpop.f32.mrf.mxu0
    %v1480 = vadd.f32 0.0, %v1479
    %v1481 = vpop.f32.mrf.mxu0
    %v1482 = vpop.f32.mrf.mxu0
    %v1483 = vpop.f32.mrf.mxu0
    %1484 = vdwg.mxu0
    %1485 = vrot.lane.b32.xlu0 %v1343, 104
    %v1486 = vpop.permute.xlu0 %1485
    %1488 = vrot.lane.b32.xlu0 %v1338, 120
    %v1489 = vpop.permute.xlu0 %1488
    %v1491 = vsel %vm400, %v1486, %v1489
    %v1492 = vmul.f32 %v1338, %v548
    %v1493 = vmul.f32 %v1491, %v293
    %1495 = vrot.lane.b32.xlu0 %v1493, 16
    %v1496 = vpop.permute.xlu0 %1495
    %v1498 = vadd.f32 %v1492, %v1496
    %v1499 = vpack.c.bf16 %v1498, %v1498
    %1501 = vrot.lane.b32.xlu0 %v1499, 112
    %v1502 = vpop.permute.xlu0 %1501
    %v1504 = vsel %vm428, %v1502, 0
    %1506 = vmatprep.subr.bf16.mxu0 0
    %1507 = vmatpush1.bf16.xpose.msra.mxu0 0
    %1508 = vmatprep.subr.bf16.mxu0 0
    %1509 = vmatpush1.bf16.xpose.msra.mxu0 0
    %1510 = vmatprep.subr.bf16.mxu0 0
    %1511 = vmatpush1.bf16.xpose.msra.mxu0 0
    %1512 = vmatprep.subr.bf16.mxu0 0
    %1513 = vmatpush1.bf16.xpose.msra.mxu0 0
    %1514 = vmatprep.subr.bf16.mxu0 0
    %1515 = vmatpush1.bf16.xpose.msra.mxu0 0
    %1516 = vmatprep.subr.bf16.mxu0 0
    %1517 = vmatpush1.bf16.xpose.msra.mxu0 0
    %1518 = vmatprep.subr.bf16.mxu0 0
    %1519 = vmatpush1.bf16.xpose.msra.mxu0 0
    %1520 = vmatprep.subr.bf16.mxu0 0
    %1521 = vmatpush1.bf16.xpose.msra.mxu0 %v1379
    %1522 = vmatprep.subr.bf16.mxu0 0
    %1523 = vmatpush2.bf16.xpose.msra.mxu0 0
    %1524 = vmatprep.subr.bf16.mxu0 0
    %1525 = vmatpush2.bf16.xpose.msra.mxu0 0
    %1526 = vmatprep.subr.bf16.mxu0 0
    %1527 = vmatpush2.bf16.xpose.msra.mxu0 0
    %1528 = vmatprep.subr.bf16.mxu0 0
    %1529 = vmatpush2.bf16.xpose.msra.mxu0 0
    %1530 = vmatprep.subr.bf16.mxu0 0
    %1531 = vmatpush2.bf16.xpose.msra.mxu0 0
    %1532 = vmatprep.subr.bf16.mxu0 0
    %1533 = vmatpush2.bf16.xpose.msra.mxu0 0
    %1534 = vmatprep.subr.bf16.mxu0 0
    %1535 = vmatpush2.bf16.xpose.msra.mxu0 0
    %1536 = vmatprep.subr.bf16.mxu0 0
    %1537 = vmatpush2.bf16.xpose.msra.mxu0 0
    %1538 = vmatprep.mubr.bf16.mxu0 0
    %1539 = vmatmul.mubr.bf16.gmra.mxu0 %v1504
    %v1540 = vpop.f32.mrf.mxu0
    %v1541 = vadd.f32 0.0, %v1540
    %v1542 = vpop.f32.mrf.mxu0
    %v1543 = vpop.f32.mrf.mxu0
    %v1544 = vpop.f32.mrf.mxu0
    %1545 = vdwg.mxu0
    %v1546 = vmul.f32 %v1541, 0.25
    %v1547 = vsel %vm296, %v1546, -1e+30
    %v1548 = vsel %vm400, %v1547, -inf
    %1549 = vmax.xlane.f32.xlu0 %v1548
    %v1550 = vpop.xlane.xlu0 %1549
    %v1551 = vsub.f32 %v1547, %v1550
    %v1552 = vmul.f32 %v1551, 1.442695
    %v1553 = vpow.pop %v1552
    %v1554 = vsel %vm400, %v1553, 0.0
    %1555 = vadd.xlane.f32.xlu0 %v1554
    %v1556 = vpop.xlane.xlu0 %1555
    %v1557 = vrcp.pop %v1556
    %v1558 = vmul.f32 %v1553, %v1557
    %v1559 = vpack.c.bf16 %v1558, %v1558
    %v1561 = vsel %vm400, %v1559, 0
    %1563 = vmatprep.subr.bf16.mxu0 0
    %1564 = vmatpush1.bf16.msra.mxu0 0
    %1565 = vmatprep.subr.bf16.mxu0 0
    %1566 = vmatpush1.bf16.msra.mxu0 0
    %1567 = vmatprep.subr.bf16.mxu0 0
    %1568 = vmatpush1.bf16.msra.mxu0 0
    %1569 = vmatprep.subr.bf16.mxu0 0
    %1570 = vmatpush1.bf16.msra.mxu0 0
    %1571 = vmatprep.subr.bf16.mxu0 0
    %1572 = vmatpush1.bf16.msra.mxu0 0
    %1573 = vmatprep.subr.bf16.mxu0 0
    %1574 = vmatpush1.bf16.msra.mxu0 0
    %1575 = vmatprep.subr.bf16.mxu0 0
    %1576 = vmatpush1.bf16.msra.mxu0 0
    %1577 = vmatprep.subr.bf16.mxu0 0
    %1578 = vmatpush1.bf16.msra.mxu0 %v1443
    %1579 = vmatprep.subr.bf16.mxu0 0
    %1580 = vmatpush2.bf16.msra.mxu0 0
    %1581 = vmatprep.subr.bf16.mxu0 0
    %1582 = vmatpush2.bf16.msra.mxu0 0
    %1583 = vmatprep.subr.bf16.mxu0 0
    %1584 = vmatpush2.bf16.msra.mxu0 0
    %1585 = vmatprep.subr.bf16.mxu0 0
    %1586 = vmatpush2.bf16.msra.mxu0 0
    %1587 = vmatprep.subr.bf16.mxu0 0
    %1588 = vmatpush2.bf16.msra.mxu0 0
    %1589 = vmatprep.subr.bf16.mxu0 0
    %1590 = vmatpush2.bf16.msra.mxu0 0
    %1591 = vmatprep.subr.bf16.mxu0 0
    %1592 = vmatpush2.bf16.msra.mxu0 0
    %1593 = vmatprep.subr.bf16.mxu0 0
    %1594 = vmatpush2.bf16.msra.mxu0 0
    %1595 = vmatprep.mubr.bf16.mxu0 0
    %1596 = vmatmul.mubr.bf16.gmra.mxu0 %v1561
    %v1597 = vpop.f32.mrf.mxu0
    %v1598 = vadd.f32 0.0, %v1597
    %v1599 = vpop.f32.mrf.mxu0
    %v1600 = vpop.f32.mrf.mxu0
    %v1601 = vpop.f32.mrf.mxu0
    %1602 = vdwg.mxu0
    %1603 = vrot.lane.b32.xlu0 %v1343, 88
    %v1604 = vpop.permute.xlu0 %1603
    %1606 = vrot.lane.b32.xlu0 %v1338, 104
    %v1607 = vpop.permute.xlu0 %1606
    %v1609 = vsel %vm400, %v1604, %v1607
    %v1610 = vmul.f32 %v1338, %v669
    %v1611 = vmul.f32 %v1609, %v293
    %1613 = vrot.lane.b32.xlu0 %v1611, 32
    %v1614 = vpop.permute.xlu0 %1613
    %v1616 = vadd.f32 %v1610, %v1614
    %1617 = vrot.lane.b32.xlu0 %v1343, 40
    %v1618 = vpop.permute.xlu0 %1617
    %1620 = vrot.lane.b32.xlu0 %v1338, 56
    %v1621 = vpop.permute.xlu0 %1620
    %v1623 = vsel %vm400, %v1618, %v1621
    %v1624 = vmul.f32 %v1338, %v686
    %v1625 = vmul.f32 %v1623, %v293
    %1627 = vrot.lane.b32.xlu0 %v1625, 80
    %v1628 = vpop.permute.xlu0 %1627
    %v1630 = vadd.f32 %v1624, %v1628
    %v1631 = vpack.c.bf16 %v1616, %v1616
    %v1632 = vpack.c.bf16 %v1630, %v1630
    %1634 = vrot.lane.b32.xlu0 %v1631, 96
    %v1635 = vpop.permute.xlu0 %1634
    %1637 = vrot.lane.b32.xlu0 %v1632, 48
    %v1638 = vpop.permute.xlu0 %1637
    %v1640 = vsel %vm428, %v1635, 0
    %v1643 = vsel %vm428, %v1638, 0
    %1645 = vmatprep.subr.bf16.mxu0 0
    %1646 = vmatpush1.bf16.xpose.msra.mxu0 0
    %1647 = vmatprep.subr.bf16.mxu0 0
    %1648 = vmatpush1.bf16.xpose.msra.mxu0 0
    %1649 = vmatprep.subr.bf16.mxu0 0
    %1650 = vmatpush1.bf16.xpose.msra.mxu0 0
    %1651 = vmatprep.subr.bf16.mxu0 0
    %1652 = vmatpush1.bf16.xpose.msra.mxu0 0
    %1653 = vmatprep.subr.bf16.mxu0 0
    %1654 = vmatpush1.bf16.xpose.msra.mxu0 0
    %1655 = vmatprep.subr.bf16.mxu0 0
    %1656 = vmatpush1.bf16.xpose.msra.mxu0 0
    %1657 = vmatprep.subr.bf16.mxu0 0
    %1658 = vmatpush1.bf16.xpose.msra.mxu0 0
    %1659 = vmatprep.subr.bf16.mxu0 0
    %1660 = vmatpush1.bf16.xpose.msra.mxu0 %v1643
    %1661 = vmatprep.subr.bf16.mxu0 0
    %1662 = vmatpush2.bf16.xpose.msra.mxu0 0
    %1663 = vmatprep.subr.bf16.mxu0 0
    %1664 = vmatpush2.bf16.xpose.msra.mxu0 0
    %1665 = vmatprep.subr.bf16.mxu0 0
    %1666 = vmatpush2.bf16.xpose.msra.mxu0 0
    %1667 = vmatprep.subr.bf16.mxu0 0
    %1668 = vmatpush2.bf16.xpose.msra.mxu0 0
    %1669 = vmatprep.subr.bf16.mxu0 0
    %1670 = vmatpush2.bf16.xpose.msra.mxu0 0
    %1671 = vmatprep.subr.bf16.mxu0 0
    %1672 = vmatpush2.bf16.xpose.msra.mxu0 0
    %1673 = vmatprep.subr.bf16.mxu0 0
    %1674 = vmatpush2.bf16.xpose.msra.mxu0 0
    %1675 = vmatprep.subr.bf16.mxu0 0
    %1676 = vmatpush2.bf16.xpose.msra.mxu0 0
    %1677 = vmatprep.mubr.bf16.mxu0 0
    %1678 = vmatmul.mubr.bf16.gmra.mxu0 %v1640
    %v1679 = vpop.f32.mrf.mxu0
    %v1680 = vadd.f32 0.0, %v1679
    %v1681 = vpop.f32.mrf.mxu0
    %v1682 = vpop.f32.mrf.mxu0
    %v1683 = vpop.f32.mrf.mxu0
    %1684 = vdwg.mxu0
    %v1685 = vmul.f32 %v1680, 0.25
    %v1686 = vsel %vm296, %v1685, -1e+30
    %v1687 = vsel %vm400, %v1686, -inf
    %1688 = vmax.xlane.f32.xlu0 %v1687
    %v1689 = vpop.xlane.xlu0 %1688
    %v1690 = vsub.f32 %v1686, %v1689
    %v1691 = vmul.f32 %v1690, 1.442695
    %v1692 = vpow.pop %v1691
    %v1693 = vsel %vm400, %v1692, 0.0
    %1694 = vadd.xlane.f32.xlu0 %v1693
    %v1695 = vpop.xlane.xlu0 %1694
    %v1696 = vrcp.pop %v1695
    %v1697 = vmul.f32 %v1692, %v1696
    %v1698 = vpack.c.bf16 %v1697, %v1697
    %1699 = vrot.lane.b32.xlu0 %v1435, 16
    %v1700 = vpop.permute.xlu0 %1699
    %v1702 = vsel %vm400, %v1698, 0
    %v1705 = vsel %vm496, %v1700, 0
    %1707 = vmatprep.subr.bf16.mxu0 0
    %1708 = vmatpush1.bf16.msra.mxu0 0
    %1709 = vmatprep.subr.bf16.mxu0 0
    %1710 = vmatpush1.bf16.msra.mxu0 0
    %1711 = vmatprep.subr.bf16.mxu0 0
    %1712 = vmatpush1.bf16.msra.mxu0 0
    %1713 = vmatprep.subr.bf16.mxu0 0
    %1714 = vmatpush1.bf16.msra.mxu0 0
    %1715 = vmatprep.subr.bf16.mxu0 0
    %1716 = vmatpush1.bf16.msra.mxu0 0
    %1717 = vmatprep.subr.bf16.mxu0 0
    %1718 = vmatpush1.bf16.msra.mxu0 0
    %1719 = vmatprep.subr.bf16.mxu0 0
    %1720 = vmatpush1.bf16.msra.mxu0 0
    %1721 = vmatprep.subr.bf16.mxu0 0
    %1722 = vmatpush1.bf16.msra.mxu0 %v1705
    %1723 = vmatprep.subr.bf16.mxu0 0
    %1724 = vmatpush2.bf16.msra.mxu0 0
    %1725 = vmatprep.subr.bf16.mxu0 0
    %1726 = vmatpush2.bf16.msra.mxu0 0
    %1727 = vmatprep.subr.bf16.mxu0 0
    %1728 = vmatpush2.bf16.msra.mxu0 0
    %1729 = vmatprep.subr.bf16.mxu0 0
    %1730 = vmatpush2.bf16.msra.mxu0 0
    %1731 = vmatprep.subr.bf16.mxu0 0
    %1732 = vmatpush2.bf16.msra.mxu0 0
    %1733 = vmatprep.subr.bf16.mxu0 0
    %1734 = vmatpush2.bf16.msra.mxu0 0
    %1735 = vmatprep.subr.bf16.mxu0 0
    %1736 = vmatpush2.bf16.msra.mxu0 0
    %1737 = vmatprep.subr.bf16.mxu0 0
    %1738 = vmatpush2.bf16.msra.mxu0 0
    %1739 = vmatprep.mubr.bf16.mxu0 0
    %1740 = vmatmul.mubr.bf16.gmra.mxu0 %v1702
    %v1741 = vpop.f32.mrf.mxu0
    %v1742 = vadd.f32 0.0, %v1741
    %v1743 = vpop.f32.mrf.mxu0
    %v1744 = vpop.f32.mrf.mxu0
    %v1745 = vpop.f32.mrf.mxu0
    %1746 = vdwg.mxu0
    %1747 = vrot.lane.b32.xlu0 %v1343, 72
    %v1748 = vpop.permute.xlu0 %1747
    %1750 = vrot.lane.b32.xlu0 %v1338, 88
    %v1751 = vpop.permute.xlu0 %1750
    %v1753 = vsel %vm400, %v1748, %v1751
    %v1754 = vmul.f32 %v1338, %v819
    %v1755 = vmul.f32 %v1753, %v293
    %1757 = vrot.lane.b32.xlu0 %v1755, 48
    %v1758 = vpop.permute.xlu0 %1757
    %v1760 = vadd.f32 %v1754, %v1758
    %v1761 = vpack.c.bf16 %v1760, %v1760
    %1763 = vrot.lane.b32.xlu0 %v1761, 80
    %v1764 = vpop.permute.xlu0 %1763
    %v1766 = vsel %vm428, %v1764, 0
    %1768 = vmatprep.subr.bf16.mxu0 0
    %1769 = vmatpush1.bf16.xpose.msra.mxu0 0
    %1770 = vmatprep.subr.bf16.mxu0 0
    %1771 = vmatpush1.bf16.xpose.msra.mxu0 0
    %1772 = vmatprep.subr.bf16.mxu0 0
    %1773 = vmatpush1.bf16.xpose.msra.mxu0 0
    %1774 = vmatprep.subr.bf16.mxu0 0
    %1775 = vmatpush1.bf16.xpose.msra.mxu0 0
    %1776 = vmatprep.subr.bf16.mxu0 0
    %1777 = vmatpush1.bf16.xpose.msra.mxu0 0
    %1778 = vmatprep.subr.bf16.mxu0 0
    %1779 = vmatpush1.bf16.xpose.msra.mxu0 0
    %1780 = vmatprep.subr.bf16.mxu0 0
    %1781 = vmatpush1.bf16.xpose.msra.mxu0 0
    %1782 = vmatprep.subr.bf16.mxu0 0
    %1783 = vmatpush1.bf16.xpose.msra.mxu0 %v1643
    %1784 = vmatprep.subr.bf16.mxu0 0
    %1785 = vmatpush2.bf16.xpose.msra.mxu0 0
    %1786 = vmatprep.subr.bf16.mxu0 0
    %1787 = vmatpush2.bf16.xpose.msra.mxu0 0
    %1788 = vmatprep.subr.bf16.mxu0 0
    %1789 = vmatpush2.bf16.xpose.msra.mxu0 0
    %1790 = vmatprep.subr.bf16.mxu0 0
    %1791 = vmatpush2.bf16.xpose.msra.mxu0 0
    %1792 = vmatprep.subr.bf16.mxu0 0
    %1793 = vmatpush2.bf16.xpose.msra.mxu0 0
    %1794 = vmatprep.subr.bf16.mxu0 0
    %1795 = vmatpush2.bf16.xpose.msra.mxu0 0
    %1796 = vmatprep.subr.bf16.mxu0 0
    %1797 = vmatpush2.bf16.xpose.msra.mxu0 0
    %1798 = vmatprep.subr.bf16.mxu0 0
    %1799 = vmatpush2.bf16.xpose.msra.mxu0 0
    %1800 = vmatprep.mubr.bf16.mxu0 0
    %1801 = vmatmul.mubr.bf16.gmra.mxu0 %v1766
    %v1802 = vpop.f32.mrf.mxu0
    %v1803 = vadd.f32 0.0, %v1802
    %v1804 = vpop.f32.mrf.mxu0
    %v1805 = vpop.f32.mrf.mxu0
    %v1806 = vpop.f32.mrf.mxu0
    %1807 = vdwg.mxu0
    %v1808 = vmul.f32 %v1803, 0.25
    %v1809 = vsel %vm296, %v1808, -1e+30
    %v1810 = vsel %vm400, %v1809, -inf
    %1811 = vmax.xlane.f32.xlu0 %v1810
    %v1812 = vpop.xlane.xlu0 %1811
    %v1813 = vsub.f32 %v1809, %v1812
    %v1814 = vmul.f32 %v1813, 1.442695
    %v1815 = vpow.pop %v1814
    %v1816 = vsel %vm400, %v1815, 0.0
    %1817 = vadd.xlane.f32.xlu0 %v1816
    %v1818 = vpop.xlane.xlu0 %1817
    %v1819 = vrcp.pop %v1818
    %v1820 = vmul.f32 %v1815, %v1819
    %v1821 = vpack.c.bf16 %v1820, %v1820
    %v1823 = vsel %vm400, %v1821, 0
    %1825 = vmatprep.subr.bf16.mxu0 0
    %1826 = vmatpush1.bf16.msra.mxu0 0
    %1827 = vmatprep.subr.bf16.mxu0 0
    %1828 = vmatpush1.bf16.msra.mxu0 0
    %1829 = vmatprep.subr.bf16.mxu0 0
    %1830 = vmatpush1.bf16.msra.mxu0 0
    %1831 = vmatprep.subr.bf16.mxu0 0
    %1832 = vmatpush1.bf16.msra.mxu0 0
    %1833 = vmatprep.subr.bf16.mxu0 0
    %1834 = vmatpush1.bf16.msra.mxu0 0
    %1835 = vmatprep.subr.bf16.mxu0 0
    %1836 = vmatpush1.bf16.msra.mxu0 0
    %1837 = vmatprep.subr.bf16.mxu0 0
    %1838 = vmatpush1.bf16.msra.mxu0 0
    %1839 = vmatprep.subr.bf16.mxu0 0
    %1840 = vmatpush1.bf16.msra.mxu0 %v1705
    %1841 = vmatprep.subr.bf16.mxu0 0
    %1842 = vmatpush2.bf16.msra.mxu0 0
    %1843 = vmatprep.subr.bf16.mxu0 0
    %1844 = vmatpush2.bf16.msra.mxu0 0
    %1845 = vmatprep.subr.bf16.mxu0 0
    %1846 = vmatpush2.bf16.msra.mxu0 0
    %1847 = vmatprep.subr.bf16.mxu0 0
    %1848 = vmatpush2.bf16.msra.mxu0 0
    %1849 = vmatprep.subr.bf16.mxu0 0
    %1850 = vmatpush2.bf16.msra.mxu0 0
    %1851 = vmatprep.subr.bf16.mxu0 0
    %1852 = vmatpush2.bf16.msra.mxu0 0
    %1853 = vmatprep.subr.bf16.mxu0 0
    %1854 = vmatpush2.bf16.msra.mxu0 0
    %1855 = vmatprep.subr.bf16.mxu0 0
    %1856 = vmatpush2.bf16.msra.mxu0 0
    %1857 = vmatprep.mubr.bf16.mxu0 0
    %1858 = vmatmul.mubr.bf16.gmra.mxu0 %v1823
    %v1859 = vpop.f32.mrf.mxu0
    %v1860 = vadd.f32 0.0, %v1859
    %v1861 = vpop.f32.mrf.mxu0
    %v1862 = vpop.f32.mrf.mxu0
    %v1863 = vpop.f32.mrf.mxu0
    %1864 = vdwg.mxu0
    %1866 = vrot.lane.b32.xlu0 %v1598, 16
    %v1867 = vpop.permute.xlu0 %1866
    %1870 = vrot.lane.b32.xlu0 %v1742, 32
    %v1871 = vpop.permute.xlu0 %1870
    %1874 = vrot.lane.b32.xlu0 %v1860, 48
    %v1875 = vpop.permute.xlu0 %1874
    %v1877 = vsel %vm428, %v1480, %v1867
    %v1878 = vsel %vm945, %v1877, %v1871
    %v1879 = vsel %vm947, %v1878, %v1875
    %v1880 = vpack.c.bf16 %v1879, %v1879
    %s1881 = scalar_lea.vmem [#allocation2], 32
    %v1882 = vld [vmem:[%s1881] sm:$0xf]
    %v1883 = vld [vmem:[%s1881 + $0x4] sm:$0xf]
    %v1884 = vld [vmem:[%s1881 + $0x8] sm:$0xf]
    %v1885 = vld [vmem:[%s1881 + $0xc] sm:$0xf]
    %v1886 = vld [vmem:[%s1881 + $0x10] sm:$0xf]
    %v1887 = vld [vmem:[%s1881 + $0x14] sm:$0xf]
    %v1888 = vld [vmem:[%s1881 + $0x18] sm:$0xf]
    %v1889 = vld [vmem:[%s1881 + $0x1c] sm:$0xf]
    %v1898 = vunpack.c.l.b16 %v1882
    %v1899 = vunpack.c.l.b16 %v1883
    %v1900 = vunpack.c.l.b16 %v1884
    %v1901 = vunpack.c.l.b16 %v1885
    %v1902 = vunpack.c.l.b16 %v1886
    %v1903 = vunpack.c.l.b16 %v1887
    %v1904 = vunpack.c.l.b16 %v1888
    %v1905 = vunpack.c.l.b16 %v1889
    %v1906 = vpack.c.b16 %v1899, %v1898
    %v1907 = vpack.c.b16 %v1901, %v1900
    %v1908 = vpack.c.b16 %v1903, %v1902
    %v1909 = vpack.c.b16 %v1905, %v1904
    %v1915 = vsel %vm299, %v1880, 0
    %1917 = vmatprep.subr.bf16.mxu0 0
    %1918 = vmatpush1.bf16.msra.mxu0 0
    %1919 = vmatprep.subr.bf16.mxu0 0
    %1920 = vmatpush1.bf16.msra.mxu0 0
    %1921 = vmatprep.subr.bf16.mxu0 0
    %1922 = vmatpush1.bf16.msra.mxu0 0
    %1923 = vmatprep.subr.bf16.mxu0 0
    %1924 = vmatpush1.bf16.msra.mxu0 0
    %1925 = vmatprep.subr.bf16.mxu0 0
    %1926 = vmatpush1.bf16.msra.mxu0 %v1909
    %1927 = vmatprep.subr.bf16.mxu0 0
    %1928 = vmatpush1.bf16.msra.mxu0 %v1908
    %1929 = vmatprep.subr.bf16.mxu0 0
    %1930 = vmatpush1.bf16.msra.mxu0 %v1907
    %1931 = vmatprep.subr.bf16.mxu0 0
    %1932 = vmatpush1.bf16.msra.mxu0 %v1906
    %1933 = vmatprep.subr.bf16.mxu0 0
    %1934 = vmatpush2.bf16.msra.mxu0 0
    %1935 = vmatprep.subr.bf16.mxu0 0
    %1936 = vmatpush2.bf16.msra.mxu0 0
    %1937 = vmatprep.subr.bf16.mxu0 0
    %1938 = vmatpush2.bf16.msra.mxu0 0
    %1939 = vmatprep.subr.bf16.mxu0 0
    %1940 = vmatpush2.bf16.msra.mxu0 0
    %1941 = vmatprep.subr.bf16.mxu0 0
    %1942 = vmatpush2.bf16.msra.mxu0 0
    %1943 = vmatprep.subr.bf16.mxu0 0
    %1944 = vmatpush2.bf16.msra.mxu0 0
    %1945 = vmatprep.subr.bf16.mxu0 0
    %1946 = vmatpush2.bf16.msra.mxu0 0
    %1947 = vmatprep.subr.bf16.mxu0 0
    %1948 = vmatpush2.bf16.msra.mxu0 0
    %1949 = vmatprep.mubr.bf16.mxu0 0
    %1950 = vmatmul.mubr.bf16.gmra.mxu0 %v1915
    %v1951 = vpop.f32.mrf.mxu0
    %v1952 = vadd.f32 0.0, %v1951
    %v1953 = vpop.f32.mrf.mxu0
    %v1954 = vpop.f32.mrf.mxu0
    %v1955 = vpop.f32.mrf.mxu0
    %1956 = vdwg.mxu0
    %v1957 = vadd.f32 %v1248, %v1952
    %s1958 = scalar_lea.vmem %s6, 1
    %v1959 = vld [vmem:[%s1958] sm:$0x1]
    %v1960 = vmul.f32 %v1957, %v1957
    %v1961 = vsel %vm299, %v1960, 0.0
    %1962 = vadd.xlane.f32.xlu0 %v1961
    %v1963 = vpop.xlane.xlu0 %1962
    %v1964 = vmul.f32 %v1963, %v303
    %v1965 = vadd.f32 %v1964, 1e-05
    %v1966 = vrsqrt.pop %v1965
    %v1967 = vmul.f32 %v1957, %v1966
    %v1969 = vlaneseq
    %v1970 = vshrl.u32 %v1969, 7
    %v1971 = vsub.s32 0, %v1970
    %v1972 = vrot.slane %v1959, %v1971
    %v1974 = vmul.f32 %v1967, %v1972
    %v1975 = vpack.c.bf16 %v1974, %v1974
    %s1976 = scalar_lea.vmem [#allocation5], 64
    %v1977 = vld [vmem:[%s1976] sm:$0xff]
    %v1978 = vld [vmem:[%s1976 + $0x8] sm:$0xff]
    %v1979 = vld [vmem:[%s1976 + $0x10] sm:$0xff]
    %v1980 = vld [vmem:[%s1976 + $0x18] sm:$0xff]
    %v1981 = vld [vmem:[%s1976 + $0x20] sm:$0xff]
    %v1982 = vld [vmem:[%s1976 + $0x28] sm:$0xff]
    %v1983 = vld [vmem:[%s1976 + $0x30] sm:$0xff]
    %v1984 = vld [vmem:[%s1976 + $0x38] sm:$0xff]
    %v1993 = vunpack.c.l.b16 %v1977
    %v1994 = vunpack.c.h.b16 %v1977
    %v1995 = vunpack.c.l.b16 %v1978
    %v1996 = vunpack.c.h.b16 %v1978
    %v1997 = vunpack.c.l.b16 %v1979
    %v1998 = vunpack.c.h.b16 %v1979
    %v1999 = vunpack.c.l.b16 %v1980
    %v2000 = vunpack.c.h.b16 %v1980
    %v2001 = vunpack.c.l.b16 %v1981
    %v2002 = vunpack.c.h.b16 %v1981
    %v2003 = vunpack.c.l.b16 %v1982
    %v2004 = vunpack.c.h.b16 %v1982
    %v2005 = vunpack.c.l.b16 %v1983
    %v2006 = vunpack.c.h.b16 %v1983
    %v2007 = vunpack.c.l.b16 %v1984
    %v2008 = vunpack.c.h.b16 %v1984
    %v2009 = vpack.c.b16 %v1995, %v1993
    %v2010 = vpack.c.b16 %v1996, %v1994
    %v2011 = vpack.c.b16 %v1999, %v1997
    %v2012 = vpack.c.b16 %v2000, %v1998
    %v2013 = vpack.c.b16 %v2003, %v2001
    %v2014 = vpack.c.b16 %v2004, %v2002
    %v2015 = vpack.c.b16 %v2007, %v2005
    %v2016 = vpack.c.b16 %v2008, %v2006
    %v2026 = vsel %vm299, %v1975, 0
    %2028 = vmatprep.subr.bf16.mxu0 0
    %2029 = vmatpush1.bf16.msra.mxu0 0
    %2030 = vmatprep.subr.bf16.mxu0 0
    %2031 = vmatpush1.bf16.msra.mxu0 0
    %2032 = vmatprep.subr.bf16.mxu0 0
    %2033 = vmatpush1.bf16.msra.mxu0 0
    %2034 = vmatprep.subr.bf16.mxu0 0
    %2035 = vmatpush1.bf16.msra.mxu0 0
    %2036 = vmatprep.subr.bf16.mxu0 %v2016
    %2037 = vmatpush1.bf16.msra.mxu0 %v2015
    %2038 = vmatprep.subr.bf16.mxu0 %v2014
    %2039 = vmatpush1.bf16.msra.mxu0 %v2013
    %2040 = vmatprep.subr.bf16.mxu0 %v2012
    %2041 = vmatpush1.bf16.msra.mxu0 %v2011
    %2042 = vmatprep.subr.bf16.mxu0 %v2010
    %2043 = vmatpush1.bf16.msra.mxu0 %v2009
    %2044 = vmatprep.subr.bf16.mxu0 0
    %2045 = vmatpush2.bf16.msra.mxu0 0
    %2046 = vmatprep.subr.bf16.mxu0 0
    %2047 = vmatpush2.bf16.msra.mxu0 0
    %2048 = vmatprep.subr.bf16.mxu0 0
    %2049 = vmatpush2.bf16.msra.mxu0 0
    %2050 = vmatprep.subr.bf16.mxu0 0
    %2051 = vmatpush2.bf16.msra.mxu0 0
    %2052 = vmatprep.subr.bf16.mxu0 0
    %2053 = vmatpush2.bf16.msra.mxu0 0
    %2054 = vmatprep.subr.bf16.mxu0 0
    %2055 = vmatpush2.bf16.msra.mxu0 0
    %2056 = vmatprep.subr.bf16.mxu0 0
    %2057 = vmatpush2.bf16.msra.mxu0 0
    %2058 = vmatprep.subr.bf16.mxu0 0
    %2059 = vmatpush2.bf16.msra.mxu0 0
    %2060 = vmatprep.mubr.bf16.mxu0 0
    %2061 = vmatmul.mubr.bf16.gmra.mxu0 %v2026
    %v2062 = vpop.f32.mrf.mxu0
    %v2063 = vadd.f32 0.0, %v2062
    %v2064 = vpop.f32.mrf.mxu0
    %v2065 = vadd.f32 0.0, %v2064
    %v2066 = vpop.f32.mrf.mxu0
    %v2067 = vpop.f32.mrf.mxu0
    %2068 = vdwg.mxu0
    %v2069 = vxor.u32 %v2063, 2147483648
    %v2070 = vmul.f32 %v2069, 1.442695
    %v2071 = vpow.pop %v2070
    %v2072 = vadd.f32 %v2071, 1.0
    %v2073 = vrcp.pop %v2072
    %v2074 = vmul.f32 1.0, %v2073
    %v2075 = vmul.f32 %v2063, %v2074
    %v2076 = vmul.f32 %v2075, %v2065
    %v2077 = vpack.c.bf16 %v2076, %v2076
    %s2078 = scalar_lea.vmem [#allocation7], 64
    %v2079 = vld [vmem:[%s2078] sm:$0xf]
    %v2080 = vld [vmem:[%s2078 + $0x4] sm:$0xf]
    %v2081 = vld [vmem:[%s2078 + $0x8] sm:$0xf]
    %v2082 = vld [vmem:[%s2078 + $0xc] sm:$0xf]
    %v2083 = vld [vmem:[%s2078 + $0x10] sm:$0xf]
    %v2084 = vld [vmem:[%s2078 + $0x14] sm:$0xf]
    %v2085 = vld [vmem:[%s2078 + $0x18] sm:$0xf]
    %v2086 = vld [vmem:[%s2078 + $0x1c] sm:$0xf]
    %v2087 = vld [vmem:[%s2078 + $0x20] sm:$0xf]
    %v2088 = vld [vmem:[%s2078 + $0x24] sm:$0xf]
    %v2089 = vld [vmem:[%s2078 + $0x28] sm:$0xf]
    %v2090 = vld [vmem:[%s2078 + $0x2c] sm:$0xf]
    %v2091 = vld [vmem:[%s2078 + $0x30] sm:$0xf]
    %v2092 = vld [vmem:[%s2078 + $0x34] sm:$0xf]
    %v2093 = vld [vmem:[%s2078 + $0x38] sm:$0xf]
    %v2094 = vld [vmem:[%s2078 + $0x3c] sm:$0xf]
    %v2111 = vunpack.c.l.b16 %v2079
    %v2112 = vunpack.c.l.b16 %v2080
    %v2113 = vunpack.c.l.b16 %v2081
    %v2114 = vunpack.c.l.b16 %v2082
    %v2115 = vunpack.c.l.b16 %v2083
    %v2116 = vunpack.c.l.b16 %v2084
    %v2117 = vunpack.c.l.b16 %v2085
    %v2118 = vunpack.c.l.b16 %v2086
    %v2119 = vunpack.c.l.b16 %v2087
    %v2120 = vunpack.c.l.b16 %v2088
    %v2121 = vunpack.c.l.b16 %v2089
    %v2122 = vunpack.c.l.b16 %v2090
    %v2123 = vunpack.c.l.b16 %v2091
    %v2124 = vunpack.c.l.b16 %v2092
    %v2125 = vunpack.c.l.b16 %v2093
    %v2126 = vunpack.c.l.b16 %v2094
    %v2127 = vpack.c.b16 %v2112, %v2111
    %v2128 = vpack.c.b16 %v2114, %v2113
    %v2129 = vpack.c.b16 %v2116, %v2115
    %v2130 = vpack.c.b16 %v2118, %v2117
    %v2131 = vpack.c.b16 %v2120, %v2119
    %v2132 = vpack.c.b16 %v2122, %v2121
    %v2133 = vpack.c.b16 %v2124, %v2123
    %v2134 = vpack.c.b16 %v2126, %v2125
    %2143 = vmatprep.subr.bf16.mxu0 0
    %2144 = vmatpush1.bf16.msra.mxu0 %v2134
    %2145 = vmatprep.subr.bf16.mxu0 0
    %2146 = vmatpush1.bf16.msra.mxu0 %v2133
    %2147 = vmatprep.subr.bf16.mxu0 0
    %2148 = vmatpush1.bf16.msra.mxu0 %v2132
    %2149 = vmatprep.subr.bf16.mxu0 0
    %2150 = vmatpush1.bf16.msra.mxu0 %v2131
    %2151 = vmatprep.subr.bf16.mxu0 0
    %2152 = vmatpush1.bf16.msra.mxu0 %v2130
    %2153 = vmatprep.subr.bf16.mxu0 0
    %2154 = vmatpush1.bf16.msra.mxu0 %v2129
    %2155 = vmatprep.subr.bf16.mxu0 0
    %2156 = vmatpush1.bf16.msra.mxu0 %v2128
    %2157 = vmatprep.subr.bf16.mxu0 0
    %2158 = vmatpush1.bf16.msra.mxu0 %v2127
    %2159 = vmatprep.subr.bf16.mxu0 0
    %2160 = vmatpush2.bf16.msra.mxu0 0
    %2161 = vmatprep.subr.bf16.mxu0 0
    %2162 = vmatpush2.bf16.msra.mxu0 0
    %2163 = vmatprep.subr.bf16.mxu0 0
    %2164 = vmatpush2.bf16.msra.mxu0 0
    %2165 = vmatprep.subr.bf16.mxu0 0
    %2166 = vmatpush2.bf16.msra.mxu0 0
    %2167 = vmatprep.subr.bf16.mxu0 0
    %2168 = vmatpush2.bf16.msra.mxu0 0
    %2169 = vmatprep.subr.bf16.mxu0 0
    %2170 = vmatpush2.bf16.msra.mxu0 0
    %2171 = vmatprep.subr.bf16.mxu0 0
    %2172 = vmatpush2.bf16.msra.mxu0 0
    %2173 = vmatprep.subr.bf16.mxu0 0
    %2174 = vmatpush2.bf16.msra.mxu0 0
    %2175 = vmatprep.mubr.bf16.mxu0 0
    %2176 = vmatmul.mubr.bf16.gmra.mxu0 %v2077
    %v2177 = vpop.f32.mrf.mxu0
    %v2178 = vadd.f32 0.0, %v2177
    %v2179 = vpop.f32.mrf.mxu0
    %v2180 = vpop.f32.mrf.mxu0
    %v2181 = vpop.f32.mrf.mxu0
    %2182 = vdwg.mxu0
    %v2183 = vadd.f32 %v1957, %v2178
    %v2184 = vld [vmem:[%s9] sm:$0x1]
    %v2185 = vmul.f32 %v2183, %v2183
    %v2186 = vsel %vm299, %v2185, 0.0
    %2187 = vadd.xlane.f32.xlu0 %v2186
    %v2188 = vpop.xlane.xlu0 %2187
    %v2189 = vmul.f32 %v2188, %v303
    %v2190 = vadd.f32 %v2189, 1e-05
    %v2191 = vrsqrt.pop %v2190
    %v2192 = vmul.f32 %v2183, %v2191
    %v2194 = vlaneseq
    %v2195 = vshrl.u32 %v2194, 7
    %v2196 = vsub.s32 0, %v2195
    %v2197 = vrot.slane %v2184, %v2196
    %v2199 = vmul.f32 %v2192, %v2197
    %v2200 = vpack.c.bf16 %v2199, %v2199
    %v2201 = vld [vmem:[#allocation10] sm:$0xff]
    %v2202 = vld [vmem:[#allocation10 + $0x8] sm:$0xff]
    %v2203 = vld [vmem:[#allocation10 + $0x10] sm:$0xff]
    %v2204 = vld [vmem:[#allocation10 + $0x18] sm:$0xff]
    %v2205 = vld [vmem:[#allocation10 + $0x20] sm:$0xff]
    %v2206 = vld [vmem:[#allocation10 + $0x28] sm:$0xff]
    %v2207 = vld [vmem:[#allocation10 + $0x30] sm:$0xff]
    %v2208 = vld [vmem:[#allocation10 + $0x38] sm:$0xff]
    %v2217 = vunpack.c.l.b16 %v2201
    %v2218 = vunpack.c.h.b16 %v2201
    %v2219 = vunpack.c.l.b16 %v2202
    %v2220 = vunpack.c.h.b16 %v2202
    %v2221 = vunpack.c.l.b16 %v2203
    %v2222 = vunpack.c.h.b16 %v2203
    %v2223 = vunpack.c.l.b16 %v2204
    %v2224 = vunpack.c.h.b16 %v2204
    %v2225 = vunpack.c.l.b16 %v2205
    %v2226 = vunpack.c.h.b16 %v2205
    %v2227 = vunpack.c.l.b16 %v2206
    %v2228 = vunpack.c.h.b16 %v2206
    %v2229 = vunpack.c.l.b16 %v2207
    %v2230 = vunpack.c.h.b16 %v2207
    %v2231 = vunpack.c.l.b16 %v2208
    %v2232 = vunpack.c.h.b16 %v2208
    %v2233 = vpack.c.b16 %v2219, %v2217
    %v2234 = vpack.c.b16 %v2220, %v2218
    %v2235 = vpack.c.b16 %v2223, %v2221
    %v2236 = vpack.c.b16 %v2224, %v2222
    %v2237 = vpack.c.b16 %v2227, %v2225
    %v2238 = vpack.c.b16 %v2228, %v2226
    %v2239 = vpack.c.b16 %v2231, %v2229
    %v2240 = vpack.c.b16 %v2232, %v2230
    %v2250 = vsel %vm299, %v2200, 0
    %2252 = vmatprep.subr.bf16.mxu0 0
    %2253 = vmatpush1.bf16.msra.mxu0 0
    %2254 = vmatprep.subr.bf16.mxu0 0
    %2255 = vmatpush1.bf16.msra.mxu0 0
    %2256 = vmatprep.subr.bf16.mxu0 0
    %2257 = vmatpush1.bf16.msra.mxu0 0
    %2258 = vmatprep.subr.bf16.mxu0 0
    %2259 = vmatpush1.bf16.msra.mxu0 0
    %2260 = vmatprep.subr.bf16.mxu0 %v2240
    %2261 = vmatpush1.bf16.msra.mxu0 %v2239
    %2262 = vmatprep.subr.bf16.mxu0 %v2238
    %2263 = vmatpush1.bf16.msra.mxu0 %v2237
    %2264 = vmatprep.subr.bf16.mxu0 %v2236
    %2265 = vmatpush1.bf16.msra.mxu0 %v2235
    %2266 = vmatprep.subr.bf16.mxu0 %v2234
    %2267 = vmatpush1.bf16.msra.mxu0 %v2233
    %2268 = vmatprep.subr.bf16.mxu0 0
    %2269 = vmatpush2.bf16.msra.mxu0 0
    %2270 = vmatprep.subr.bf16.mxu0 0
    %2271 = vmatpush2.bf16.msra.mxu0 0
    %2272 = vmatprep.subr.bf16.mxu0 0
    %2273 = vmatpush2.bf16.msra.mxu0 0
    %2274 = vmatprep.subr.bf16.mxu0 0
    %2275 = vmatpush2.bf16.msra.mxu0 0
    %2276 = vmatprep.subr.bf16.mxu0 0
    %2277 = vmatpush2.bf16.msra.mxu0 0
    %2278 = vmatprep.subr.bf16.mxu0 0
    %2279 = vmatpush2.bf16.msra.mxu0 0
    %2280 = vmatprep.subr.bf16.mxu0 0
    %2281 = vmatpush2.bf16.msra.mxu0 0
    %2282 = vmatprep.subr.bf16.mxu0 0
    %2283 = vmatpush2.bf16.msra.mxu0 0
    %2284 = vmatprep.mubr.bf16.mxu0 0
    %2285 = vmatmul.mubr.bf16.gmra.mxu0 %v2250
    %v2286 = vpop.f32.mrf.mxu0
    %v2287 = vadd.f32 0.0, %v2286
    %v2288 = vpop.f32.mrf.mxu0
    %v2289 = vadd.f32 0.0, %v2288
    %v2290 = vpop.f32.mrf.mxu0
    %v2291 = vpop.f32.mrf.mxu0
    %2292 = vdwg.mxu0
    %2293 = vst [vmem:[#allocation11] sm:$0xff] %v2287
    %2294 = vst [vmem:[#allocation11 + $0x8] sm:$0xff] %v2289
    // Predicated region
    $region70: #{_lambda_.1} parent=1 // pred_check
      _
    $region71: #{_lambda_.1} parent=1 // pred_check_branch
      %2296 = sbr.rel (0) target = $region73
    $region72: #{_lambda_.1} parent=1 // pred_region
      %s2298 = ssub.s32 256, 256
      %2299 = vsyncadd [#allocation4], %s2298
      %s2301 = sshll.u32 [#allocation11], 4
      %s2302 = int_to_ptr.vmem [resolvable:$true] %s2301
      %2304 = dma.vmem_to_hbm [thread:$0]  %s2302, 256, %s12, [#allocation4]
    $region73: #{_lambda_.1} parent=1 // pred_fallthru
      _
    // Predicated region
    $region74: #{_lambda_.1} parent=1 // pred_check
      _
    $region75: #{_lambda_.1} parent=1 // pred_check_branch
      %2306 = sbr.rel (0) target = $region77
    $region76: #{_lambda_.1} parent=1 // pred_region
      %2307 = dma.done [#allocation4], 256
    $region77: #{_lambda_.1} parent=1 // pred_fallthru
      _
    %2308 = vsyncpa [#allocation3], 1
    %2309 = vsyncpa [#allocation6], 1
    %2310 = vsyncpa [#allocation9], 1
    %2311 = vsyncpa [#allocation4], 1

</llo_original>
